<compile_context>
chip_gen: v7x
topology: tpu7x:2x2x1
jax: 0.10.0
libtpu: 0.0.40
codegen_flags: <defaults>
</compile_context>

<pallas_src>
import functools
import math

import jax
import jax.numpy as jnp
from jax.experimental import pallas as pl
from jax.experimental.pallas import tpu as pltpu


# ---------------------------------------------------------------------------
# Fused kernel: implicit concat + halo pad + 3x3 conv (padding=1) + bias + ReLU
# ---------------------------------------------------------------------------
def _upconcat_conv_kernel(xt_ref, xm_ref, xb_ref, yt_ref, ym_ref, yb_ref,
                          w_ref, b_ref, o_ref, zbuf_ref, zsh_ref):
    """One grid step = one (batch element, row tile).

    xt/xm/xb : (1, 1|TH, W, cx) bf16  upsampled small map (top halo / body / bottom halo)
    yt/ym/yb : (1, 1|TH, W, cy) bf16  large map            (top halo / body / bottom halo)
    w_ref    : (3, 3, C, czp)   bf16  merged conv weights (C = cx+cy, czp = cz padded to 128)
    b_ref    : (1, czp)         f32   bias (zero padded)
    o_ref    : (1, TH, W, czp)  bf16  lane-dense output tile
    zbuf_ref : (TH+2, W+2, C)   bf16  scratch: concatenated + halo-padded activations
    zsh_ref  : (3, TH+2, W, C)  bf16  scratch: 3 dx-shifted column windows of zbuf
    """
    TH, W, cx = xm_ref.shape[1], xm_ref.shape[2], xm_ref.shape[3]
    C = zbuf_ref.shape[-1]
    czp = o_ref.shape[-1]
    i = pl.program_id(1)
    n_rt = pl.num_programs(1)

    # --- build the concatenated, zero-halo-padded tile in VMEM ------------
    zbuf_ref[...] = jnp.zeros_like(zbuf_ref)            # borders = conv zero pad
    zbuf_ref[1:TH + 1, 1:W + 1, 0:cx] = xm_ref[0]       # x channels
    zbuf_ref[1:TH + 1, 1:W + 1, cx:C] = ym_ref[0]       # y channels (implicit concat)

    @pl.when(i > 0)                                     # top halo row from prev tile
    def _():
        zbuf_ref[0, 1:W + 1, 0:cx] = xt_ref[0, 0]
        zbuf_ref[0, 1:W + 1, cx:C] = yt_ref[0, 0]

    @pl.when(i < n_rt - 1)                              # bottom halo row from next tile
    def _():
        zbuf_ref[TH + 1, 1:W + 1, 0:cx] = xb_ref[0, 0]
        zbuf_ref[TH + 1, 1:W + 1, cx:C] = yb_ref[0, 0]

    # --- 3 dx-shifted windows built once (not once per tap) ---------------
    for dx in range(3):
        zsh_ref[dx] = zbuf_ref[:, dx:dx + W, :]

    # --- 9 MXU taps: K = cx+cy, N = czp; f32 accumulation in vregs ---------
    acc = jnp.zeros((TH * W, czp), jnp.float32)
    for dy in range(3):
        for dx in range(3):
            a = zsh_ref[dx, dy:dy + TH].reshape(TH * W, C)   # contiguous row slice
            acc += jnp.dot(a, w_ref[dy, dx], preferred_element_type=jnp.float32)

    out = jnp.maximum(acc + b_ref[...], 0.0)            # f32 epilogue (v5e-safe)
    o_ref[...] = out.reshape(1, TH, W, czp).astype(o_ref.dtype)


# ---------------------------------------------------------------------------
# Helpers
# ---------------------------------------------------------------------------
def _round_up(x, m):
    return ((x + m - 1) // m) * m


def _nearest_upsample_nhwc(x, size):
    """F.interpolate(..., mode='nearest') on an NHWC tensor."""
    N, Hx, Wx, C = x.shape
    H, W = size
    if H == Hx and W == Wx:
        return x
    if H % Hx == 0 and W % Wx == 0:
        fh, fw = H // Hx, W // Wx
        xb = jnp.broadcast_to(x[:, :, None, :, None, :], (N, Hx, fh, Wx, fw, C))
        return xb.reshape(N, H, W, C)
    # TODO(synk): non-integer nearest scale factors fall back to an XLA gather.
    ri = (jnp.arange(H) * Hx) // H
    ci = (jnp.arange(W) * Wx) // W
    return jnp.take(jnp.take(x, ri, axis=1), ci, axis=2)


def _vmem_limit_bytes():
    """Generation-aware scoped-VMEM budget (~3/4 of physical), safe fallback."""
    cap = 64 * 1024 * 1024
    try:
        info_cap = int(getattr(pltpu.get_tpu_info(), "vmem_capacity_bytes", 0))
        if info_cap > 0:
            cap = info_cap
    except Exception:
        pass
    return max(32 * 1024 * 1024, min(cap * 3 // 4, 112 * 1024 * 1024))


def _pick_row_tile(H, W, czp, n_batch):
    """Row-tile height: keep the f32 accumulator <= ~24 vregs so it stays in
    registers, and guarantee >=2 parallel grid units (v7x has 2 TCs/chip)."""
    max_acc_bytes = 96 * 1024
    divisors = [d for d in range(1, H + 1) if H % d == 0]
    fit = [d for d in divisors if d * W * czp * 4 <= max_acc_bytes] or [1]
    th = max(fit)
    if n_batch * (H // th) < 2:
        smaller = [d for d in fit if H // d >= 2]
        if smaller:
            th = max(smaller)
    return th


# ---------------------------------------------------------------------------
# Wrapper (NCHW in / NCHW out, matching the PyTorch module)
# ---------------------------------------------------------------------------
def upscale_and_concat_layer(x_nchw, y_nchw, size, weight, bias):
    """Pallas forward of UpscaleAndConcatLayer.

    x_nchw : (N, cx, Hx, Wx)       small map
    y_nchw : (N, cy, H, W)         large map, (H, W) == size
    weight : (cz, cx + cy, 3, 3)   PyTorch Conv2d weight (OIHW)
    bias   : (cz,)                 PyTorch Conv2d bias
    returns: (N, cz, H, W) float32
    """
    H, W = size
    N, cx = x_nchw.shape[0], x_nchw.shape[1]
    cy = y_nchw.shape[1]
    cz = weight.shape[0]
    C = cx + cy
    assert y_nchw.shape[0] == N and y_nchw.shape[2] == H and y_nchw.shape[3] == W
    assert weight.shape[1] == C and weight.shape[2:] == (3, 3)

    czp = _round_up(cz, 128)

    # NCHW -> NHWC (channels-last => lane-dense), bf16 MXU operands.
    x = jnp.transpose(x_nchw, (0, 2, 3, 1)).astype(jnp.bfloat16)
    y = jnp.transpose(y_nchw, (0, 2, 3, 1)).astype(jnp.bfloat16)

    # Nearest upsample as a broadcast/reshape (no gather) for integer factors.
    xu = _nearest_upsample_nhwc(x, (H, W))

    # Merged conv weight: OIHW -> HWIO (single K = cx+cy contraction per tap),
    # output channels zero-padded to a multiple of 128 (lane-dense N).
    w_hwio = jnp.transpose(weight, (2, 3, 1, 0)).astype(jnp.bfloat16)
    w_hwio = jnp.pad(w_hwio, ((0, 0), (0, 0), (0, 0), (0, czp - cz)))
    b_pad = jnp.pad(bias.astype(jnp.float32), ((0, czp - cz),)).reshape(1, czp)

    TH = _pick_row_tile(H, W, czp, N)
    n_rt = H // TH

    # Row-tile index maps.  Halo rows come as 1-row blocks with clamped
    # indices; the kernel ignores them at image borders (borders stay zero).
    top_row = lambda n, i: (n, jnp.maximum(i * TH - 1, 0), 0, 0)
    mid_blk = lambda n, i: (n, i, 0, 0)
    bot_row = lambda n, i: (n, jnp.minimum((i + 1) * TH, H - 1), 0, 0)

    in_specs = [
        pl.BlockSpec((1, 1, W, cx), top_row),
        pl.BlockSpec((1, TH, W, cx), mid_blk),
        pl.BlockSpec((1, 1, W, cx), bot_row),
        pl.BlockSpec((1, 1, W, cy), top_row),
        pl.BlockSpec((1, TH, W, cy), mid_blk),
        pl.BlockSpec((1, 1, W, cy), bot_row),
        pl.BlockSpec((3, 3, C, czp), lambda n, i: (0, 0, 0, 0)),   # resident
        pl.BlockSpec((1, czp), lambda n, i: (0, 0)),               # resident
    ]
    out_spec = pl.BlockSpec((1, TH, W, czp), mid_blk)

    flops = 2 * N * H * W * 9 * C * czp
    bytes_accessed = ((xu.size + y.size + w_hwio.size) * 2
                      + b_pad.size * 4 + N * H * W * czp * 2)

    out_padded = pl.pallas_call(
        _upconcat_conv_kernel,
        out_shape=jax.ShapeDtypeStruct((N, H, W, czp), jnp.bfloat16),
        grid_spec=pltpu.PrefetchScalarGridSpec(
            num_scalar_prefetch=0,
            grid=(N, n_rt),
            in_specs=in_specs,
            out_specs=out_spec,
            scratch_shapes=[
                pltpu.VMEM((TH + 2, W + 2, C), jnp.bfloat16),      # zbuf
                pltpu.VMEM((3, TH + 2, W, C), jnp.bfloat16),       # dx-shifted windows
            ],
        ),
        compiler_params=pltpu.CompilerParams(
            dimension_semantics=("parallel", "parallel"),
            vmem_limit_bytes=_vmem_limit_bytes(),
        ),
        cost_estimate=pl.CostEstimate(
            flops=flops, transcendentals=0, bytes_accessed=bytes_accessed),
    )(xu, xu, xu, y, y, y, w_hwio, b_pad)

    out = out_padded[..., :cz].astype(jnp.float32)       # drop channel padding
    return jnp.transpose(out, (0, 3, 1, 2))              # NHWC -> NCHW


# ---------------------------------------------------------------------------
# Pure-JAX f32 reference (mirror of the PyTorch forward) for validation.
# ---------------------------------------------------------------------------
def _reference_forward(x_nchw, y_nchw, size, weight, bias):
    H, W = size
    x = jnp.transpose(x_nchw, (0, 2, 3, 1))
    y = jnp.transpose(y_nchw, (0, 2, 3, 1))
    xu = _nearest_upsample_nhwc(x, (H, W))
    z = jnp.concatenate([xu, y], axis=-1)
    zp = jnp.pad(z, ((0, 0), (1, 1), (1, 1), (0, 0)))
    w_hwio = jnp.transpose(weight, (2, 3, 1, 0))
    out = jnp.zeros((z.shape[0], H, W, weight.shape[0]), jnp.float32)
    for dy in range(3):
        for dx in range(3):
            out = out + jnp.einsum('nhwc,co->nhwo',
                                   zp[:, dy:dy + H, dx:dx + W, :],
                                   w_hwio[dy, dx])
    out = jnp.maximum(out + bias, 0.0)
    return jnp.transpose(out, (0, 3, 1, 2))


# ---------------------------------------------------------------------------
if __name__ == "__main__":
    key = jax.random.PRNGKey(0)
    kx, ky, kw, kb = jax.random.split(key, 4)

    # Small shapes consistent with the module: x is the small map (cx channels),
    # y is the large map (cy channels); conv outputs cz channels.
    N, cx, cy, cz = 2, 64, 64, 32
    Hx, Wx = 8, 8
    H, W = 16, 16                          # s = (16, 16): nearest 2x upscale

    x = jax.random.normal(kx, (N, cx, Hx, Wx), jnp.float32)
    y = jax.random.normal(ky, (N, cy, H, W), jnp.float32)
    fan_in = 9 * (cx + cy)
    weight = jax.random.normal(kw, (cz, cx + cy, 3, 3), jnp.float32) / math.sqrt(fan_in)
    bound = 1.0 / math.sqrt(fan_in)
    bias = jax.random.uniform(kb, (cz,), jnp.float32, -bound, bound)

    fwd = jax.jit(functools.partial(upscale_and_concat_layer, size=(H, W)))
    out = fwd(x, y, weight=weight, bias=bias)
    jax.block_until_ready(out)
    assert out.shape == (N, cz, H, W), out.shape

    ref = _reference_forward(x, y, (H, W), weight, bias)
    err = float(jnp.max(jnp.abs(out - ref)))
    # bf16 MXU operands + bf16 output store vs f32 reference.
    tol = 5e-2 * (1.0 + float(jnp.max(jnp.abs(ref))))
    assert err < tol, (err, tol)

    print("KERNEL_OK")
</pallas_src>

<mosaic_0001>
module attributes {stable_mosaic.version = 11 : i64} {
  func.func @_upconcat_conv_kernel(%arg0: i32, %arg1: i32, %arg2: memref<1x1x16x64xbf16, #tpu.memory_space<vmem>>, %arg3: memref<1x8x16x64xbf16, #tpu.memory_space<vmem>>, %arg4: memref<1x1x16x64xbf16, #tpu.memory_space<vmem>>, %arg5: memref<1x1x16x64xbf16, #tpu.memory_space<vmem>>, %arg6: memref<1x8x16x64xbf16, #tpu.memory_space<vmem>>, %arg7: memref<1x1x16x64xbf16, #tpu.memory_space<vmem>>, %arg8: memref<3x3x128x128xbf16, #tpu.memory_space<vmem>>, %arg9: memref<1x128xf32, #tpu.memory_space<vmem>>, %arg10: memref<1x8x16x128xbf16, #tpu.memory_space<vmem>>, %arg11: memref<10x18x128xbf16, #tpu.memory_space<vmem>>, %arg12: memref<3x10x16x128xbf16, #tpu.memory_space<vmem>>) attributes {dimension_semantics = [#tpu.dimension_semantics<parallel>, #tpu.dimension_semantics<parallel>], iteration_bounds = array<i64: 2, 2>, scalar_prefetch = 0 : i64, scratch_operands = 2 : i64, tpu.core_type = #tpu.core_type<tc>, window_params = [{transform_indices = @transform_0, window_bounds = array<i64: 1, 1, 16, 64>}, {transform_indices = @transform_1, window_bounds = array<i64: 1, 8, 16, 64>}, {transform_indices = @transform_2, window_bounds = array<i64: 1, 1, 16, 64>}, {transform_indices = @transform_3, window_bounds = array<i64: 1, 1, 16, 64>}, {transform_indices = @transform_4, window_bounds = array<i64: 1, 8, 16, 64>}, {transform_indices = @transform_5, window_bounds = array<i64: 1, 1, 16, 64>}, {pipeline_mode = #tpu.pipeline_mode<synchronous>, transform_indices = @transform_6, window_bounds = array<i64: 3, 3, 128, 128>}, {pipeline_mode = #tpu.pipeline_mode<synchronous>, transform_indices = @transform_7, window_bounds = array<i64: 1, 128>}, {transform_indices = @transform_8, window_bounds = array<i64: 1, 8, 16, 128>}]} {
    %cst = arith.constant 0.000000e+00 : bf16
    %0 = vector.broadcast %cst : bf16 to vector<10x18x128xbf16>
    %c0 = arith.constant 0 : index
    %c0_0 = arith.constant 0 : index
    %c0_1 = arith.constant 0 : index
    %1 = vector.load %arg11[%c0, %c0_0, %c0_1] : memref<10x18x128xbf16, #tpu.memory_space<vmem>>, vector<10x18x128xbf16>
    tpu.vector_store %arg11[%c0, %c0_0, %c0_1], %0 {strides = array<i32>} : memref<10x18x128xbf16, #tpu.memory_space<vmem>>, vector<10x18x128xbf16>,
    %c0_2 = arith.constant 0 : index
    %c0_3 = arith.constant 0 : index
    %c0_4 = arith.constant 0 : index
    %c0_5 = arith.constant 0 : index
    %2 = vector.load %arg3[%c0_2, %c0_3, %c0_4, %c0_5] : memref<1x8x16x64xbf16, #tpu.memory_space<vmem>>, vector<1x8x16x64xbf16>
    %3 = vector.shape_cast %2 : vector<1x8x16x64xbf16> to vector<8x16x64xbf16>
    %c1 = arith.constant 1 : index
    %c1_6 = arith.constant 1 : index
    %c0_7 = arith.constant 0 : index
    %4 = vector.load %arg11[%c1, %c1_6, %c0_7] : memref<10x18x128xbf16, #tpu.memory_space<vmem>>, vector<8x16x64xbf16>
    tpu.vector_store %arg11[%c1, %c1_6, %c0_7], %3 {strides = array<i32>} : memref<10x18x128xbf16, #tpu.memory_space<vmem>>, vector<8x16x64xbf16>,
    %c0_8 = arith.constant 0 : index
    %c0_9 = arith.constant 0 : index
    %c0_10 = arith.constant 0 : index
    %c0_11 = arith.constant 0 : index
    %5 = vector.load %arg6[%c0_8, %c0_9, %c0_10, %c0_11] : memref<1x8x16x64xbf16, #tpu.memory_space<vmem>>, vector<1x8x16x64xbf16>
    %6 = vector.shape_cast %5 : vector<1x8x16x64xbf16> to vector<8x16x64xbf16>
    %c1_12 = arith.constant 1 : index
    %c1_13 = arith.constant 1 : index
    %c64 = arith.constant 64 : index
    %7 = vector.load %arg11[%c1_12, %c1_13, %c64] : memref<10x18x128xbf16, #tpu.memory_space<vmem>>, vector<8x16x64xbf16>
    tpu.vector_store %arg11[%c1_12, %c1_13, %c64], %6 {strides = array<i32>} : memref<10x18x128xbf16, #tpu.memory_space<vmem>>, vector<8x16x64xbf16>,
    %c0_i32 = arith.constant 0 : i32
    %8 = arith.cmpi sgt, %arg1, %c0_i32 : i32
    %9 = arith.extui %8 : i1 to i32
    %c0_i32_14 = arith.constant 0 : i32
    %10 = arith.cmpi ne, %9, %c0_i32_14 : i32
    scf.if %10 {
      %c0_125 = arith.constant 0 : index
      %c0_126 = arith.constant 0 : index
      %c0_127 = arith.constant 0 : index
      %c0_128 = arith.constant 0 : index
      %98 = vector.load %arg2[%c0_125, %c0_126, %c0_127, %c0_128] : memref<1x1x16x64xbf16, #tpu.memory_space<vmem>>, vector<1x1x16x64xbf16>
      %99 = vector.shape_cast %98 : vector<1x1x16x64xbf16> to vector<16x64xbf16>
      %c0_129 = arith.constant 0 : index
      %c1_130 = arith.constant 1 : index
      %c0_131 = arith.constant 0 : index
      %100 = vector.load %arg11[%c0_129, %c1_130, %c0_131] : memref<10x18x128xbf16, #tpu.memory_space<vmem>>, vector<1x16x64xbf16>
      %101 = vector.shape_cast %100 : vector<1x16x64xbf16> to vector<16x64xbf16>
      %102 = vector.shape_cast %99 : vector<16x64xbf16> to vector<1x16x64xbf16>
      tpu.vector_store %arg11[%c0_129, %c1_130, %c0_131], %102 {strides = array<i32>} : memref<10x18x128xbf16, #tpu.memory_space<vmem>>, vector<1x16x64xbf16>,
      %c0_132 = arith.constant 0 : index
      %c0_133 = arith.constant 0 : index
      %c0_134 = arith.constant 0 : index
      %c0_135 = arith.constant 0 : index
      %103 = vector.load %arg5[%c0_132, %c0_133, %c0_134, %c0_135] : memref<1x1x16x64xbf16, #tpu.memory_space<vmem>>, vector<1x1x16x64xbf16>
      %104 = vector.shape_cast %103 : vector<1x1x16x64xbf16> to vector<16x64xbf16>
      %c0_136 = arith.constant 0 : index
      %c1_137 = arith.constant 1 : index
      %c64_138 = arith.constant 64 : index
      %105 = vector.load %arg11[%c0_136, %c1_137, %c64_138] : memref<10x18x128xbf16, #tpu.memory_space<vmem>>, vector<1x16x64xbf16>
      %106 = vector.shape_cast %105 : vector<1x16x64xbf16> to vector<16x64xbf16>
      %107 = vector.shape_cast %104 : vector<16x64xbf16> to vector<1x16x64xbf16>
      tpu.vector_store %arg11[%c0_136, %c1_137, %c64_138], %107 {strides = array<i32>} : memref<10x18x128xbf16, #tpu.memory_space<vmem>>, vector<1x16x64xbf16>,
    } else {
    }
    %c1_i32 = arith.constant 1 : i32
    %11 = arith.cmpi slt, %arg1, %c1_i32 : i32
    %12 = arith.extui %11 : i1 to i32
    %c0_i32_15 = arith.constant 0 : i32
    %13 = arith.cmpi ne, %12, %c0_i32_15 : i32
    scf.if %13 {
      %c0_125 = arith.constant 0 : index
      %c0_126 = arith.constant 0 : index
      %c0_127 = arith.constant 0 : index
      %c0_128 = arith.constant 0 : index
      %98 = vector.load %arg4[%c0_125, %c0_126, %c0_127, %c0_128] : memref<1x1x16x64xbf16, #tpu.memory_space<vmem>>, vector<1x1x16x64xbf16>
      %99 = vector.shape_cast %98 : vector<1x1x16x64xbf16> to vector<16x64xbf16>
      %c9 = arith.constant 9 : index
      %c1_129 = arith.constant 1 : index
      %c0_130 = arith.constant 0 : index
      %100 = vector.load %arg11[%c9, %c1_129, %c0_130] : memref<10x18x128xbf16, #tpu.memory_space<vmem>>, vector<1x16x64xbf16>
      %101 = vector.shape_cast %100 : vector<1x16x64xbf16> to vector<16x64xbf16>
      %102 = vector.shape_cast %99 : vector<16x64xbf16> to vector<1x16x64xbf16>
      tpu.vector_store %arg11[%c9, %c1_129, %c0_130], %102 {strides = array<i32>} : memref<10x18x128xbf16, #tpu.memory_space<vmem>>, vector<1x16x64xbf16>,
      %c0_131 = arith.constant 0 : index
      %c0_132 = arith.constant 0 : index
      %c0_133 = arith.constant 0 : index
      %c0_134 = arith.constant 0 : index
      %103 = vector.load %arg7[%c0_131, %c0_132, %c0_133, %c0_134] : memref<1x1x16x64xbf16, #tpu.memory_space<vmem>>, vector<1x1x16x64xbf16>
      %104 = vector.shape_cast %103 : vector<1x1x16x64xbf16> to vector<16x64xbf16>
      %c9_135 = arith.constant 9 : index
      %c1_136 = arith.constant 1 : index
      %c64_137 = arith.constant 64 : index
      %105 = vector.load %arg11[%c9_135, %c1_136, %c64_137] : memref<10x18x128xbf16, #tpu.memory_space<vmem>>, vector<1x16x64xbf16>
      %106 = vector.shape_cast %105 : vector<1x16x64xbf16> to vector<16x64xbf16>
      %107 = vector.shape_cast %104 : vector<16x64xbf16> to vector<1x16x64xbf16>
      tpu.vector_store %arg11[%c9_135, %c1_136, %c64_137], %107 {strides = array<i32>} : memref<10x18x128xbf16, #tpu.memory_space<vmem>>, vector<1x16x64xbf16>,
    } else {
    }
    %c0_16 = arith.constant 0 : index
    %c0_17 = arith.constant 0 : index
    %c0_18 = arith.constant 0 : index
    %14 = vector.load %arg11[%c0_16, %c0_17, %c0_18] : memref<10x18x128xbf16, #tpu.memory_space<vmem>>, vector<10x16x128xbf16>
    %c0_19 = arith.constant 0 : index
    %c0_20 = arith.constant 0 : index
    %c0_21 = arith.constant 0 : index
    %c0_22 = arith.constant 0 : index
    %15 = vector.load %arg12[%c0_19, %c0_20, %c0_21, %c0_22] : memref<3x10x16x128xbf16, #tpu.memory_space<vmem>>, vector<1x10x16x128xbf16>
    %16 = vector.shape_cast %15 : vector<1x10x16x128xbf16> to vector<10x16x128xbf16>
    %17 = vector.shape_cast %14 : vector<10x16x128xbf16> to vector<1x10x16x128xbf16>
    tpu.vector_store %arg12[%c0_19, %c0_20, %c0_21, %c0_22], %17 {strides = array<i32>} : memref<3x10x16x128xbf16, #tpu.memory_space<vmem>>, vector<1x10x16x128xbf16>,
    %c0_23 = arith.constant 0 : index
    %c1_24 = arith.constant 1 : index
    %c0_25 = arith.constant 0 : index
    %18 = vector.load %arg11[%c0_23, %c1_24, %c0_25] : memref<10x18x128xbf16, #tpu.memory_space<vmem>>, vector<10x16x128xbf16>
    %c1_26 = arith.constant 1 : index
    %c0_27 = arith.constant 0 : index
    %c0_28 = arith.constant 0 : index
    %c0_29 = arith.constant 0 : index
    %19 = vector.load %arg12[%c1_26, %c0_27, %c0_28, %c0_29] : memref<3x10x16x128xbf16, #tpu.memory_space<vmem>>, vector<1x10x16x128xbf16>
    %20 = vector.shape_cast %19 : vector<1x10x16x128xbf16> to vector<10x16x128xbf16>
    %21 = vector.shape_cast %18 : vector<10x16x128xbf16> to vector<1x10x16x128xbf16>
    tpu.vector_store %arg12[%c1_26, %c0_27, %c0_28, %c0_29], %21 {strides = array<i32>} : memref<3x10x16x128xbf16, #tpu.memory_space<vmem>>, vector<1x10x16x128xbf16>,
    %c0_30 = arith.constant 0 : index
    %c2 = arith.constant 2 : index
    %c0_31 = arith.constant 0 : index
    %22 = vector.load %arg11[%c0_30, %c2, %c0_31] : memref<10x18x128xbf16, #tpu.memory_space<vmem>>, vector<10x16x128xbf16>
    %c2_32 = arith.constant 2 : index
    %c0_33 = arith.constant 0 : index
    %c0_34 = arith.constant 0 : index
    %c0_35 = arith.constant 0 : index
    %23 = vector.load %arg12[%c2_32, %c0_33, %c0_34, %c0_35] : memref<3x10x16x128xbf16, #tpu.memory_space<vmem>>, vector<1x10x16x128xbf16>
    %24 = vector.shape_cast %23 : vector<1x10x16x128xbf16> to vector<10x16x128xbf16>
    %25 = vector.shape_cast %22 : vector<10x16x128xbf16> to vector<1x10x16x128xbf16>
    tpu.vector_store %arg12[%c2_32, %c0_33, %c0_34, %c0_35], %25 {strides = array<i32>} : memref<3x10x16x128xbf16, #tpu.memory_space<vmem>>, vector<1x10x16x128xbf16>,
    %cst_36 = arith.constant 0.000000e+00 : f32
    %26 = vector.broadcast %cst_36 : f32 to vector<128x128xf32>
    %c0_37 = arith.constant 0 : index
    %c0_38 = arith.constant 0 : index
    %c0_39 = arith.constant 0 : index
    %c0_40 = arith.constant 0 : index
    %27 = vector.load %arg12[%c0_37, %c0_38, %c0_39, %c0_40] : memref<3x10x16x128xbf16, #tpu.memory_space<vmem>>, vector<1x8x16x128xbf16>
    %28 = vector.shape_cast %27 : vector<1x8x16x128xbf16> to vector<8x16x128xbf16>
    %29 = vector.shape_cast %28 : vector<8x16x128xbf16> to vector<128x128xbf16>
    %c0_41 = arith.constant 0 : index
    %c0_42 = arith.constant 0 : index
    %c0_43 = arith.constant 0 : index
    %c0_44 = arith.constant 0 : index
    %30 = vector.load %arg8[%c0_41, %c0_42, %c0_43, %c0_44] : memref<3x3x128x128xbf16, #tpu.memory_space<vmem>>, vector<1x1x128x128xbf16>
    %31 = vector.shape_cast %30 : vector<1x1x128x128xbf16> to vector<128x128xbf16>
    %cst_45 = arith.constant dense<0.000000e+00> : vector<128x128xf32>
    %32 = tpu.matmul %29, %31, %cst_45 {dimension_numbers = #tpu.dot_dimension_numbers<[1], [0], [0], [1], [0, 0, 1, 1], [], []>} : vector<128x128xbf16>, vector<128x128xbf16>, vector<128x128xf32> -> vector<128x128xf32>
    %33 = arith.addf %26, %32 : vector<128x128xf32>
    %c1_46 = arith.constant 1 : index
    %c0_47 = arith.constant 0 : index
    %c0_48 = arith.constant 0 : index
    %c0_49 = arith.constant 0 : index
    %34 = vector.load %arg12[%c1_46, %c0_47, %c0_48, %c0_49] : memref<3x10x16x128xbf16, #tpu.memory_space<vmem>>, vector<1x8x16x128xbf16>
    %35 = vector.shape_cast %34 : vector<1x8x16x128xbf16> to vector<8x16x128xbf16>
    %36 = vector.shape_cast %35 : vector<8x16x128xbf16> to vector<128x128xbf16>
    %c0_50 = arith.constant 0 : index
    %c1_51 = arith.constant 1 : index
    %c0_52 = arith.constant 0 : index
    %c0_53 = arith.constant 0 : index
    %37 = vector.load %arg8[%c0_50, %c1_51, %c0_52, %c0_53] : memref<3x3x128x128xbf16, #tpu.memory_space<vmem>>, vector<1x1x128x128xbf16>
    %38 = vector.shape_cast %37 : vector<1x1x128x128xbf16> to vector<128x128xbf16>
    %cst_54 = arith.constant dense<0.000000e+00> : vector<128x128xf32>
    %39 = tpu.matmul %36, %38, %cst_54 {dimension_numbers = #tpu.dot_dimension_numbers<[1], [0], [0], [1], [0, 0, 1, 1], [], []>} : vector<128x128xbf16>, vector<128x128xbf16>, vector<128x128xf32> -> vector<128x128xf32>
    %40 = arith.addf %33, %39 : vector<128x128xf32>
    %c2_55 = arith.constant 2 : index
    %c0_56 = arith.constant 0 : index
    %c0_57 = arith.constant 0 : index
    %c0_58 = arith.constant 0 : index
    %41 = vector.load %arg12[%c2_55, %c0_56, %c0_57, %c0_58] : memref<3x10x16x128xbf16, #tpu.memory_space<vmem>>, vector<1x8x16x128xbf16>
    %42 = vector.shape_cast %41 : vector<1x8x16x128xbf16> to vector<8x16x128xbf16>
    %43 = vector.shape_cast %42 : vector<8x16x128xbf16> to vector<128x128xbf16>
    %c0_59 = arith.constant 0 : index
    %c2_60 = arith.constant 2 : index
    %c0_61 = arith.constant 0 : index
    %c0_62 = arith.constant 0 : index
    %44 = vector.load %arg8[%c0_59, %c2_60, %c0_61, %c0_62] : memref<3x3x128x128xbf16, #tpu.memory_space<vmem>>, vector<1x1x128x128xbf16>
    %45 = vector.shape_cast %44 : vector<1x1x128x128xbf16> to vector<128x128xbf16>
    %cst_63 = arith.constant dense<0.000000e+00> : vector<128x128xf32>
    %46 = tpu.matmul %43, %45, %cst_63 {dimension_numbers = #tpu.dot_dimension_numbers<[1], [0], [0], [1], [0, 0, 1, 1], [], []>} : vector<128x128xbf16>, vector<128x128xbf16>, vector<128x128xf32> -> vector<128x128xf32>
    %47 = arith.addf %40, %46 : vector<128x128xf32>
    %c0_64 = arith.constant 0 : index
    %c1_65 = arith.constant 1 : index
    %c0_66 = arith.constant 0 : index
    %c0_67 = arith.constant 0 : index
    %48 = vector.load %arg12[%c0_64, %c1_65, %c0_66, %c0_67] : memref<3x10x16x128xbf16, #tpu.memory_space<vmem>>, vector<1x8x16x128xbf16>
    %49 = vector.shape_cast %48 : vector<1x8x16x128xbf16> to vector<8x16x128xbf16>
    %50 = vector.shape_cast %49 : vector<8x16x128xbf16> to vector<128x128xbf16>
    %c1_68 = arith.constant 1 : index
    %c0_69 = arith.constant 0 : index
    %c0_70 = arith.constant 0 : index
    %c0_71 = arith.constant 0 : index
    %51 = vector.load %arg8[%c1_68, %c0_69, %c0_70, %c0_71] : memref<3x3x128x128xbf16, #tpu.memory_space<vmem>>, vector<1x1x128x128xbf16>
    %52 = vector.shape_cast %51 : vector<1x1x128x128xbf16> to vector<128x128xbf16>
    %cst_72 = arith.constant dense<0.000000e+00> : vector<128x128xf32>
    %53 = tpu.matmul %50, %52, %cst_72 {dimension_numbers = #tpu.dot_dimension_numbers<[1], [0], [0], [1], [0, 0, 1, 1], [], []>} : vector<128x128xbf16>, vector<128x128xbf16>, vector<128x128xf32> -> vector<128x128xf32>
    %54 = arith.addf %47, %53 : vector<128x128xf32>
    %c1_73 = arith.constant 1 : index
    %c1_74 = arith.constant 1 : index
    %c0_75 = arith.constant 0 : index
    %c0_76 = arith.constant 0 : index
    %55 = vector.load %arg12[%c1_73, %c1_74, %c0_75, %c0_76] : memref<3x10x16x128xbf16, #tpu.memory_space<vmem>>, vector<1x8x16x128xbf16>
    %56 = vector.shape_cast %55 : vector<1x8x16x128xbf16> to vector<8x16x128xbf16>
    %57 = vector.shape_cast %56 : vector<8x16x128xbf16> to vector<128x128xbf16>
    %c1_77 = arith.constant 1 : index
    %c1_78 = arith.constant 1 : index
    %c0_79 = arith.constant 0 : index
    %c0_80 = arith.constant 0 : index
    %58 = vector.load %arg8[%c1_77, %c1_78, %c0_79, %c0_80] : memref<3x3x128x128xbf16, #tpu.memory_space<vmem>>, vector<1x1x128x128xbf16>
    %59 = vector.shape_cast %58 : vector<1x1x128x128xbf16> to vector<128x128xbf16>
    %cst_81 = arith.constant dense<0.000000e+00> : vector<128x128xf32>
    %60 = tpu.matmul %57, %59, %cst_81 {dimension_numbers = #tpu.dot_dimension_numbers<[1], [0], [0], [1], [0, 0, 1, 1], [], []>} : vector<128x128xbf16>, vector<128x128xbf16>, vector<128x128xf32> -> vector<128x128xf32>
    %61 = arith.addf %54, %60 : vector<128x128xf32>
    %c2_82 = arith.constant 2 : index
    %c1_83 = arith.constant 1 : index
    %c0_84 = arith.constant 0 : index
    %c0_85 = arith.constant 0 : index
    %62 = vector.load %arg12[%c2_82, %c1_83, %c0_84, %c0_85] : memref<3x10x16x128xbf16, #tpu.memory_space<vmem>>, vector<1x8x16x128xbf16>
    %63 = vector.shape_cast %62 : vector<1x8x16x128xbf16> to vector<8x16x128xbf16>
    %64 = vector.shape_cast %63 : vector<8x16x128xbf16> to vector<128x128xbf16>
    %c1_86 = arith.constant 1 : index
    %c2_87 = arith.constant 2 : index
    %c0_88 = arith.constant 0 : index
    %c0_89 = arith.constant 0 : index
    %65 = vector.load %arg8[%c1_86, %c2_87, %c0_88, %c0_89] : memref<3x3x128x128xbf16, #tpu.memory_space<vmem>>, vector<1x1x128x128xbf16>
    %66 = vector.shape_cast %65 : vector<1x1x128x128xbf16> to vector<128x128xbf16>
    %cst_90 = arith.constant dense<0.000000e+00> : vector<128x128xf32>
    %67 = tpu.matmul %64, %66, %cst_90 {dimension_numbers = #tpu.dot_dimension_numbers<[1], [0], [0], [1], [0, 0, 1, 1], [], []>} : vector<128x128xbf16>, vector<128x128xbf16>, vector<128x128xf32> -> vector<128x128xf32>
    %68 = arith.addf %61, %67 : vector<128x128xf32>
    %c0_91 = arith.constant 0 : index
    %c2_92 = arith.constant 2 : index
    %c0_93 = arith.constant 0 : index
    %c0_94 = arith.constant 0 : index
    %69 = vector.load %arg12[%c0_91, %c2_92, %c0_93, %c0_94] : memref<3x10x16x128xbf16, #tpu.memory_space<vmem>>, vector<1x8x16x128xbf16>
    %70 = vector.shape_cast %69 : vector<1x8x16x128xbf16> to vector<8x16x128xbf16>
    %71 = vector.shape_cast %70 : vector<8x16x128xbf16> to vector<128x128xbf16>
    %c2_95 = arith.constant 2 : index
    %c0_96 = arith.constant 0 : index
    %c0_97 = arith.constant 0 : index
    %c0_98 = arith.constant 0 : index
    %72 = vector.load %arg8[%c2_95, %c0_96, %c0_97, %c0_98] : memref<3x3x128x128xbf16, #tpu.memory_space<vmem>>, vector<1x1x128x128xbf16>
    %73 = vector.shape_cast %72 : vector<1x1x128x128xbf16> to vector<128x128xbf16>
    %cst_99 = arith.constant dense<0.000000e+00> : vector<128x128xf32>
    %74 = tpu.matmul %71, %73, %cst_99 {dimension_numbers = #tpu.dot_dimension_numbers<[1], [0], [0], [1], [0, 0, 1, 1], [], []>} : vector<128x128xbf16>, vector<128x128xbf16>, vector<128x128xf32> -> vector<128x128xf32>
    %75 = arith.addf %68, %74 : vector<128x128xf32>
    %c1_100 = arith.constant 1 : index
    %c2_101 = arith.constant 2 : index
    %c0_102 = arith.constant 0 : index
    %c0_103 = arith.constant 0 : index
    %76 = vector.load %arg12[%c1_100, %c2_101, %c0_102, %c0_103] : memref<3x10x16x128xbf16, #tpu.memory_space<vmem>>, vector<1x8x16x128xbf16>
    %77 = vector.shape_cast %76 : vector<1x8x16x128xbf16> to vector<8x16x128xbf16>
    %78 = vector.shape_cast %77 : vector<8x16x128xbf16> to vector<128x128xbf16>
    %c2_104 = arith.constant 2 : index
    %c1_105 = arith.constant 1 : index
    %c0_106 = arith.constant 0 : index
    %c0_107 = arith.constant 0 : index
    %79 = vector.load %arg8[%c2_104, %c1_105, %c0_106, %c0_107] : memref<3x3x128x128xbf16, #tpu.memory_space<vmem>>, vector<1x1x128x128xbf16>
    %80 = vector.shape_cast %79 : vector<1x1x128x128xbf16> to vector<128x128xbf16>
    %cst_108 = arith.constant dense<0.000000e+00> : vector<128x128xf32>
    %81 = tpu.matmul %78, %80, %cst_108 {dimension_numbers = #tpu.dot_dimension_numbers<[1], [0], [0], [1], [0, 0, 1, 1], [], []>} : vector<128x128xbf16>, vector<128x128xbf16>, vector<128x128xf32> -> vector<128x128xf32>
    %82 = arith.addf %75, %81 : vector<128x128xf32>
    %c2_109 = arith.constant 2 : index
    %c2_110 = arith.constant 2 : index
    %c0_111 = arith.constant 0 : index
    %c0_112 = arith.constant 0 : index
    %83 = vector.load %arg12[%c2_109, %c2_110, %c0_111, %c0_112] : memref<3x10x16x128xbf16, #tpu.memory_space<vmem>>, vector<1x8x16x128xbf16>
    %84 = vector.shape_cast %83 : vector<1x8x16x128xbf16> to vector<8x16x128xbf16>
    %85 = vector.shape_cast %84 : vector<8x16x128xbf16> to vector<128x128xbf16>
    %c2_113 = arith.constant 2 : index
    %c2_114 = arith.constant 2 : index
    %c0_115 = arith.constant 0 : index
    %c0_116 = arith.constant 0 : index
    %86 = vector.load %arg8[%c2_113, %c2_114, %c0_115, %c0_116] : memref<3x3x128x128xbf16, #tpu.memory_space<vmem>>, vector<1x1x128x128xbf16>
    %87 = vector.shape_cast %86 : vector<1x1x128x128xbf16> to vector<128x128xbf16>
    %cst_117 = arith.constant dense<0.000000e+00> : vector<128x128xf32>
    %88 = tpu.matmul %85, %87, %cst_117 {dimension_numbers = #tpu.dot_dimension_numbers<[1], [0], [0], [1], [0, 0, 1, 1], [], []>} : vector<128x128xbf16>, vector<128x128xbf16>, vector<128x128xf32> -> vector<128x128xf32>
    %89 = arith.addf %82, %88 : vector<128x128xf32>
    %c0_118 = arith.constant 0 : index
    %c0_119 = arith.constant 0 : index
    %90 = vector.load %arg9[%c0_118, %c0_119] : memref<1x128xf32, #tpu.memory_space<vmem>>, vector<1x128xf32>
    %91 = vector.broadcast %90 : vector<1x128xf32> to vector<128x128xf32>
    %92 = arith.addf %89, %91 : vector<128x128xf32>
    %cst_120 = arith.constant 0.000000e+00 : f32
    %93 = vector.broadcast %cst_120 : f32 to vector<128x128xf32>
    %94 = arith.maximumf %92, %93 : vector<128x128xf32>
    %95 = vector.shape_cast %94 : vector<128x128xf32> to vector<1x8x16x128xf32>
    %96 = arith.truncf %95 : vector<1x8x16x128xf32> to vector<1x8x16x128xbf16>
    %c0_121 = arith.constant 0 : index
    %c0_122 = arith.constant 0 : index
    %c0_123 = arith.constant 0 : index
    %c0_124 = arith.constant 0 : index
    %97 = vector.load %arg10[%c0_121, %c0_122, %c0_123, %c0_124] : memref<1x8x16x128xbf16, #tpu.memory_space<vmem>>, vector<1x8x16x128xbf16>
    tpu.vector_store %arg10[%c0_121, %c0_122, %c0_123, %c0_124], %96 {strides = array<i32>} : memref<1x8x16x128xbf16, #tpu.memory_space<vmem>>, vector<1x8x16x128xbf16>,
    return
  }
  func.func @transform_0(%arg0: i32, %arg1: i32) -> (i32, i32, i32, i32) {
    %c8_i32 = arith.constant 8 : i32
    %0 = arith.muli %arg1, %c8_i32 : i32
    %c1_i32 = arith.constant 1 : i32
    %1 = arith.subi %0, %c1_i32 : i32
    %c0_i32 = arith.constant 0 : i32
    %2 = arith.maxsi %1, %c0_i32 : i32
    %c0_i32_0 = arith.constant 0 : i32
    %c0_i32_1 = arith.constant 0 : i32
    %c0_i32_2 = arith.constant 0 : i32
    return %arg0, %2, %c0_i32_0, %c0_i32_1 : i32, i32, i32, i32
  }
  func.func @transform_1(%arg0: i32, %arg1: i32) -> (i32, i32, i32, i32) {
    %c0_i32 = arith.constant 0 : i32
    %c0_i32_0 = arith.constant 0 : i32
    %c0_i32_1 = arith.constant 0 : i32
    return %arg0, %arg1, %c0_i32, %c0_i32_0 : i32, i32, i32, i32
  }
  func.func @transform_2(%arg0: i32, %arg1: i32) -> (i32, i32, i32, i32) {
    %c1_i32 = arith.constant 1 : i32
    %0 = arith.addi %arg1, %c1_i32 : i32
    %c8_i32 = arith.constant 8 : i32
    %1 = arith.muli %0, %c8_i32 : i32
    %c15_i32 = arith.constant 15 : i32
    %2 = arith.minsi %1, %c15_i32 : i32
    %c0_i32 = arith.constant 0 : i32
    %c0_i32_0 = arith.constant 0 : i32
    %c0_i32_1 = arith.constant 0 : i32
    return %arg0, %2, %c0_i32, %c0_i32_0 : i32, i32, i32, i32
  }
  func.func @transform_3(%arg0: i32, %arg1: i32) -> (i32, i32, i32, i32) {
    %c8_i32 = arith.constant 8 : i32
    %0 = arith.muli %arg1, %c8_i32 : i32
    %c1_i32 = arith.constant 1 : i32
    %1 = arith.subi %0, %c1_i32 : i32
    %c0_i32 = arith.constant 0 : i32
    %2 = arith.maxsi %1, %c0_i32 : i32
    %c0_i32_0 = arith.constant 0 : i32
    %c0_i32_1 = arith.constant 0 : i32
    %c0_i32_2 = arith.constant 0 : i32
    return %arg0, %2, %c0_i32_0, %c0_i32_1 : i32, i32, i32, i32
  }
  func.func @transform_4(%arg0: i32, %arg1: i32) -> (i32, i32, i32, i32) {
    %c0_i32 = arith.constant 0 : i32
    %c0_i32_0 = arith.constant 0 : i32
    %c0_i32_1 = arith.constant 0 : i32
    return %arg0, %arg1, %c0_i32, %c0_i32_0 : i32, i32, i32, i32
  }
  func.func @transform_5(%arg0: i32, %arg1: i32) -> (i32, i32, i32, i32) {
    %c1_i32 = arith.constant 1 : i32
    %0 = arith.addi %arg1, %c1_i32 : i32
    %c8_i32 = arith.constant 8 : i32
    %1 = arith.muli %0, %c8_i32 : i32
    %c15_i32 = arith.constant 15 : i32
    %2 = arith.minsi %1, %c15_i32 : i32
    %c0_i32 = arith.constant 0 : i32
    %c0_i32_0 = arith.constant 0 : i32
    %c0_i32_1 = arith.constant 0 : i32
    return %arg0, %2, %c0_i32, %c0_i32_0 : i32, i32, i32, i32
  }
  func.func @transform_6(%arg0: i32, %arg1: i32) -> (i32, i32, i32, i32) {
    %c0_i32 = arith.constant 0 : i32
    %c0_i32_0 = arith.constant 0 : i32
    %c0_i32_1 = arith.constant 0 : i32
    %c0_i32_2 = arith.constant 0 : i32
    %c0_i32_3 = arith.constant 0 : i32
    return %c0_i32, %c0_i32_0, %c0_i32_1, %c0_i32_2 : i32, i32, i32, i32
  }
  func.func @transform_7(%arg0: i32, %arg1: i32) -> (i32, i32) {
    %c0_i32 = arith.constant 0 : i32
    %c0_i32_0 = arith.constant 0 : i32
    %c0_i32_1 = arith.constant 0 : i32
    return %c0_i32, %c0_i32_0 : i32, i32
  }
  func.func @transform_8(%arg0: i32, %arg1: i32) -> (i32, i32, i32, i32) {
    %c0_i32 = arith.constant 0 : i32
    %c0_i32_0 = arith.constant 0 : i32
    %c0_i32_1 = arith.constant 0 : i32
    return %arg0, %arg1, %c0_i32, %c0_i32_0 : i32, i32, i32, i32
  }
}

</mosaic_0001>

<llo_original>
// kernel: upscale_and_concat_layer.1
$region0: #{upscale_and_concat_layer.1}
  #allocation0 [shape = 'u32[]', space=smem, size = 0x4, offset = 0x4, fixed_abs, tag = 'smem constant byte address 0x4 - core index']
  #allocation1 [shape = 'u32[144,128]{1,0:T(1,128)}', space=vmem, size = 0x12000, scoped, tag = 'internal scratch']
  #allocation2 [shape = 'bf16[10,18,128]{2,1,0:T(8,128)(2,1)}', space=vmem, size = 0xf000, scoped, tag = 'scratch operand']
  #allocation3 [shape = 'bf16[3,10,16,128]{3,2,1,0:T(16,128)(2,1)}', space=vmem, size = 0x1e000, scoped, tag = 'scratch operand']
  %s0 = inlined_call_operand.vmem [shape: bf16[2,16,16,64], index: 0, kind: input, shape index: {}, may-alias: {0,1,2}]
  %s1 = inlined_call_operand.vmem [shape: bf16[2,16,16,64], index: 1, kind: input, shape index: {}, may-alias: {0,1,2}]
  %s2 = inlined_call_operand.vmem [shape: bf16[2,16,16,64], index: 2, kind: input, shape index: {}, may-alias: {0,1,2}]
  %s3 = inlined_call_operand.vmem [shape: bf16[2,16,16,64], index: 3, kind: input, shape index: {}, may-alias: {3,4,5}]
  %s4 = inlined_call_operand.vmem [shape: bf16[2,16,16,64], index: 4, kind: input, shape index: {}, may-alias: {3,4,5}]
  %s5 = inlined_call_operand.vmem [shape: bf16[2,16,16,64], index: 5, kind: input, shape index: {}, may-alias: {3,4,5}]
  %s6 = inlined_call_operand.vmem [shape: bf16[3,3,128,128], index: 6, kind: input, shape index: {}]
  %s7 = inlined_call_operand.vmem [shape: f32[1,128], index: 7, kind: input, shape index: {}]
  %s8 = inlined_call_operand.vmem [shape: bf16[2,16,16,128], index: 8, kind: output, shape index: {}]
  %s9 = sld [smem:[#allocation0]]
  $region73: #{upscale_and_concat_layer.1} parent=0
    _
  %s11 = ssub.s32 1, %s9
  %s12 = scalar_select 0, %s11, %s9
  loop: start=0, step=1, limit=6
  $region2: #{upscale_and_concat_layer.1} parent=0 // loop_pre_header
    _
  $region3: #{upscale_and_concat_layer.1} parent=0 // loop_header
    %s14 = sphi 0, %s18
    %p15 = scmp.ge.s32.totalorder %s14, 6
    %s21 = sphi 0, %s33
    %s22 = sphi 0, %s29
    %s23 = sphi 0, %s21
    %s24 = sphi 0, %s22
    %s25 = sphi 0, %s23
    %s26 = sphi 0, %s24
    %s46 = sphi 0, %s48
    %s49 = sphi 0, %s46
    %s50 = sphi 0, %s49
    %s66 = sphi 0, %s50
    %s74 = sphi 0, %s76
    %s77 = sphi 0, %s74
    %s78 = sphi 0, %s77
    %s94 = sphi 0, %s78
    %s110 = sphi 0, %s112
    %s113 = sphi 0, %s110
    %s114 = sphi 0, %s113
    %s130 = sphi 0, %s114
    %s146 = sphi 0, %s148
    %s149 = sphi 0, %s146
    %s150 = sphi 0, %s149
    %s166 = sphi 0, %s150
    %s174 = sphi 0, %s176
    %s177 = sphi 0, %s174
    %s178 = sphi 0, %s177
    %s194 = sphi 0, %s178
    %s210 = sphi 0, %s212
    %s213 = sphi 0, %s210
    %s214 = sphi 0, %s213
    %s230 = sphi 0, %s214
    %s234 = sphi 0, %s234
    %s236 = sphi 0, %s234
    %s237 = sphi 0, %s236
    %s251 = sphi 0, %s237
    %s255 = sphi 0, %s255
    %s257 = sphi 0, %s255
    %s258 = sphi 0, %s257
    %s272 = sphi 0, %s258
    %s280 = sphi 0, %s282
    %s283 = sphi 0, %s280
    %s284 = sphi 0, %s283
    %s300 = sphi 0, %s284
  $region4: #{upscale_and_concat_layer.1} parent=0 // loop_header_branch
    %17 = sbr.rel (%p15) target = $region8
  $region5: #{upscale_and_concat_layer.1} parent=0 // loop_body
    %s19 = ssub.s32 %s14, 1
    %s20 = ssub.s32 %s14, 2
    %s27 = sadd.s32 1, %s22
    %p28 = scmp.ge.s32.totalorder %s27, 2
    %s29 = scalar_select %p28, 0, %s27
    %s30 = sadd.s32 1, %s21
    %s31 = scalar_select %p28, %s30, %s21
    %p32 = scmp.ge.s32.totalorder %s31, 2
    %s33 = scalar_select %p32, 0, %s31
    %s34 = smul.u32 %s22, 8
    %s35 = ssub.s32 %s34, 1
    %p36 = scmp.gt.s32.totalorder %s35, 0
    %s37 = scalar_select %p36, %s35, 0
    %s38 = smul.u32 %s29, 8
    %s39 = ssub.s32 %s38, 1
    %p40 = scmp.gt.s32.totalorder %s39, 0
    %s41 = scalar_select %p40, %s39, 0
    %s42 = ssub.s32 %s21, %s33
    %s43 = ssub.s32 %s37, %s41
    %s44 = sor.u32 %s42, %s43
    %p45 = scmp.eq.s32.totalorder %s44, 0
    %s47 = sadd.s32 %s46, 1
    %s48 = scalar_select %p45, %s46, %s47
    %p51 = pneg %p45
    %p52 = scmp.eq.s32.totalorder %s14, 3
    %p53 = por %p51, %p52
    %p54 = scmp.ne.s32.totalorder %s46, %s49
    %p55 = scmp.eq.s32.totalorder %s14, 0
    %p56 = por %p54, %p55
    %p57 = scmp.ne.s32.totalorder %s46, %s49
    %p58 = scmp.eq.s32.totalorder %s19, 3
    %p59 = por %p57, %p58
    %p60 = scmp.ne.s32.totalorder %s49, %s50
    %p61 = scmp.eq.s32.totalorder %s19, 0
    %p62 = por %p60, %p61
    %p63 = scmp.ne.s32.totalorder %s49, %s50
    %p64 = scmp.eq.s32.totalorder %s20, 3
    %p65 = por %p63, %p64
    %p67 = scmp.ne.s32.totalorder %s50, %s66
    %p68 = scmp.eq.s32.totalorder %s20, 0
    %p69 = por %p67, %p68
    %s70 = ssub.s32 %s21, %s33
    %s71 = ssub.s32 %s22, %s29
    %s72 = sor.u32 %s70, %s71
    %p73 = scmp.eq.s32.totalorder %s72, 0
    %s75 = sadd.s32 %s74, 1
    %s76 = scalar_select %p73, %s74, %s75
    %p79 = pneg %p73
    %p80 = scmp.eq.s32.totalorder %s14, 3
    %p81 = por %p79, %p80
    %p82 = scmp.ne.s32.totalorder %s74, %s77
    %p83 = scmp.eq.s32.totalorder %s14, 0
    %p84 = por %p82, %p83
    %p85 = scmp.ne.s32.totalorder %s74, %s77
    %p86 = scmp.eq.s32.totalorder %s19, 3
    %p87 = por %p85, %p86
    %p88 = scmp.ne.s32.totalorder %s77, %s78
    %p89 = scmp.eq.s32.totalorder %s19, 0
    %p90 = por %p88, %p89
    %p91 = scmp.ne.s32.totalorder %s77, %s78
    %p92 = scmp.eq.s32.totalorder %s20, 3
    %p93 = por %p91, %p92
    %p95 = scmp.ne.s32.totalorder %s78, %s94
    %p96 = scmp.eq.s32.totalorder %s20, 0
    %p97 = por %p95, %p96
    %s98 = sadd.s32 %s22, 1
    %s99 = smul.u32 %s98, 8
    %p100 = scmp.lt.s32.totalorder %s99, 15
    %s101 = scalar_select %p100, %s99, 15
    %s102 = sadd.s32 %s29, 1
    %s103 = smul.u32 %s102, 8
    %p104 = scmp.lt.s32.totalorder %s103, 15
    %s105 = scalar_select %p104, %s103, 15
    %s106 = ssub.s32 %s21, %s33
    %s107 = ssub.s32 %s101, %s105
    %s108 = sor.u32 %s106, %s107
    %p109 = scmp.eq.s32.totalorder %s108, 0
    %s111 = sadd.s32 %s110, 1
    %s112 = scalar_select %p109, %s110, %s111
    %p115 = pneg %p109
    %p116 = scmp.eq.s32.totalorder %s14, 3
    %p117 = por %p115, %p116
    %p118 = scmp.ne.s32.totalorder %s110, %s113
    %p119 = scmp.eq.s32.totalorder %s14, 0
    %p120 = por %p118, %p119
    %p121 = scmp.ne.s32.totalorder %s110, %s113
    %p122 = scmp.eq.s32.totalorder %s19, 3
    %p123 = por %p121, %p122
    %p124 = scmp.ne.s32.totalorder %s113, %s114
    %p125 = scmp.eq.s32.totalorder %s19, 0
    %p126 = por %p124, %p125
    %p127 = scmp.ne.s32.totalorder %s113, %s114
    %p128 = scmp.eq.s32.totalorder %s20, 3
    %p129 = por %p127, %p128
    %p131 = scmp.ne.s32.totalorder %s114, %s130
    %p132 = scmp.eq.s32.totalorder %s20, 0
    %p133 = por %p131, %p132
    %s134 = smul.u32 %s22, 8
    %s135 = ssub.s32 %s134, 1
    %p136 = scmp.gt.s32.totalorder %s135, 0
    %s137 = scalar_select %p136, %s135, 0
    %s138 = smul.u32 %s29, 8
    %s139 = ssub.s32 %s138, 1
    %p140 = scmp.gt.s32.totalorder %s139, 0
    %s141 = scalar_select %p140, %s139, 0
    %s142 = ssub.s32 %s21, %s33
    %s143 = ssub.s32 %s137, %s141
    %s144 = sor.u32 %s142, %s143
    %p145 = scmp.eq.s32.totalorder %s144, 0
    %s147 = sadd.s32 %s146, 1
    %s148 = scalar_select %p145, %s146, %s147
    %p151 = pneg %p145
    %p152 = scmp.eq.s32.totalorder %s14, 3
    %p153 = por %p151, %p152
    %p154 = scmp.ne.s32.totalorder %s146, %s149
    %p155 = scmp.eq.s32.totalorder %s14, 0
    %p156 = por %p154, %p155
    %p157 = scmp.ne.s32.totalorder %s146, %s149
    %p158 = scmp.eq.s32.totalorder %s19, 3
    %p159 = por %p157, %p158
    %p160 = scmp.ne.s32.totalorder %s149, %s150
    %p161 = scmp.eq.s32.totalorder %s19, 0
    %p162 = por %p160, %p161
    %p163 = scmp.ne.s32.totalorder %s149, %s150
    %p164 = scmp.eq.s32.totalorder %s20, 3
    %p165 = por %p163, %p164
    %p167 = scmp.ne.s32.totalorder %s150, %s166
    %p168 = scmp.eq.s32.totalorder %s20, 0
    %p169 = por %p167, %p168
    %s170 = ssub.s32 %s21, %s33
    %s171 = ssub.s32 %s22, %s29
    %s172 = sor.u32 %s170, %s171
    %p173 = scmp.eq.s32.totalorder %s172, 0
    %s175 = sadd.s32 %s174, 1
    %s176 = scalar_select %p173, %s174, %s175
    %p179 = pneg %p173
    %p180 = scmp.eq.s32.totalorder %s14, 3
    %p181 = por %p179, %p180
    %p182 = scmp.ne.s32.totalorder %s174, %s177
    %p183 = scmp.eq.s32.totalorder %s14, 0
    %p184 = por %p182, %p183
    %p185 = scmp.ne.s32.totalorder %s174, %s177
    %p186 = scmp.eq.s32.totalorder %s19, 3
    %p187 = por %p185, %p186
    %p188 = scmp.ne.s32.totalorder %s177, %s178
    %p189 = scmp.eq.s32.totalorder %s19, 0
    %p190 = por %p188, %p189
    %p191 = scmp.ne.s32.totalorder %s177, %s178
    %p192 = scmp.eq.s32.totalorder %s20, 3
    %p193 = por %p191, %p192
    %p195 = scmp.ne.s32.totalorder %s178, %s194
    %p196 = scmp.eq.s32.totalorder %s20, 0
    %p197 = por %p195, %p196
    %s198 = sadd.s32 %s22, 1
    %s199 = smul.u32 %s198, 8
    %p200 = scmp.lt.s32.totalorder %s199, 15
    %s201 = scalar_select %p200, %s199, 15
    %s202 = sadd.s32 %s29, 1
    %s203 = smul.u32 %s202, 8
    %p204 = scmp.lt.s32.totalorder %s203, 15
    %s205 = scalar_select %p204, %s203, 15
    %s206 = ssub.s32 %s21, %s33
    %s207 = ssub.s32 %s201, %s205
    %s208 = sor.u32 %s206, %s207
    %p209 = scmp.eq.s32.totalorder %s208, 0
    %s211 = sadd.s32 %s210, 1
    %s212 = scalar_select %p209, %s210, %s211
    %p215 = pneg %p209
    %p216 = scmp.eq.s32.totalorder %s14, 3
    %p217 = por %p215, %p216
    %p218 = scmp.ne.s32.totalorder %s210, %s213
    %p219 = scmp.eq.s32.totalorder %s14, 0
    %p220 = por %p218, %p219
    %p221 = scmp.ne.s32.totalorder %s210, %s213
    %p222 = scmp.eq.s32.totalorder %s19, 3
    %p223 = por %p221, %p222
    %p224 = scmp.ne.s32.totalorder %s213, %s214
    %p225 = scmp.eq.s32.totalorder %s19, 0
    %p226 = por %p224, %p225
    %p227 = scmp.ne.s32.totalorder %s213, %s214
    %p228 = scmp.eq.s32.totalorder %s20, 3
    %p229 = por %p227, %p228
    %p231 = scmp.ne.s32.totalorder %s214, %s230
    %p232 = scmp.eq.s32.totalorder %s20, 0
    %p233 = por %p231, %p232
    %s235 = sadd.s32 %s234, 1
    %p238 = scmp.eq.s32.totalorder %s14, 3
    %p239 = scmp.ne.s32.totalorder %s234, %s236
    %p240 = scmp.eq.s32.totalorder %s14, 0
    %p241 = por %p239, %p240
    %p242 = scmp.ne.s32.totalorder %s234, %s236
    %p243 = scmp.eq.s32.totalorder %s19, 3
    %p244 = por %p242, %p243
    %p245 = scmp.ne.s32.totalorder %s236, %s237
    %p246 = scmp.eq.s32.totalorder %s19, 0
    %p247 = por %p245, %p246
    %p248 = scmp.ne.s32.totalorder %s236, %s237
    %p249 = scmp.eq.s32.totalorder %s20, 3
    %p250 = por %p248, %p249
    %p252 = scmp.ne.s32.totalorder %s237, %s251
    %p253 = scmp.eq.s32.totalorder %s20, 0
    %p254 = por %p252, %p253
    %s256 = sadd.s32 %s255, 1
    %p259 = scmp.eq.s32.totalorder %s14, 3
    %p260 = scmp.ne.s32.totalorder %s255, %s257
    %p261 = scmp.eq.s32.totalorder %s14, 0
    %p262 = por %p260, %p261
    %p263 = scmp.ne.s32.totalorder %s255, %s257
    %p264 = scmp.eq.s32.totalorder %s19, 3
    %p265 = por %p263, %p264
    %p266 = scmp.ne.s32.totalorder %s257, %s258
    %p267 = scmp.eq.s32.totalorder %s19, 0
    %p268 = por %p266, %p267
    %p269 = scmp.ne.s32.totalorder %s257, %s258
    %p270 = scmp.eq.s32.totalorder %s20, 3
    %p271 = por %p269, %p270
    %p273 = scmp.ne.s32.totalorder %s258, %s272
    %p274 = scmp.eq.s32.totalorder %s20, 0
    %p275 = por %p273, %p274
    %s276 = ssub.s32 %s21, %s33
    %s277 = ssub.s32 %s22, %s29
    %s278 = sor.u32 %s276, %s277
    %p279 = scmp.eq.s32.totalorder %s278, 0
    %s281 = sadd.s32 %s280, 1
    %s282 = scalar_select %p279, %s280, %s281
    %p285 = pneg %p279
    %p286 = scmp.eq.s32.totalorder %s14, 3
    %p287 = por %p285, %p286
    %p288 = scmp.ne.s32.totalorder %s280, %s283
    %p289 = scmp.eq.s32.totalorder %s14, 0
    %p290 = por %p288, %p289
    %p291 = scmp.ne.s32.totalorder %s280, %s283
    %p292 = scmp.eq.s32.totalorder %s19, 3
    %p293 = por %p291, %p292
    %p294 = scmp.ne.s32.totalorder %s283, %s284
    %p295 = scmp.eq.s32.totalorder %s19, 0
    %p296 = por %p294, %p295
    %p297 = scmp.ne.s32.totalorder %s283, %s284
    %p298 = scmp.eq.s32.totalorder %s20, 3
    %p299 = por %p297, %p298
    %p301 = scmp.ne.s32.totalorder %s284, %s300
    %p302 = scmp.eq.s32.totalorder %s20, 0
    %p303 = por %p301, %p302
    %p304 = scmp.le.s32.totalorder 1, %s14
    %p305 = scmp.lt.s32.totalorder %s14, 5
    %p306 = pnand %p304, %p305
    %p307 = pneg %p306
    // Predicated region
    $region9: #{upscale_and_concat_layer.1} parent=5 // pred_check
      _
    $region10: #{upscale_and_concat_layer.1} parent=5 // pred_check_branch
      %309 = sbr.rel (%p306) target = $region12
    $region11: #{upscale_and_concat_layer.1} parent=5 // pred_region
      %s310 = ssub.s32 %s14, 1
      // Predicated region
      $region13: #{upscale_and_concat_layer.1} parent=11 // pred_check
        %p311 = pneg %p247
      $region14: #{upscale_and_concat_layer.1} parent=11 // pred_check_branch
        %313 = sbr.rel (%p311) target = $region16
      $region15: #{upscale_and_concat_layer.1} parent=11 // pred_region
        _
      $region16: #{upscale_and_concat_layer.1} parent=11 // pred_fallthru
        _
      // Predicated region
      $region17: #{upscale_and_concat_layer.1} parent=11 // pred_check
        %p314 = pneg %p268
      $region18: #{upscale_and_concat_layer.1} parent=11 // pred_check_branch
        %316 = sbr.rel (%p314) target = $region20
      $region19: #{upscale_and_concat_layer.1} parent=11 // pred_region
        _
      $region20: #{upscale_and_concat_layer.1} parent=11 // pred_fallthru
        _
    $region12: #{upscale_and_concat_layer.1} parent=5 // pred_fallthru
      _
    %p317 = scmp.lt.s32.totalorder %s14, 4
    // Predicated region
    $region21: #{upscale_and_concat_layer.1} parent=5 // pred_check
      %p318 = pneg %p317
    $region22: #{upscale_and_concat_layer.1} parent=5 // pred_check_branch
      %320 = sbr.rel (%p318) target = $region24
    $region23: #{upscale_and_concat_layer.1} parent=5 // pred_region
      // Predicated region
      $region25: #{upscale_and_concat_layer.1} parent=23 // pred_check
        %p321 = pneg %p56
      $region26: #{upscale_and_concat_layer.1} parent=23 // pred_check_branch
        %323 = sbr.rel (%p321) target = $region28
      $region27: #{upscale_and_concat_layer.1} parent=23 // pred_region
        %s324 = smul.u32 %s22, 8
        %s325 = ssub.s32 %s324, 1
        %p326 = scmp.gt.s32.totalorder %s325, 0
        %s327 = scalar_select %p326, %s325, 0
        %p328 = scmp.lt.s32.totalorder %s21, 1
        %s329 = scalar_select %p328, %s21, 1
        %p330 = scmp.lt.s32.totalorder %s327, 15
        %s331 = scalar_select %p330, %s327, 15
        %s332 = smul.addr %s331, 2
        %s333 = smul.addr %s329, 32
        %s334 = sadd.s32 %s332, %s333
        %s335 = smul.addr %s334, 4
        %s336 = scalar_lea.vmem %s0, %s335
        %s337 = smul.u32 %s22, 8
        %s338 = ssub.s32 %s337, 1
        %p339 = scmp.gt.s32.totalorder %s338, 0
        %s340 = scalar_select %p339, %s338, 0
      $region28: #{upscale_and_concat_layer.1} parent=23 // pred_fallthru
        _
      // Predicated region
      $region29: #{upscale_and_concat_layer.1} parent=23 // pred_check
        %p341 = pneg %p84
      $region30: #{upscale_and_concat_layer.1} parent=23 // pred_check_branch
        %343 = sbr.rel (%p341) target = $region32
      $region31: #{upscale_and_concat_layer.1} parent=23 // pred_region
        %s344 = smul.u32 8, %s22
        %p345 = scmp.lt.s32.totalorder %s21, 1
        %s346 = scalar_select %p345, %s21, 1
        %p347 = scmp.lt.s32.totalorder %s344, 15
        %s348 = scalar_select %p347, %s344, 15
        %s349 = smul.addr %s348, 2
        %s350 = smul.addr %s346, 32
        %s351 = sadd.s32 %s349, %s350
        %s352 = smul.addr %s351, 4
        %s353 = scalar_lea.vmem %s1, %s352
        %s354 = smul.u32 8, %s22
      $region32: #{upscale_and_concat_layer.1} parent=23 // pred_fallthru
        _
      // Predicated region
      $region33: #{upscale_and_concat_layer.1} parent=23 // pred_check
        %p355 = pneg %p120
      $region34: #{upscale_and_concat_layer.1} parent=23 // pred_check_branch
        %357 = sbr.rel (%p355) target = $region36
      $region35: #{upscale_and_concat_layer.1} parent=23 // pred_region
        %s358 = sadd.s32 %s22, 1
        %s359 = smul.u32 %s358, 8
        %p360 = scmp.lt.s32.totalorder %s359, 15
        %s361 = scalar_select %p360, %s359, 15
        %p362 = scmp.lt.s32.totalorder %s21, 1
        %s363 = scalar_select %p362, %s21, 1
        %p364 = scmp.lt.s32.totalorder %s361, 15
        %s365 = scalar_select %p364, %s361, 15
        %s366 = smul.addr %s365, 2
        %s367 = smul.addr %s363, 32
        %s368 = sadd.s32 %s366, %s367
        %s369 = smul.addr %s368, 4
        %s370 = scalar_lea.vmem %s2, %s369
        %s371 = sadd.s32 %s22, 1
        %s372 = smul.u32 %s371, 8
        %p373 = scmp.lt.s32.totalorder %s372, 15
        %s374 = scalar_select %p373, %s372, 15
      $region36: #{upscale_and_concat_layer.1} parent=23 // pred_fallthru
        _
      // Predicated region
      $region37: #{upscale_and_concat_layer.1} parent=23 // pred_check
        %p375 = pneg %p156
      $region38: #{upscale_and_concat_layer.1} parent=23 // pred_check_branch
        %377 = sbr.rel (%p375) target = $region40
      $region39: #{upscale_and_concat_layer.1} parent=23 // pred_region
        %s378 = smul.u32 %s22, 8
        %s379 = ssub.s32 %s378, 1
        %p380 = scmp.gt.s32.totalorder %s379, 0
        %s381 = scalar_select %p380, %s379, 0
        %p382 = scmp.lt.s32.totalorder %s21, 1
        %s383 = scalar_select %p382, %s21, 1
        %p384 = scmp.lt.s32.totalorder %s381, 15
        %s385 = scalar_select %p384, %s381, 15
        %s386 = smul.addr %s385, 2
        %s387 = smul.addr %s383, 32
        %s388 = sadd.s32 %s386, %s387
        %s389 = smul.addr %s388, 4
        %s390 = scalar_lea.vmem %s3, %s389
        %s391 = smul.u32 %s22, 8
        %s392 = ssub.s32 %s391, 1
        %p393 = scmp.gt.s32.totalorder %s392, 0
        %s394 = scalar_select %p393, %s392, 0
      $region40: #{upscale_and_concat_layer.1} parent=23 // pred_fallthru
        _
      // Predicated region
      $region41: #{upscale_and_concat_layer.1} parent=23 // pred_check
        %p395 = pneg %p184
      $region42: #{upscale_and_concat_layer.1} parent=23 // pred_check_branch
        %397 = sbr.rel (%p395) target = $region44
      $region43: #{upscale_and_concat_layer.1} parent=23 // pred_region
        %s398 = smul.u32 8, %s22
        %p399 = scmp.lt.s32.totalorder %s21, 1
        %s400 = scalar_select %p399, %s21, 1
        %p401 = scmp.lt.s32.totalorder %s398, 15
        %s402 = scalar_select %p401, %s398, 15
        %s403 = smul.addr %s402, 2
        %s404 = smul.addr %s400, 32
        %s405 = sadd.s32 %s403, %s404
        %s406 = smul.addr %s405, 4
        %s407 = scalar_lea.vmem %s4, %s406
        %s408 = smul.u32 8, %s22
      $region44: #{upscale_and_concat_layer.1} parent=23 // pred_fallthru
        _
      // Predicated region
      $region45: #{upscale_and_concat_layer.1} parent=23 // pred_check
        %p409 = pneg %p220
      $region46: #{upscale_and_concat_layer.1} parent=23 // pred_check_branch
        %411 = sbr.rel (%p409) target = $region48
      $region47: #{upscale_and_concat_layer.1} parent=23 // pred_region
        %s412 = sadd.s32 %s22, 1
        %s413 = smul.u32 %s412, 8
        %p414 = scmp.lt.s32.totalorder %s413, 15
        %s415 = scalar_select %p414, %s413, 15
        %p416 = scmp.lt.s32.totalorder %s21, 1
        %s417 = scalar_select %p416, %s21, 1
        %p418 = scmp.lt.s32.totalorder %s415, 15
        %s419 = scalar_select %p418, %s415, 15
        %s420 = smul.addr %s419, 2
        %s421 = smul.addr %s417, 32
        %s422 = sadd.s32 %s420, %s421
        %s423 = smul.addr %s422, 4
        %s424 = scalar_lea.vmem %s5, %s423
        %s425 = sadd.s32 %s22, 1
        %s426 = smul.u32 %s425, 8
        %p427 = scmp.lt.s32.totalorder %s426, 15
        %s428 = scalar_select %p427, %s426, 15
      $region48: #{upscale_and_concat_layer.1} parent=23 // pred_fallthru
        _
    $region24: #{upscale_and_concat_layer.1} parent=5 // pred_fallthru
      _
    %p429 = scmp.le.s32.totalorder 1, %s14
    %p430 = scmp.lt.s32.totalorder %s14, 5
    %p431 = pnand %p429, %p430
    %p432 = pneg %p431
    // Predicated region
    $region49: #{upscale_and_concat_layer.1} parent=5 // pred_check
      _
    $region50: #{upscale_and_concat_layer.1} parent=5 // pred_check_branch
      %434 = sbr.rel (%p431) target = $region52
    $region51: #{upscale_and_concat_layer.1} parent=5 // pred_region
      %s435 = ssub.s32 %s14, 1
      %s436 = smul.u32 %s24, 8
      %s437 = ssub.s32 %s436, 1
      %p438 = scmp.gt.s32.totalorder %s437, 0
      %s439 = scalar_select %p438, %s437, 0
      %p440 = scmp.lt.s32.totalorder %s23, 1
      %s441 = scalar_select %p440, %s23, 1
      %p442 = scmp.lt.s32.totalorder %s439, 15
      %s443 = scalar_select %p442, %s439, 15
      %s444 = smul.addr %s443, 2
      %s445 = smul.addr %s441, 32
      %s446 = sadd.s32 %s444, %s445
      %s447 = smul.addr %s446, 4
      %s448 = scalar_lea.vmem %s0, %s447
      %p449 = pneg %p62
      %p450 = pneg %p59
      %s451 = smul.u32 8, %s24
      %p452 = scmp.lt.s32.totalorder %s23, 1
      %s453 = scalar_select %p452, %s23, 1
      %p454 = scmp.lt.s32.totalorder %s451, 15
      %s455 = scalar_select %p454, %s451, 15
      %s456 = smul.addr %s455, 2
      %s457 = smul.addr %s453, 32
      %s458 = sadd.s32 %s456, %s457
      %s459 = smul.addr %s458, 4
      %s460 = scalar_lea.vmem %s1, %s459
      %p461 = pneg %p90
      %p462 = pneg %p87
      %s463 = sadd.s32 %s24, 1
      %s464 = smul.u32 %s463, 8
      %p465 = scmp.lt.s32.totalorder %s464, 15
      %s466 = scalar_select %p465, %s464, 15
      %p467 = scmp.lt.s32.totalorder %s23, 1
      %s468 = scalar_select %p467, %s23, 1
      %p469 = scmp.lt.s32.totalorder %s466, 15
      %s470 = scalar_select %p469, %s466, 15
      %s471 = smul.addr %s470, 2
      %s472 = smul.addr %s468, 32
      %s473 = sadd.s32 %s471, %s472
      %s474 = smul.addr %s473, 4
      %s475 = scalar_lea.vmem %s2, %s474
      %p476 = pneg %p126
      %p477 = pneg %p123
      %s478 = smul.u32 %s24, 8
      %s479 = ssub.s32 %s478, 1
      %p480 = scmp.gt.s32.totalorder %s479, 0
      %s481 = scalar_select %p480, %s479, 0
      %p482 = scmp.lt.s32.totalorder %s23, 1
      %s483 = scalar_select %p482, %s23, 1
      %p484 = scmp.lt.s32.totalorder %s481, 15
      %s485 = scalar_select %p484, %s481, 15
      %s486 = smul.addr %s485, 2
      %s487 = smul.addr %s483, 32
      %s488 = sadd.s32 %s486, %s487
      %s489 = smul.addr %s488, 4
      %s490 = scalar_lea.vmem %s3, %s489
      %p491 = pneg %p162
      %p492 = pneg %p159
      %s493 = smul.u32 8, %s24
      %p494 = scmp.lt.s32.totalorder %s23, 1
      %s495 = scalar_select %p494, %s23, 1
      %p496 = scmp.lt.s32.totalorder %s493, 15
      %s497 = scalar_select %p496, %s493, 15
      %s498 = smul.addr %s497, 2
      %s499 = smul.addr %s495, 32
      %s500 = sadd.s32 %s498, %s499
      %s501 = smul.addr %s500, 4
      %s502 = scalar_lea.vmem %s4, %s501
      %p503 = pneg %p190
      %p504 = pneg %p187
      %s505 = sadd.s32 %s24, 1
      %s506 = smul.u32 %s505, 8
      %p507 = scmp.lt.s32.totalorder %s506, 15
      %s508 = scalar_select %p507, %s506, 15
      %p509 = scmp.lt.s32.totalorder %s23, 1
      %s510 = scalar_select %p509, %s23, 1
      %p511 = scmp.lt.s32.totalorder %s508, 15
      %s512 = scalar_select %p511, %s508, 15
      %s513 = smul.addr %s512, 2
      %s514 = smul.addr %s510, 32
      %s515 = sadd.s32 %s513, %s514
      %s516 = smul.addr %s515, 4
      %s517 = scalar_lea.vmem %s5, %s516
      %p518 = pneg %p226
      %p519 = pneg %p223
      %p520 = pneg %p247
      %p521 = pneg %p244
      %p522 = pneg %p268
      %p523 = pneg %p265
      %p524 = pneg %p296
      %p525 = pneg %p293
      %s526 = smul.u32 8, %s24
      %p527 = scmp.lt.s32.totalorder %s23, 1
      %s528 = scalar_select %p527, %s23, 1
      %p529 = scmp.lt.s32.totalorder %s526, 15
      %s530 = scalar_select %p529, %s526, 15
      %s531 = smul.addr %s530, 2
      %s532 = smul.addr %s528, 32
      %s533 = sadd.s32 %s531, %s532
      %s534 = smul.addr %s533, 4
      %s535 = scalar_lea.vmem %s8, %s534
      %s536 = smul.u32 %s24, 8
      %s537 = ssub.s32 %s536, 1
      %p538 = scmp.gt.s32.totalorder %s537, 0
      %s539 = scalar_select %p538, %s537, 0
      %p540 = scmp.lt.s32.totalorder %s23, 1
      %s541 = scalar_select %p540, %s23, 1
      %p542 = scmp.lt.s32.totalorder %s539, 15
      %s543 = scalar_select %p542, %s539, 15
      %s544 = smul.addr %s543, 2
      %s545 = smul.addr %s541, 32
      %s546 = sadd.s32 %s544, %s545
      %s547 = smul.addr %s546, 4
      %s548 = scalar_lea.vmem %s0, %s547
      %s549 = smul.u32 %s24, 8
      %s550 = ssub.s32 %s549, 1
      %p551 = scmp.gt.s32.totalorder %s550, 0
      %s552 = scalar_select %p551, %s550, 0
      %s553 = smul.u32 8, %s24
      %p554 = scmp.lt.s32.totalorder %s23, 1
      %s555 = scalar_select %p554, %s23, 1
      %p556 = scmp.lt.s32.totalorder %s553, 15
      %s557 = scalar_select %p556, %s553, 15
      %s558 = smul.addr %s557, 2
      %s559 = smul.addr %s555, 32
      %s560 = sadd.s32 %s558, %s559
      %s561 = smul.addr %s560, 4
      %s562 = scalar_lea.vmem %s1, %s561
      %s563 = smul.u32 8, %s24
      %s564 = sadd.s32 %s24, 1
      %s565 = smul.u32 %s564, 8
      %p566 = scmp.lt.s32.totalorder %s565, 15
      %s567 = scalar_select %p566, %s565, 15
      %p568 = scmp.lt.s32.totalorder %s23, 1
      %s569 = scalar_select %p568, %s23, 1
      %p570 = scmp.lt.s32.totalorder %s567, 15
      %s571 = scalar_select %p570, %s567, 15
      %s572 = smul.addr %s571, 2
      %s573 = smul.addr %s569, 32
      %s574 = sadd.s32 %s572, %s573
      %s575 = smul.addr %s574, 4
      %s576 = scalar_lea.vmem %s2, %s575
      %s577 = sadd.s32 %s24, 1
      %s578 = smul.u32 %s577, 8
      %p579 = scmp.lt.s32.totalorder %s578, 15
      %s580 = scalar_select %p579, %s578, 15
      %s581 = smul.u32 %s24, 8
      %s582 = ssub.s32 %s581, 1
      %p583 = scmp.gt.s32.totalorder %s582, 0
      %s584 = scalar_select %p583, %s582, 0
      %p585 = scmp.lt.s32.totalorder %s23, 1
      %s586 = scalar_select %p585, %s23, 1
      %p587 = scmp.lt.s32.totalorder %s584, 15
      %s588 = scalar_select %p587, %s584, 15
      %s589 = smul.addr %s588, 2
      %s590 = smul.addr %s586, 32
      %s591 = sadd.s32 %s589, %s590
      %s592 = smul.addr %s591, 4
      %s593 = scalar_lea.vmem %s3, %s592
      %s594 = smul.u32 %s24, 8
      %s595 = ssub.s32 %s594, 1
      %p596 = scmp.gt.s32.totalorder %s595, 0
      %s597 = scalar_select %p596, %s595, 0
      %s598 = smul.u32 8, %s24
      %p599 = scmp.lt.s32.totalorder %s23, 1
      %s600 = scalar_select %p599, %s23, 1
      %p601 = scmp.lt.s32.totalorder %s598, 15
      %s602 = scalar_select %p601, %s598, 15
      %s603 = smul.addr %s602, 2
      %s604 = smul.addr %s600, 32
      %s605 = sadd.s32 %s603, %s604
      %s606 = smul.addr %s605, 4
      %s607 = scalar_lea.vmem %s4, %s606
      %s608 = smul.u32 8, %s24
      %s609 = sadd.s32 %s24, 1
      %s610 = smul.u32 %s609, 8
      %p611 = scmp.lt.s32.totalorder %s610, 15
      %s612 = scalar_select %p611, %s610, 15
      %p613 = scmp.lt.s32.totalorder %s23, 1
      %s614 = scalar_select %p613, %s23, 1
      %p615 = scmp.lt.s32.totalorder %s612, 15
      %s616 = scalar_select %p615, %s612, 15
      %s617 = smul.addr %s616, 2
      %s618 = smul.addr %s614, 32
      %s619 = sadd.s32 %s617, %s618
      %s620 = smul.addr %s619, 4
      %s621 = scalar_lea.vmem %s5, %s620
      %s622 = sadd.s32 %s24, 1
      %s623 = smul.u32 %s622, 8
      %p624 = scmp.lt.s32.totalorder %s623, 15
      %s625 = scalar_select %p624, %s623, 15
      %s626 = smul.u32 8, %s24
      %p627 = scmp.lt.s32.totalorder %s23, 1
      %s628 = scalar_select %p627, %s23, 1
      %p629 = scmp.lt.s32.totalorder %s626, 15
      %s630 = scalar_select %p629, %s626, 15
      %s631 = smul.addr %s630, 2
      %s632 = smul.addr %s628, 32
      %s633 = sadd.s32 %s631, %s632
      %s634 = smul.addr %s633, 4
      %s635 = scalar_lea.vmem %s8, %s634
      %s636 = smul.u32 8, %s24
      %638 = vst [vmem:[#allocation2] sm:$0xf] 0
      %639 = vst [vmem:[#allocation2 + $0x4] sm:$0xf] 0
      %640 = vst [vmem:[#allocation2 + $0x8] sm:$0x1] 0
      %641 = vst [vmem:[#allocation2 + $0xc] sm:$0xf] 0
      %642 = vst [vmem:[#allocation2 + $0x10] sm:$0xf] 0
      %643 = vst [vmem:[#allocation2 + $0x14] sm:$0x1] 0
      %644 = vst [vmem:[#allocation2 + $0x18] sm:$0xf] 0
      %645 = vst [vmem:[#allocation2 + $0x1c] sm:$0xf] 0
      %646 = vst [vmem:[#allocation2 + $0x20] sm:$0x1] 0
      %647 = vst [vmem:[#allocation2 + $0x24] sm:$0xf] 0
      %648 = vst [vmem:[#allocation2 + $0x28] sm:$0xf] 0
      %649 = vst [vmem:[#allocation2 + $0x2c] sm:$0x1] 0
      %650 = vst [vmem:[#allocation2 + $0x30] sm:$0xf] 0
      %651 = vst [vmem:[#allocation2 + $0x34] sm:$0xf] 0
      %652 = vst [vmem:[#allocation2 + $0x38] sm:$0x1] 0
      %653 = vst [vmem:[#allocation2 + $0x3c] sm:$0xf] 0
      %654 = vst [vmem:[#allocation2 + $0x40] sm:$0xf] 0
      %655 = vst [vmem:[#allocation2 + $0x44] sm:$0x1] 0
      %656 = vst [vmem:[#allocation2 + $0x48] sm:$0xf] 0
      %657 = vst [vmem:[#allocation2 + $0x4c] sm:$0xf] 0
      %658 = vst [vmem:[#allocation2 + $0x50] sm:$0x1] 0
      %659 = vst [vmem:[#allocation2 + $0x54] sm:$0xf] 0
      %660 = vst [vmem:[#allocation2 + $0x58] sm:$0xf] 0
      %661 = vst [vmem:[#allocation2 + $0x5c] sm:$0x1] 0
      %662 = vst [vmem:[#allocation2 + $0x60] sm:$0xf] 0
      %663 = vst [vmem:[#allocation2 + $0x64] sm:$0xf] 0
      %664 = vst [vmem:[#allocation2 + $0x68] sm:$0x1] 0
      %665 = vst [vmem:[#allocation2 + $0x6c] sm:$0xf] 0
      %666 = vst [vmem:[#allocation2 + $0x70] sm:$0xf] 0
      %667 = vst [vmem:[#allocation2 + $0x74] sm:$0x1] 0
      %v668 = vld [vmem:[%s562] sm:$0xf]
      %v669 = vld [vmem:[%s562 + $0x4] sm:$0xf]
      %v670 = vld [vmem:[%s562 + $0x8] sm:$0xf]
      %v671 = vld [vmem:[%s562 + $0xc] sm:$0xf]
      %v672 = vld [vmem:[%s562 + $0x10] sm:$0xf]
      %v673 = vld [vmem:[%s562 + $0x14] sm:$0xf]
      %v674 = vld [vmem:[%s562 + $0x18] sm:$0xf]
      %v675 = vld [vmem:[%s562 + $0x1c] sm:$0xf]
      %v676 = vld [vmem:[%s562 + $0x20] sm:$0xf]
      %v677 = vld [vmem:[%s562 + $0x24] sm:$0xf]
      %v678 = vld [vmem:[%s562 + $0x28] sm:$0xf]
      %v679 = vld [vmem:[%s562 + $0x2c] sm:$0xf]
      %v680 = vld [vmem:[%s562 + $0x30] sm:$0xf]
      %v681 = vld [vmem:[%s562 + $0x34] sm:$0xf]
      %v682 = vld [vmem:[%s562 + $0x38] sm:$0xf]
      %v683 = vld [vmem:[%s562 + $0x3c] sm:$0xf]
      %vm684 = vsmask.f32 256
      %vm685 = vsmask.f32 4368
      %vm686 = vmor %vm684, %vm685
      %v688 = vshrl.u32 %v668, 16
      %v690 = vrot.slane %v688, 7
      %v691 = vshll.u32 %v668, 16
      %v693 = vor.u32 %v690, %v691
      %v694 = vrot.slane %v690, 4
      %v696 = vshrl.u32 %v669, 16
      %v698 = vrot.slane %v696, 7
      %v699 = vshll.u32 %v669, 16
      %v701 = vor.u32 %v698, %v699
      %v702 = vsel %vm686, %v694, %v701
      %v703 = vrot.slane %v698, 4
      %v705 = vshrl.u32 %v670, 16
      %v707 = vrot.slane %v705, 7
      %v708 = vshll.u32 %v670, 16
      %v710 = vor.u32 %v707, %v708
      %v711 = vrot.slane %v707, 4
      %v713 = vshrl.u32 %v671, 16
      %v715 = vrot.slane %v713, 7
      %v716 = vshll.u32 %v671, 16
      %v718 = vor.u32 %v715, %v716
      %v719 = vsel %vm686, %v711, %v718
      %v720 = vrot.slane %v715, 4
      %v722 = vshrl.u32 %v672, 16
      %v724 = vrot.slane %v722, 7
      %v725 = vshll.u32 %v672, 16
      %v727 = vor.u32 %v724, %v725
      %v728 = vrot.slane %v724, 4
      %v730 = vshrl.u32 %v673, 16
      %v732 = vrot.slane %v730, 7
      %v733 = vshll.u32 %v673, 16
      %v735 = vor.u32 %v732, %v733
      %v736 = vsel %vm686, %v728, %v735
      %v737 = vrot.slane %v732, 4
      %v739 = vshrl.u32 %v674, 16
      %v741 = vrot.slane %v739, 7
      %v742 = vshll.u32 %v674, 16
      %v744 = vor.u32 %v741, %v742
      %v745 = vrot.slane %v741, 4
      %v747 = vshrl.u32 %v675, 16
      %v749 = vrot.slane %v747, 7
      %v750 = vshll.u32 %v675, 16
      %v752 = vor.u32 %v749, %v750
      %v753 = vsel %vm686, %v745, %v752
      %v754 = vrot.slane %v749, 4
      %v756 = vshrl.u32 %v676, 16
      %v758 = vrot.slane %v756, 7
      %v759 = vshll.u32 %v676, 16
      %v761 = vor.u32 %v758, %v759
      %v762 = vrot.slane %v758, 4
      %v764 = vshrl.u32 %v677, 16
      %v766 = vrot.slane %v764, 7
      %v767 = vshll.u32 %v677, 16
      %v769 = vor.u32 %v766, %v767
      %v770 = vsel %vm686, %v762, %v769
      %v771 = vrot.slane %v766, 4
      %v773 = vshrl.u32 %v678, 16
      %v775 = vrot.slane %v773, 7
      %v776 = vshll.u32 %v678, 16
      %v778 = vor.u32 %v775, %v776
      %v779 = vrot.slane %v775, 4
      %v781 = vshrl.u32 %v679, 16
      %v783 = vrot.slane %v781, 7
      %v784 = vshll.u32 %v679, 16
      %v786 = vor.u32 %v783, %v784
      %v787 = vsel %vm686, %v779, %v786
      %v788 = vrot.slane %v783, 4
      %v790 = vshrl.u32 %v680, 16
      %v792 = vrot.slane %v790, 7
      %v793 = vshll.u32 %v680, 16
      %v795 = vor.u32 %v792, %v793
      %v796 = vrot.slane %v792, 4
      %v798 = vshrl.u32 %v681, 16
      %v800 = vrot.slane %v798, 7
      %v801 = vshll.u32 %v681, 16
      %v803 = vor.u32 %v800, %v801
      %v804 = vsel %vm686, %v796, %v803
      %v805 = vrot.slane %v800, 4
      %v807 = vshrl.u32 %v682, 16
      %v809 = vrot.slane %v807, 7
      %v810 = vshll.u32 %v682, 16
      %v812 = vor.u32 %v809, %v810
      %v813 = vrot.slane %v809, 4
      %v815 = vshrl.u32 %v683, 16
      %v817 = vrot.slane %v815, 7
      %v818 = vshll.u32 %v683, 16
      %v820 = vor.u32 %v817, %v818
      %v821 = vsel %vm686, %v813, %v820
      %v822 = vrot.slane %v817, 4
      %s847 = scalar_lea.vmem [#allocation2], 12
      %vm848 = vcmask 519168
      %vm849 = vsmask.f32 7938
      %vm850 = vmand %vm848, %vm849
      %v851 = vld [vmem:[%s847] sm:$0xf]
      %v852 = vsel %vm850, %v693, %v851
      %853 = vst [vmem:[%s847] sm:$0xf] %v852
      %vm854 = vcmask 519168
      %855 = vst.msk [vmem:[%s847 + $0x4] sm:$0xf] %vm854, %v702
      %vm856 = vcmask 516096
      %vm857 = vmand %vm856, %vm684
      %v858 = vld [vmem:[%s847 + $0x8] sm:$0x1]
      %v859 = vsel %vm857, %v703, %v858
      %860 = vst [vmem:[%s847 + $0x8] sm:$0x1] %v859
      %v861 = vld [vmem:[%s847 + $0xc] sm:$0xf]
      %v862 = vsel %vm850, %v710, %v861
      %863 = vst [vmem:[%s847 + $0xc] sm:$0xf] %v862
      %864 = vst.msk [vmem:[%s847 + $0x10] sm:$0xf] %vm854, %v719
      %v865 = vld [vmem:[%s847 + $0x14] sm:$0x1]
      %v866 = vsel %vm857, %v720, %v865
      %867 = vst [vmem:[%s847 + $0x14] sm:$0x1] %v866
      %v868 = vld [vmem:[%s847 + $0x18] sm:$0xf]
      %v869 = vsel %vm850, %v727, %v868
      %870 = vst [vmem:[%s847 + $0x18] sm:$0xf] %v869
      %871 = vst.msk [vmem:[%s847 + $0x1c] sm:$0xf] %vm854, %v736
      %v872 = vld [vmem:[%s847 + $0x20] sm:$0x1]
      %v873 = vsel %vm857, %v737, %v872
      %874 = vst [vmem:[%s847 + $0x20] sm:$0x1] %v873
      %v875 = vld [vmem:[%s847 + $0x24] sm:$0xf]
      %v876 = vsel %vm850, %v744, %v875
      %877 = vst [vmem:[%s847 + $0x24] sm:$0xf] %v876
      %878 = vst.msk [vmem:[%s847 + $0x28] sm:$0xf] %vm854, %v753
      %v879 = vld [vmem:[%s847 + $0x2c] sm:$0x1]
      %v880 = vsel %vm857, %v754, %v879
      %881 = vst [vmem:[%s847 + $0x2c] sm:$0x1] %v880
      %v882 = vld [vmem:[%s847 + $0x30] sm:$0xf]
      %v883 = vsel %vm850, %v761, %v882
      %884 = vst [vmem:[%s847 + $0x30] sm:$0xf] %v883
      %885 = vst.msk [vmem:[%s847 + $0x34] sm:$0xf] %vm854, %v770
      %v886 = vld [vmem:[%s847 + $0x38] sm:$0x1]
      %v887 = vsel %vm857, %v771, %v886
      %888 = vst [vmem:[%s847 + $0x38] sm:$0x1] %v887
      %v889 = vld [vmem:[%s847 + $0x3c] sm:$0xf]
      %v890 = vsel %vm850, %v778, %v889
      %891 = vst [vmem:[%s847 + $0x3c] sm:$0xf] %v890
      %892 = vst.msk [vmem:[%s847 + $0x40] sm:$0xf] %vm854, %v787
      %v893 = vld [vmem:[%s847 + $0x44] sm:$0x1]
      %v894 = vsel %vm857, %v788, %v893
      %895 = vst [vmem:[%s847 + $0x44] sm:$0x1] %v894
      %v896 = vld [vmem:[%s847 + $0x48] sm:$0xf]
      %v897 = vsel %vm850, %v795, %v896
      %898 = vst [vmem:[%s847 + $0x48] sm:$0xf] %v897
      %899 = vst.msk [vmem:[%s847 + $0x4c] sm:$0xf] %vm854, %v804
      %v900 = vld [vmem:[%s847 + $0x50] sm:$0x1]
      %v901 = vsel %vm857, %v805, %v900
      %902 = vst [vmem:[%s847 + $0x50] sm:$0x1] %v901
      %v903 = vld [vmem:[%s847 + $0x54] sm:$0xf]
      %v904 = vsel %vm850, %v812, %v903
      %905 = vst [vmem:[%s847 + $0x54] sm:$0xf] %v904
      %906 = vst.msk [vmem:[%s847 + $0x58] sm:$0xf] %vm854, %v821
      %v907 = vld [vmem:[%s847 + $0x5c] sm:$0x1]
      %v908 = vsel %vm857, %v822, %v907
      %909 = vst [vmem:[%s847 + $0x5c] sm:$0x1] %v908
      %v910 = vld [vmem:[%s607] sm:$0xf]
      %v911 = vld [vmem:[%s607 + $0x4] sm:$0xf]
      %v912 = vld [vmem:[%s607 + $0x8] sm:$0xf]
      %v913 = vld [vmem:[%s607 + $0xc] sm:$0xf]
      %v914 = vld [vmem:[%s607 + $0x10] sm:$0xf]
      %v915 = vld [vmem:[%s607 + $0x14] sm:$0xf]
      %v916 = vld [vmem:[%s607 + $0x18] sm:$0xf]
      %v917 = vld [vmem:[%s607 + $0x1c] sm:$0xf]
      %v918 = vld [vmem:[%s607 + $0x20] sm:$0xf]
      %v919 = vld [vmem:[%s607 + $0x24] sm:$0xf]
      %v920 = vld [vmem:[%s607 + $0x28] sm:$0xf]
      %v921 = vld [vmem:[%s607 + $0x2c] sm:$0xf]
      %v922 = vld [vmem:[%s607 + $0x30] sm:$0xf]
      %v923 = vld [vmem:[%s607 + $0x34] sm:$0xf]
      %v924 = vld [vmem:[%s607 + $0x38] sm:$0xf]
      %v925 = vld [vmem:[%s607 + $0x3c] sm:$0xf]
      %v927 = vshrl.u32 %v910, 16
      %v929 = vrot.slane %v927, 7
      %v930 = vshll.u32 %v910, 16
      %v932 = vor.u32 %v929, %v930
      %v933 = vrot.slane %v929, 4
      %v935 = vshrl.u32 %v911, 16
      %v937 = vrot.slane %v935, 7
      %v938 = vshll.u32 %v911, 16
      %v940 = vor.u32 %v937, %v938
      %v941 = vsel %vm686, %v933, %v940
      %v942 = vrot.slane %v937, 4
      %v944 = vshrl.u32 %v912, 16
      %v946 = vrot.slane %v944, 7
      %v947 = vshll.u32 %v912, 16
      %v949 = vor.u32 %v946, %v947
      %v950 = vrot.slane %v946, 4
      %v952 = vshrl.u32 %v913, 16
      %v954 = vrot.slane %v952, 7
      %v955 = vshll.u32 %v913, 16
      %v957 = vor.u32 %v954, %v955
      %v958 = vsel %vm686, %v950, %v957
      %v959 = vrot.slane %v954, 4
      %v961 = vshrl.u32 %v914, 16
      %v963 = vrot.slane %v961, 7
      %v964 = vshll.u32 %v914, 16
      %v966 = vor.u32 %v963, %v964
      %v967 = vrot.slane %v963, 4
      %v969 = vshrl.u32 %v915, 16
      %v971 = vrot.slane %v969, 7
      %v972 = vshll.u32 %v915, 16
      %v974 = vor.u32 %v971, %v972
      %v975 = vsel %vm686, %v967, %v974
      %v976 = vrot.slane %v971, 4
      %v978 = vshrl.u32 %v916, 16
      %v980 = vrot.slane %v978, 7
      %v981 = vshll.u32 %v916, 16
      %v983 = vor.u32 %v980, %v981
      %v984 = vrot.slane %v980, 4
      %v986 = vshrl.u32 %v917, 16
      %v988 = vrot.slane %v986, 7
      %v989 = vshll.u32 %v917, 16
      %v991 = vor.u32 %v988, %v989
      %v992 = vsel %vm686, %v984, %v991
      %v993 = vrot.slane %v988, 4
      %v995 = vshrl.u32 %v918, 16
      %v997 = vrot.slane %v995, 7
      %v998 = vshll.u32 %v918, 16
      %v1000 = vor.u32 %v997, %v998
      %v1001 = vrot.slane %v997, 4
      %v1003 = vshrl.u32 %v919, 16
      %v1005 = vrot.slane %v1003, 7
      %v1006 = vshll.u32 %v919, 16
      %v1008 = vor.u32 %v1005, %v1006
      %v1009 = vsel %vm686, %v1001, %v1008
      %v1010 = vrot.slane %v1005, 4
      %v1012 = vshrl.u32 %v920, 16
      %v1014 = vrot.slane %v1012, 7
      %v1015 = vshll.u32 %v920, 16
      %v1017 = vor.u32 %v1014, %v1015
      %v1018 = vrot.slane %v1014, 4
      %v1020 = vshrl.u32 %v921, 16
      %v1022 = vrot.slane %v1020, 7
      %v1023 = vshll.u32 %v921, 16
      %v1025 = vor.u32 %v1022, %v1023
      %v1026 = vsel %vm686, %v1018, %v1025
      %v1027 = vrot.slane %v1022, 4
      %v1029 = vshrl.u32 %v922, 16
      %v1031 = vrot.slane %v1029, 7
      %v1032 = vshll.u32 %v922, 16
      %v1034 = vor.u32 %v1031, %v1032
      %v1035 = vrot.slane %v1031, 4
      %v1037 = vshrl.u32 %v923, 16
      %v1039 = vrot.slane %v1037, 7
      %v1040 = vshll.u32 %v923, 16
      %v1042 = vor.u32 %v1039, %v1040
      %v1043 = vsel %vm686, %v1035, %v1042
      %v1044 = vrot.slane %v1039, 4
      %v1046 = vshrl.u32 %v924, 16
      %v1048 = vrot.slane %v1046, 7
      %v1049 = vshll.u32 %v924, 16
      %v1051 = vor.u32 %v1048, %v1049
      %v1052 = vrot.slane %v1048, 4
      %v1054 = vshrl.u32 %v925, 16
      %v1056 = vrot.slane %v1054, 7
      %v1057 = vshll.u32 %v925, 16
      %v1059 = vor.u32 %v1056, %v1057
      %v1060 = vsel %vm686, %v1052, %v1059
      %v1061 = vrot.slane %v1056, 4
      %1062 = vrot.lane.b32.xlu0 %v932, 64
      %v1063 = vpop.permute.xlu0 %1062
      %1064 = vrot.lane.b32.xlu0 %v941, 64
      %v1065 = vpop.permute.xlu0 %1064
      %1066 = vrot.lane.b32.xlu0 %v942, 64
      %v1067 = vpop.permute.xlu0 %1066
      %1068 = vrot.lane.b32.xlu0 %v949, 64
      %v1069 = vpop.permute.xlu0 %1068
      %1070 = vrot.lane.b32.xlu0 %v958, 64
      %v1071 = vpop.permute.xlu0 %1070
      %1072 = vrot.lane.b32.xlu0 %v959, 64
      %v1073 = vpop.permute.xlu0 %1072
      %1074 = vrot.lane.b32.xlu0 %v966, 64
      %v1075 = vpop.permute.xlu0 %1074
      %1076 = vrot.lane.b32.xlu0 %v975, 64
      %v1077 = vpop.permute.xlu0 %1076
      %1078 = vrot.lane.b32.xlu0 %v976, 64
      %v1079 = vpop.permute.xlu0 %1078
      %1080 = vrot.lane.b32.xlu0 %v983, 64
      %v1081 = vpop.permute.xlu0 %1080
      %1082 = vrot.lane.b32.xlu0 %v992, 64
      %v1083 = vpop.permute.xlu0 %1082
      %1084 = vrot.lane.b32.xlu0 %v993, 64
      %v1085 = vpop.permute.xlu0 %1084
      %1086 = vrot.lane.b32.xlu0 %v1000, 64
      %v1087 = vpop.permute.xlu0 %1086
      %1088 = vrot.lane.b32.xlu0 %v1009, 64
      %v1089 = vpop.permute.xlu0 %1088
      %1090 = vrot.lane.b32.xlu0 %v1010, 64
      %v1091 = vpop.permute.xlu0 %1090
      %1092 = vrot.lane.b32.xlu0 %v1017, 64
      %v1093 = vpop.permute.xlu0 %1092
      %1094 = vrot.lane.b32.xlu0 %v1026, 64
      %v1095 = vpop.permute.xlu0 %1094
      %1096 = vrot.lane.b32.xlu0 %v1027, 64
      %v1097 = vpop.permute.xlu0 %1096
      %1098 = vrot.lane.b32.xlu0 %v1034, 64
      %v1099 = vpop.permute.xlu0 %1098
      %1100 = vrot.lane.b32.xlu0 %v1043, 64
      %v1101 = vpop.permute.xlu0 %1100
      %1102 = vrot.lane.b32.xlu0 %v1044, 64
      %v1103 = vpop.permute.xlu0 %1102
      %1104 = vrot.lane.b32.xlu0 %v1051, 64
      %v1105 = vpop.permute.xlu0 %1104
      %1106 = vrot.lane.b32.xlu0 %v1060, 64
      %v1107 = vpop.permute.xlu0 %1106
      %1108 = vrot.lane.b32.xlu0 %v1061, 64
      %v1109 = vpop.permute.xlu0 %1108
      %vm1134 = vcmask 1043968
      %vm1135 = vmand %vm1134, %vm849
      %v1136 = vld [vmem:[%s847] sm:$0xf]
      %v1137 = vsel %vm1135, %v1063, %v1136
      %1138 = vst [vmem:[%s847] sm:$0xf] %v1137
      %vm1139 = vcmask 1043968
      %1140 = vst.msk [vmem:[%s847 + $0x4] sm:$0xf] %vm1139, %v1065
      %vm1141 = vcmask 1040896
      %vm1142 = vmand %vm1141, %vm684
      %v1143 = vld [vmem:[%s847 + $0x8] sm:$0x1]
      %v1144 = vsel %vm1142, %v1067, %v1143
      %1145 = vst [vmem:[%s847 + $0x8] sm:$0x1] %v1144
      %v1146 = vld [vmem:[%s847 + $0xc] sm:$0xf]
      %v1147 = vsel %vm1135, %v1069, %v1146
      %1148 = vst [vmem:[%s847 + $0xc] sm:$0xf] %v1147
      %1149 = vst.msk [vmem:[%s847 + $0x10] sm:$0xf] %vm1139, %v1071
      %v1150 = vld [vmem:[%s847 + $0x14] sm:$0x1]
      %v1151 = vsel %vm1142, %v1073, %v1150
      %1152 = vst [vmem:[%s847 + $0x14] sm:$0x1] %v1151
      %v1153 = vld [vmem:[%s847 + $0x18] sm:$0xf]
      %v1154 = vsel %vm1135, %v1075, %v1153
      %1155 = vst [vmem:[%s847 + $0x18] sm:$0xf] %v1154
      %1156 = vst.msk [vmem:[%s847 + $0x1c] sm:$0xf] %vm1139, %v1077
      %v1157 = vld [vmem:[%s847 + $0x20] sm:$0x1]
      %v1158 = vsel %vm1142, %v1079, %v1157
      %1159 = vst [vmem:[%s847 + $0x20] sm:$0x1] %v1158
      %v1160 = vld [vmem:[%s847 + $0x24] sm:$0xf]
      %v1161 = vsel %vm1135, %v1081, %v1160
      %1162 = vst [vmem:[%s847 + $0x24] sm:$0xf] %v1161
      %1163 = vst.msk [vmem:[%s847 + $0x28] sm:$0xf] %vm1139, %v1083
      %v1164 = vld [vmem:[%s847 + $0x2c] sm:$0x1]
      %v1165 = vsel %vm1142, %v1085, %v1164
      %1166 = vst [vmem:[%s847 + $0x2c] sm:$0x1] %v1165
      %v1167 = vld [vmem:[%s847 + $0x30] sm:$0xf]
      %v1168 = vsel %vm1135, %v1087, %v1167
      %1169 = vst [vmem:[%s847 + $0x30] sm:$0xf] %v1168
      %1170 = vst.msk [vmem:[%s847 + $0x34] sm:$0xf] %vm1139, %v1089
      %v1171 = vld [vmem:[%s847 + $0x38] sm:$0x1]
      %v1172 = vsel %vm1142, %v1091, %v1171
      %1173 = vst [vmem:[%s847 + $0x38] sm:$0x1] %v1172
      %v1174 = vld [vmem:[%s847 + $0x3c] sm:$0xf]
      %v1175 = vsel %vm1135, %v1093, %v1174
      %1176 = vst [vmem:[%s847 + $0x3c] sm:$0xf] %v1175
      %1177 = vst.msk [vmem:[%s847 + $0x40] sm:$0xf] %vm1139, %v1095
      %v1178 = vld [vmem:[%s847 + $0x44] sm:$0x1]
      %v1179 = vsel %vm1142, %v1097, %v1178
      %1180 = vst [vmem:[%s847 + $0x44] sm:$0x1] %v1179
      %v1181 = vld [vmem:[%s847 + $0x48] sm:$0xf]
      %v1182 = vsel %vm1135, %v1099, %v1181
      %1183 = vst [vmem:[%s847 + $0x48] sm:$0xf] %v1182
      %1184 = vst.msk [vmem:[%s847 + $0x4c] sm:$0xf] %vm1139, %v1101
      %v1185 = vld [vmem:[%s847 + $0x50] sm:$0x1]
      %v1186 = vsel %vm1142, %v1103, %v1185
      %1187 = vst [vmem:[%s847 + $0x50] sm:$0x1] %v1186
      %v1188 = vld [vmem:[%s847 + $0x54] sm:$0xf]
      %v1189 = vsel %vm1135, %v1105, %v1188
      %1190 = vst [vmem:[%s847 + $0x54] sm:$0xf] %v1189
      %1191 = vst.msk [vmem:[%s847 + $0x58] sm:$0xf] %vm1139, %v1107
      %v1192 = vld [vmem:[%s847 + $0x5c] sm:$0x1]
      %v1193 = vsel %vm1142, %v1109, %v1192
      %1194 = vst [vmem:[%s847 + $0x5c] sm:$0x1] %v1193
      %p1195 = scmp.gt.s32.totalorder %s24, 0
      // Predicated region
      $region53: #{upscale_and_concat_layer.1} parent=51 // pred_check
        %p1196 = pneg %p1195
      $region54: #{upscale_and_concat_layer.1} parent=51 // pred_check_branch
        %1198 = sbr.rel (%p1196) target = $region56
      $region55: #{upscale_and_concat_layer.1} parent=51 // pred_region
        %v1199 = vld [vmem:[%s548] sm:$0xf]
        %v1200 = vld [vmem:[%s548 + $0x4] sm:$0xf]
        %v1202 = vshrl.u32 %v1199, 16
        %v1204 = vrot.slane %v1202, 7
        %v1205 = vshll.u32 %v1199, 16
        %v1207 = vor.u32 %v1204, %v1205
        %v1208 = vrot.slane %v1204, 4
        %v1210 = vshrl.u32 %v1200, 16
        %v1212 = vrot.slane %v1210, 7
        %v1213 = vshll.u32 %v1200, 16
        %v1215 = vor.u32 %v1212, %v1213
        %v1216 = vsel %vm686, %v1208, %v1215
        %v1217 = vrot.slane %v1212, 4
        %v1221 = vld [vmem:[#allocation2] sm:$0xf]
        %v1222 = vsel %vm850, %v1207, %v1221
        %1223 = vst [vmem:[#allocation2] sm:$0xf] %v1222
        %1224 = vst.msk [vmem:[#allocation2 + $0x4] sm:$0xf] %vm854, %v1216
        %v1225 = vld [vmem:[#allocation2 + $0x8] sm:$0x1]
        %v1226 = vsel %vm857, %v1217, %v1225
        %1227 = vst [vmem:[#allocation2 + $0x8] sm:$0x1] %v1226
        %v1228 = vld [vmem:[%s593] sm:$0xf]
        %v1229 = vld [vmem:[%s593 + $0x4] sm:$0xf]
        %v1231 = vshrl.u32 %v1228, 16
        %v1233 = vrot.slane %v1231, 7
        %v1234 = vshll.u32 %v1228, 16
        %v1236 = vor.u32 %v1233, %v1234
        %v1237 = vrot.slane %v1233, 4
        %v1239 = vshrl.u32 %v1229, 16
        %v1241 = vrot.slane %v1239, 7
        %v1242 = vshll.u32 %v1229, 16
        %v1244 = vor.u32 %v1241, %v1242
        %v1245 = vsel %vm686, %v1237, %v1244
        %v1246 = vrot.slane %v1241, 4
        %1247 = vrot.lane.b32.xlu0 %v1236, 64
        %v1248 = vpop.permute.xlu0 %1247
        %1249 = vrot.lane.b32.xlu0 %v1245, 64
        %v1250 = vpop.permute.xlu0 %1249
        %1251 = vrot.lane.b32.xlu0 %v1246, 64
        %v1252 = vpop.permute.xlu0 %1251
        %v1256 = vld [vmem:[#allocation2] sm:$0xf]
        %v1257 = vsel %vm1135, %v1248, %v1256
        %1258 = vst [vmem:[#allocation2] sm:$0xf] %v1257
        %1259 = vst.msk [vmem:[#allocation2 + $0x4] sm:$0xf] %vm1139, %v1250
        %v1260 = vld [vmem:[#allocation2 + $0x8] sm:$0x1]
        %v1261 = vsel %vm1142, %v1252, %v1260
        %1262 = vst [vmem:[#allocation2 + $0x8] sm:$0x1] %v1261
      $region56: #{upscale_and_concat_layer.1} parent=51 // pred_fallthru
        _
      %p1263 = scmp.lt.s32.totalorder %s24, 1
      // Predicated region
      $region57: #{upscale_and_concat_layer.1} parent=51 // pred_check
        %p1264 = pneg %p1263
      $region58: #{upscale_and_concat_layer.1} parent=51 // pred_check_branch
        %1266 = sbr.rel (%p1264) target = $region60
      $region59: #{upscale_and_concat_layer.1} parent=51 // pred_region
        %v1267 = vld [vmem:[%s576] sm:$0xf]
        %v1268 = vld [vmem:[%s576 + $0x4] sm:$0xf]
        %v1270 = vshrl.u32 %v1267, 16
        %v1272 = vrot.slane %v1270, 7
        %v1273 = vshll.u32 %v1267, 16
        %v1275 = vor.u32 %v1272, %v1273
        %v1276 = vrot.slane %v1272, 4
        %v1278 = vshrl.u32 %v1268, 16
        %v1280 = vrot.slane %v1278, 7
        %v1281 = vshll.u32 %v1268, 16
        %v1283 = vor.u32 %v1280, %v1281
        %v1284 = vsel %vm686, %v1276, %v1283
        %v1285 = vrot.slane %v1280, 4
        %s1289 = scalar_lea.vmem [#allocation2], 108
        %v1290 = vld [vmem:[%s1289] sm:$0xf]
        %v1291 = vsel %vm850, %v1275, %v1290
        %1292 = vst [vmem:[%s1289] sm:$0xf] %v1291
        %1293 = vst.msk [vmem:[%s1289 + $0x4] sm:$0xf] %vm854, %v1284
        %v1294 = vld [vmem:[%s1289 + $0x8] sm:$0x1]
        %v1295 = vsel %vm857, %v1285, %v1294
        %1296 = vst [vmem:[%s1289 + $0x8] sm:$0x1] %v1295
        %v1297 = vld [vmem:[%s621] sm:$0xf]
        %v1298 = vld [vmem:[%s621 + $0x4] sm:$0xf]
        %v1300 = vshrl.u32 %v1297, 16
        %v1302 = vrot.slane %v1300, 7
        %v1303 = vshll.u32 %v1297, 16
        %v1305 = vor.u32 %v1302, %v1303
        %v1306 = vrot.slane %v1302, 4
        %v1308 = vshrl.u32 %v1298, 16
        %v1310 = vrot.slane %v1308, 7
        %v1311 = vshll.u32 %v1298, 16
        %v1313 = vor.u32 %v1310, %v1311
        %v1314 = vsel %vm686, %v1306, %v1313
        %v1315 = vrot.slane %v1310, 4
        %1316 = vrot.lane.b32.xlu0 %v1305, 64
        %v1317 = vpop.permute.xlu0 %1316
        %1318 = vrot.lane.b32.xlu0 %v1314, 64
        %v1319 = vpop.permute.xlu0 %1318
        %1320 = vrot.lane.b32.xlu0 %v1315, 64
        %v1321 = vpop.permute.xlu0 %1320
        %v1325 = vld [vmem:[%s1289] sm:$0xf]
        %v1326 = vsel %vm1135, %v1317, %v1325
        %1327 = vst [vmem:[%s1289] sm:$0xf] %v1326
        %1328 = vst.msk [vmem:[%s1289 + $0x4] sm:$0xf] %vm1139, %v1319
        %v1329 = vld [vmem:[%s1289 + $0x8] sm:$0x1]
        %v1330 = vsel %vm1142, %v1321, %v1329
        %1331 = vst [vmem:[%s1289 + $0x8] sm:$0x1] %v1330
      $region60: #{upscale_and_concat_layer.1} parent=51 // pred_fallthru
        _
      %v1332 = vld [vmem:[#allocation2] sm:$0xf]
      %v1333 = vld [vmem:[#allocation2 + $0x4] sm:$0xf]
      %v1334 = vld [vmem:[#allocation2 + $0xc] sm:$0xf]
      %v1335 = vld [vmem:[#allocation2 + $0x10] sm:$0xf]
      %v1336 = vld [vmem:[#allocation2 + $0x18] sm:$0xf]
      %v1337 = vld [vmem:[#allocation2 + $0x1c] sm:$0xf]
      %v1338 = vld [vmem:[#allocation2 + $0x24] sm:$0xf]
      %v1339 = vld [vmem:[#allocation2 + $0x28] sm:$0xf]
      %v1340 = vld [vmem:[#allocation2 + $0x30] sm:$0xf]
      %v1341 = vld [vmem:[#allocation2 + $0x34] sm:$0xf]
      %v1342 = vld [vmem:[#allocation2 + $0x3c] sm:$0xf]
      %v1343 = vld [vmem:[#allocation2 + $0x40] sm:$0xf]
      %v1344 = vld [vmem:[#allocation2 + $0x48] sm:$0xf]
      %v1345 = vld [vmem:[#allocation2 + $0x4c] sm:$0xf]
      %v1346 = vld [vmem:[#allocation2 + $0x54] sm:$0xf]
      %v1347 = vld [vmem:[#allocation2 + $0x58] sm:$0xf]
      %v1348 = vld [vmem:[#allocation2 + $0x60] sm:$0xf]
      %v1349 = vld [vmem:[#allocation2 + $0x64] sm:$0xf]
      %v1350 = vld [vmem:[#allocation2 + $0x6c] sm:$0xf]
      %v1351 = vld [vmem:[#allocation2 + $0x70] sm:$0xf]
      %v1372 = vunpack.c.l.b16 %v1332
      %v1373 = vunpack.c.l.b16 %v1333
      %v1374 = vunpack.c.l.b16 %v1334
      %v1375 = vunpack.c.l.b16 %v1335
      %v1376 = vunpack.c.l.b16 %v1336
      %v1377 = vunpack.c.l.b16 %v1337
      %v1378 = vunpack.c.l.b16 %v1338
      %v1379 = vunpack.c.l.b16 %v1339
      %v1380 = vunpack.c.l.b16 %v1340
      %v1381 = vunpack.c.l.b16 %v1341
      %v1382 = vunpack.c.l.b16 %v1342
      %v1383 = vunpack.c.l.b16 %v1343
      %v1384 = vunpack.c.l.b16 %v1344
      %v1385 = vunpack.c.l.b16 %v1345
      %v1386 = vunpack.c.l.b16 %v1346
      %v1387 = vunpack.c.l.b16 %v1347
      %v1388 = vunpack.c.l.b16 %v1348
      %v1389 = vunpack.c.l.b16 %v1349
      %v1390 = vunpack.c.l.b16 %v1350
      %v1391 = vunpack.c.l.b16 %v1351
      %v1392 = vpack.c.b16 %v1373, %v1372
      %v1393 = vpack.c.b16 %v1375, %v1374
      %v1394 = vpack.c.b16 %v1377, %v1376
      %v1395 = vpack.c.b16 %v1379, %v1378
      %v1396 = vpack.c.b16 %v1381, %v1380
      %v1397 = vpack.c.b16 %v1383, %v1382
      %v1398 = vpack.c.b16 %v1385, %v1384
      %v1399 = vpack.c.b16 %v1387, %v1386
      %v1400 = vpack.c.b16 %v1389, %v1388
      %v1401 = vpack.c.b16 %v1391, %v1390
      %1412 = vst [vmem:[#allocation3] sm:$0xff] %v1392
      %1413 = vst [vmem:[#allocation3 + $0x8] sm:$0xff] %v1393
      %1414 = vst [vmem:[#allocation3 + $0x10] sm:$0xff] %v1394
      %1415 = vst [vmem:[#allocation3 + $0x18] sm:$0xff] %v1395
      %1416 = vst [vmem:[#allocation3 + $0x20] sm:$0xff] %v1396
      %1417 = vst [vmem:[#allocation3 + $0x28] sm:$0xff] %v1397
      %1418 = vst [vmem:[#allocation3 + $0x30] sm:$0xff] %v1398
      %1419 = vst [vmem:[#allocation3 + $0x38] sm:$0xff] %v1399
      %1420 = vst [vmem:[#allocation3 + $0x40] sm:$0xff] %v1400
      %1421 = vst [vmem:[#allocation3 + $0x48] sm:$0xff] %v1401
      %v1422 = vld [vmem:[#allocation2] sm:$0xf]
      %v1423 = vld [vmem:[#allocation2 + $0x4] sm:$0xf]
      %v1424 = vld [vmem:[#allocation2 + $0x8] sm:$0x1]
      %v1425 = vld [vmem:[#allocation2 + $0xc] sm:$0xf]
      %v1426 = vld [vmem:[#allocation2 + $0x10] sm:$0xf]
      %v1427 = vld [vmem:[#allocation2 + $0x14] sm:$0x1]
      %v1428 = vld [vmem:[#allocation2 + $0x18] sm:$0xf]
      %v1429 = vld [vmem:[#allocation2 + $0x1c] sm:$0xf]
      %v1430 = vld [vmem:[#allocation2 + $0x20] sm:$0x1]
      %v1431 = vld [vmem:[#allocation2 + $0x24] sm:$0xf]
      %v1432 = vld [vmem:[#allocation2 + $0x28] sm:$0xf]
      %v1433 = vld [vmem:[#allocation2 + $0x2c] sm:$0x1]
      %v1434 = vld [vmem:[#allocation2 + $0x30] sm:$0xf]
      %v1435 = vld [vmem:[#allocation2 + $0x34] sm:$0xf]
      %v1436 = vld [vmem:[#allocation2 + $0x38] sm:$0x1]
      %v1437 = vld [vmem:[#allocation2 + $0x3c] sm:$0xf]
      %v1438 = vld [vmem:[#allocation2 + $0x40] sm:$0xf]
      %v1439 = vld [vmem:[#allocation2 + $0x44] sm:$0x1]
      %v1440 = vld [vmem:[#allocation2 + $0x48] sm:$0xf]
      %v1441 = vld [vmem:[#allocation2 + $0x4c] sm:$0xf]
      %v1442 = vld [vmem:[#allocation2 + $0x50] sm:$0x1]
      %v1443 = vld [vmem:[#allocation2 + $0x54] sm:$0xf]
      %v1444 = vld [vmem:[#allocation2 + $0x58] sm:$0xf]
      %v1445 = vld [vmem:[#allocation2 + $0x5c] sm:$0x1]
      %v1446 = vld [vmem:[#allocation2 + $0x60] sm:$0xf]
      %v1447 = vld [vmem:[#allocation2 + $0x64] sm:$0xf]
      %v1448 = vld [vmem:[#allocation2 + $0x68] sm:$0x1]
      %v1449 = vld [vmem:[#allocation2 + $0x6c] sm:$0xf]
      %v1450 = vld [vmem:[#allocation2 + $0x70] sm:$0xf]
      %v1451 = vld [vmem:[#allocation2 + $0x74] sm:$0x1]
      %v1482 = vunpack.c.l.b16 %v1422
      %v1483 = vunpack.c.l.b16 %v1423
      %v1484 = vunpack.c.l.b16 %v1424
      %v1485 = vunpack.c.l.b16 %v1425
      %v1486 = vunpack.c.l.b16 %v1426
      %v1487 = vunpack.c.l.b16 %v1427
      %v1488 = vunpack.c.l.b16 %v1428
      %v1489 = vunpack.c.l.b16 %v1429
      %v1490 = vunpack.c.l.b16 %v1430
      %v1491 = vunpack.c.l.b16 %v1431
      %v1492 = vunpack.c.l.b16 %v1432
      %v1493 = vunpack.c.l.b16 %v1433
      %v1494 = vunpack.c.l.b16 %v1434
      %v1495 = vunpack.c.l.b16 %v1435
      %v1496 = vunpack.c.l.b16 %v1436
      %v1497 = vunpack.c.l.b16 %v1437
      %v1498 = vunpack.c.l.b16 %v1438
      %v1499 = vunpack.c.l.b16 %v1439
      %v1500 = vunpack.c.l.b16 %v1440
      %v1501 = vunpack.c.l.b16 %v1441
      %v1502 = vunpack.c.l.b16 %v1442
      %v1503 = vunpack.c.l.b16 %v1443
      %v1504 = vunpack.c.l.b16 %v1444
      %v1505 = vunpack.c.l.b16 %v1445
      %v1506 = vunpack.c.l.b16 %v1446
      %v1507 = vunpack.c.l.b16 %v1447
      %v1508 = vunpack.c.l.b16 %v1448
      %v1509 = vunpack.c.l.b16 %v1449
      %v1510 = vunpack.c.l.b16 %v1450
      %v1511 = vunpack.c.l.b16 %v1451
      %v1512 = vpack.c.b16 %v1483, %v1482
      %v1513 = vpack.c.b16 %v1484, %v1484
      %v1514 = vpack.c.b16 %v1486, %v1485
      %v1515 = vpack.c.b16 %v1487, %v1487
      %v1516 = vpack.c.b16 %v1489, %v1488
      %v1517 = vpack.c.b16 %v1490, %v1490
      %v1518 = vpack.c.b16 %v1492, %v1491
      %v1519 = vpack.c.b16 %v1493, %v1493
      %v1520 = vpack.c.b16 %v1495, %v1494
      %v1521 = vpack.c.b16 %v1496, %v1496
      %v1522 = vpack.c.b16 %v1498, %v1497
      %v1523 = vpack.c.b16 %v1499, %v1499
      %v1524 = vpack.c.b16 %v1501, %v1500
      %v1525 = vpack.c.b16 %v1502, %v1502
      %v1526 = vpack.c.b16 %v1504, %v1503
      %v1527 = vpack.c.b16 %v1505, %v1505
      %v1528 = vpack.c.b16 %v1507, %v1506
      %v1529 = vpack.c.b16 %v1508, %v1508
      %v1530 = vpack.c.b16 %v1510, %v1509
      %v1531 = vpack.c.b16 %v1511, %v1511
      %vm1532 = vsmask.f32 7424
      %v1534 = vshrl.u32 %v1512, 16
      %v1536 = vshll.u32 %v1512, 16
      %v1538 = vrot.slane %v1536, 1
      %v1539 = vor.u32 %v1534, %v1538
      %v1541 = vshll.u32 %v1513, 16
      %v1543 = vrot.slane %v1541, 1
      %v1544 = vsel %vm1532, %v1539, %v1543
      %v1546 = vshrl.u32 %v1514, 16
      %v1548 = vshll.u32 %v1514, 16
      %v1550 = vrot.slane %v1548, 1
      %v1551 = vor.u32 %v1546, %v1550
      %v1553 = vshll.u32 %v1515, 16
      %v1555 = vrot.slane %v1553, 1
      %v1556 = vsel %vm1532, %v1551, %v1555
      %v1558 = vshrl.u32 %v1516, 16
      %v1560 = vshll.u32 %v1516, 16
      %v1562 = vrot.slane %v1560, 1
      %v1563 = vor.u32 %v1558, %v1562
      %v1565 = vshll.u32 %v1517, 16
      %v1567 = vrot.slane %v1565, 1
      %v1568 = vsel %vm1532, %v1563, %v1567
      %v1570 = vshrl.u32 %v1518, 16
      %v1572 = vshll.u32 %v1518, 16
      %v1574 = vrot.slane %v1572, 1
      %v1575 = vor.u32 %v1570, %v1574
      %v1577 = vshll.u32 %v1519, 16
      %v1579 = vrot.slane %v1577, 1
      %v1580 = vsel %vm1532, %v1575, %v1579
      %v1582 = vshrl.u32 %v1520, 16
      %v1584 = vshll.u32 %v1520, 16
      %v1586 = vrot.slane %v1584, 1
      %v1587 = vor.u32 %v1582, %v1586
      %v1589 = vshll.u32 %v1521, 16
      %v1591 = vrot.slane %v1589, 1
      %v1592 = vsel %vm1532, %v1587, %v1591
      %v1594 = vshrl.u32 %v1522, 16
      %v1596 = vshll.u32 %v1522, 16
      %v1598 = vrot.slane %v1596, 1
      %v1599 = vor.u32 %v1594, %v1598
      %v1601 = vshll.u32 %v1523, 16
      %v1603 = vrot.slane %v1601, 1
      %v1604 = vsel %vm1532, %v1599, %v1603
      %v1606 = vshrl.u32 %v1524, 16
      %v1608 = vshll.u32 %v1524, 16
      %v1610 = vrot.slane %v1608, 1
      %v1611 = vor.u32 %v1606, %v1610
      %v1613 = vshll.u32 %v1525, 16
      %v1615 = vrot.slane %v1613, 1
      %v1616 = vsel %vm1532, %v1611, %v1615
      %v1618 = vshrl.u32 %v1526, 16
      %v1620 = vshll.u32 %v1526, 16
      %v1622 = vrot.slane %v1620, 1
      %v1623 = vor.u32 %v1618, %v1622
      %v1625 = vshll.u32 %v1527, 16
      %v1627 = vrot.slane %v1625, 1
      %v1628 = vsel %vm1532, %v1623, %v1627
      %v1630 = vshrl.u32 %v1528, 16
      %v1632 = vshll.u32 %v1528, 16
      %v1634 = vrot.slane %v1632, 1
      %v1635 = vor.u32 %v1630, %v1634
      %v1637 = vshll.u32 %v1529, 16
      %v1639 = vrot.slane %v1637, 1
      %v1640 = vsel %vm1532, %v1635, %v1639
      %v1642 = vshrl.u32 %v1530, 16
      %v1644 = vshll.u32 %v1530, 16
      %v1646 = vrot.slane %v1644, 1
      %v1647 = vor.u32 %v1642, %v1646
      %v1649 = vshll.u32 %v1531, 16
      %v1651 = vrot.slane %v1649, 1
      %v1652 = vsel %vm1532, %v1647, %v1651
      %s1663 = scalar_lea.vmem [#allocation3], 80
      %1664 = vst [vmem:[%s1663] sm:$0xff] %v1544
      %1665 = vst [vmem:[%s1663 + $0x8] sm:$0xff] %v1556
      %1666 = vst [vmem:[%s1663 + $0x10] sm:$0xff] %v1568
      %1667 = vst [vmem:[%s1663 + $0x18] sm:$0xff] %v1580
      %1668 = vst [vmem:[%s1663 + $0x20] sm:$0xff] %v1592
      %1669 = vst [vmem:[%s1663 + $0x28] sm:$0xff] %v1604
      %1670 = vst [vmem:[%s1663 + $0x30] sm:$0xff] %v1616
      %1671 = vst [vmem:[%s1663 + $0x38] sm:$0xff] %v1628
      %1672 = vst [vmem:[%s1663 + $0x40] sm:$0xff] %v1640
      %1673 = vst [vmem:[%s1663 + $0x48] sm:$0xff] %v1652
      %v1674 = vld [vmem:[#allocation2] sm:$0xe]
      %v1675 = vld [vmem:[#allocation2 + $0x4] sm:$0xf]
      %v1676 = vld [vmem:[#allocation2 + $0x8] sm:$0x1]
      %v1677 = vld [vmem:[#allocation2 + $0xc] sm:$0xe]
      %v1678 = vld [vmem:[#allocation2 + $0x10] sm:$0xf]
      %v1679 = vld [vmem:[#allocation2 + $0x14] sm:$0x1]
      %v1680 = vld [vmem:[#allocation2 + $0x18] sm:$0xe]
      %v1681 = vld [vmem:[#allocation2 + $0x1c] sm:$0xf]
      %v1682 = vld [vmem:[#allocation2 + $0x20] sm:$0x1]
      %v1683 = vld [vmem:[#allocation2 + $0x24] sm:$0xe]
      %v1684 = vld [vmem:[#allocation2 + $0x28] sm:$0xf]
      %v1685 = vld [vmem:[#allocation2 + $0x2c] sm:$0x1]
      %v1686 = vld [vmem:[#allocation2 + $0x30] sm:$0xe]
      %v1687 = vld [vmem:[#allocation2 + $0x34] sm:$0xf]
      %v1688 = vld [vmem:[#allocation2 + $0x38] sm:$0x1]
      %v1689 = vld [vmem:[#allocation2 + $0x3c] sm:$0xe]
      %v1690 = vld [vmem:[#allocation2 + $0x40] sm:$0xf]
      %v1691 = vld [vmem:[#allocation2 + $0x44] sm:$0x1]
      %v1692 = vld [vmem:[#allocation2 + $0x48] sm:$0xe]
      %v1693 = vld [vmem:[#allocation2 + $0x4c] sm:$0xf]
      %v1694 = vld [vmem:[#allocation2 + $0x50] sm:$0x1]
      %v1695 = vld [vmem:[#allocation2 + $0x54] sm:$0xe]
      %v1696 = vld [vmem:[#allocation2 + $0x58] sm:$0xf]
      %v1697 = vld [vmem:[#allocation2 + $0x5c] sm:$0x1]
      %v1698 = vld [vmem:[#allocation2 + $0x60] sm:$0xe]
      %v1699 = vld [vmem:[#allocation2 + $0x64] sm:$0xf]
      %v1700 = vld [vmem:[#allocation2 + $0x68] sm:$0x1]
      %v1701 = vld [vmem:[#allocation2 + $0x6c] sm:$0xe]
      %v1702 = vld [vmem:[#allocation2 + $0x70] sm:$0xf]
      %v1703 = vld [vmem:[#allocation2 + $0x74] sm:$0x1]
      %v1734 = vunpack.c.l.b16 %v1674
      %v1735 = vunpack.c.l.b16 %v1675
      %v1736 = vunpack.c.l.b16 %v1676
      %v1737 = vunpack.c.l.b16 %v1677
      %v1738 = vunpack.c.l.b16 %v1678
      %v1739 = vunpack.c.l.b16 %v1679
      %v1740 = vunpack.c.l.b16 %v1680
      %v1741 = vunpack.c.l.b16 %v1681
      %v1742 = vunpack.c.l.b16 %v1682
      %v1743 = vunpack.c.l.b16 %v1683
      %v1744 = vunpack.c.l.b16 %v1684
      %v1745 = vunpack.c.l.b16 %v1685
      %v1746 = vunpack.c.l.b16 %v1686
      %v1747 = vunpack.c.l.b16 %v1687
      %v1748 = vunpack.c.l.b16 %v1688
      %v1749 = vunpack.c.l.b16 %v1689
      %v1750 = vunpack.c.l.b16 %v1690
      %v1751 = vunpack.c.l.b16 %v1691
      %v1752 = vunpack.c.l.b16 %v1692
      %v1753 = vunpack.c.l.b16 %v1693
      %v1754 = vunpack.c.l.b16 %v1694
      %v1755 = vunpack.c.l.b16 %v1695
      %v1756 = vunpack.c.l.b16 %v1696
      %v1757 = vunpack.c.l.b16 %v1697
      %v1758 = vunpack.c.l.b16 %v1698
      %v1759 = vunpack.c.l.b16 %v1699
      %v1760 = vunpack.c.l.b16 %v1700
      %v1761 = vunpack.c.l.b16 %v1701
      %v1762 = vunpack.c.l.b16 %v1702
      %v1763 = vunpack.c.l.b16 %v1703
      %v1764 = vpack.c.b16 %v1735, %v1734
      %v1765 = vpack.c.b16 %v1736, %v1736
      %v1766 = vpack.c.b16 %v1738, %v1737
      %v1767 = vpack.c.b16 %v1739, %v1739
      %v1768 = vpack.c.b16 %v1741, %v1740
      %v1769 = vpack.c.b16 %v1742, %v1742
      %v1770 = vpack.c.b16 %v1744, %v1743
      %v1771 = vpack.c.b16 %v1745, %v1745
      %v1772 = vpack.c.b16 %v1747, %v1746
      %v1773 = vpack.c.b16 %v1748, %v1748
      %v1774 = vpack.c.b16 %v1750, %v1749
      %v1775 = vpack.c.b16 %v1751, %v1751
      %v1776 = vpack.c.b16 %v1753, %v1752
      %v1777 = vpack.c.b16 %v1754, %v1754
      %v1778 = vpack.c.b16 %v1756, %v1755
      %v1779 = vpack.c.b16 %v1757, %v1757
      %v1780 = vpack.c.b16 %v1759, %v1758
      %v1781 = vpack.c.b16 %v1760, %v1760
      %v1782 = vpack.c.b16 %v1762, %v1761
      %v1783 = vpack.c.b16 %v1763, %v1763
      %vm1784 = vcmask 1046528
      %v1785 = vrot.slane %v1764, 1
      %v1786 = vrot.slane %v1765, 1
      %v1787 = vsel %vm1784, %v1785, %v1786
      %v1788 = vrot.slane %v1766, 1
      %v1789 = vrot.slane %v1767, 1
      %v1790 = vsel %vm1784, %v1788, %v1789
      %v1791 = vrot.slane %v1768, 1
      %v1792 = vrot.slane %v1769, 1
      %v1793 = vsel %vm1784, %v1791, %v1792
      %v1794 = vrot.slane %v1770, 1
      %v1795 = vrot.slane %v1771, 1
      %v1796 = vsel %vm1784, %v1794, %v1795
      %v1797 = vrot.slane %v1772, 1
      %v1798 = vrot.slane %v1773, 1
      %v1799 = vsel %vm1784, %v1797, %v1798
      %v1800 = vrot.slane %v1774, 1
      %v1801 = vrot.slane %v1775, 1
      %v1802 = vsel %vm1784, %v1800, %v1801
      %v1803 = vrot.slane %v1776, 1
      %v1804 = vrot.slane %v1777, 1
      %v1805 = vsel %vm1784, %v1803, %v1804
      %v1806 = vrot.slane %v1778, 1
      %v1807 = vrot.slane %v1779, 1
      %v1808 = vsel %vm1784, %v1806, %v1807
      %v1809 = vrot.slane %v1780, 1
      %v1810 = vrot.slane %v1781, 1
      %v1811 = vsel %vm1784, %v1809, %v1810
      %v1812 = vrot.slane %v1782, 1
      %v1813 = vrot.slane %v1783, 1
      %v1814 = vsel %vm1784, %v1812, %v1813
      %s1825 = scalar_lea.vmem [#allocation3], 160
      %1826 = vst [vmem:[%s1825] sm:$0xff] %v1787
      %1827 = vst [vmem:[%s1825 + $0x8] sm:$0xff] %v1790
      %1828 = vst [vmem:[%s1825 + $0x10] sm:$0xff] %v1793
      %1829 = vst [vmem:[%s1825 + $0x18] sm:$0xff] %v1796
      %1830 = vst [vmem:[%s1825 + $0x20] sm:$0xff] %v1799
      %1831 = vst [vmem:[%s1825 + $0x28] sm:$0xff] %v1802
      %1832 = vst [vmem:[%s1825 + $0x30] sm:$0xff] %v1805
      %1833 = vst [vmem:[%s1825 + $0x38] sm:$0xff] %v1808
      %1834 = vst [vmem:[%s1825 + $0x40] sm:$0xff] %v1811
      %1835 = vst [vmem:[%s1825 + $0x48] sm:$0xff] %v1814
      %v1836 = vld [vmem:[#allocation3] sm:$0xff]
      %v1837 = vld [vmem:[#allocation3 + $0x8] sm:$0xff]
      %v1838 = vld [vmem:[#allocation3 + $0x10] sm:$0xff]
      %v1839 = vld [vmem:[#allocation3 + $0x18] sm:$0xff]
      %v1840 = vld [vmem:[#allocation3 + $0x20] sm:$0xff]
      %v1841 = vld [vmem:[#allocation3 + $0x28] sm:$0xff]
      %v1842 = vld [vmem:[#allocation3 + $0x30] sm:$0xff]
      %v1843 = vld [vmem:[#allocation3 + $0x38] sm:$0xff]
      %v1844 = vld [vmem:[%s6] sm:$0xf]
      %v1845 = vld [vmem:[%s6 + $0x4] sm:$0xf]
      %v1846 = vld [vmem:[%s6 + $0x8] sm:$0xf]
      %v1847 = vld [vmem:[%s6 + $0xc] sm:$0xf]
      %v1848 = vld [vmem:[%s6 + $0x10] sm:$0xf]
      %v1849 = vld [vmem:[%s6 + $0x14] sm:$0xf]
      %v1850 = vld [vmem:[%s6 + $0x18] sm:$0xf]
      %v1851 = vld [vmem:[%s6 + $0x1c] sm:$0xf]
      %v1852 = vld [vmem:[%s6 + $0x20] sm:$0xf]
      %v1853 = vld [vmem:[%s6 + $0x24] sm:$0xf]
      %v1854 = vld [vmem:[%s6 + $0x28] sm:$0xf]
      %v1855 = vld [vmem:[%s6 + $0x2c] sm:$0xf]
      %v1856 = vld [vmem:[%s6 + $0x30] sm:$0xf]
      %v1857 = vld [vmem:[%s6 + $0x34] sm:$0xf]
      %v1858 = vld [vmem:[%s6 + $0x38] sm:$0xf]
      %v1859 = vld [vmem:[%s6 + $0x3c] sm:$0xf]
      %v1860 = vld [vmem:[%s1663] sm:$0xff]
      %v1861 = vld [vmem:[%s1663 + $0x8] sm:$0xff]
      %v1862 = vld [vmem:[%s1663 + $0x10] sm:$0xff]
      %v1863 = vld [vmem:[%s1663 + $0x18] sm:$0xff]
      %v1864 = vld [vmem:[%s1663 + $0x20] sm:$0xff]
      %v1865 = vld [vmem:[%s1663 + $0x28] sm:$0xff]
      %v1866 = vld [vmem:[%s1663 + $0x30] sm:$0xff]
      %v1867 = vld [vmem:[%s1663 + $0x38] sm:$0xff]
      %s1868 = scalar_lea.vmem %s6, 64
      %v1869 = vld [vmem:[%s1868] sm:$0xf]
      %v1870 = vld [vmem:[%s1868 + $0x4] sm:$0xf]
      %v1871 = vld [vmem:[%s1868 + $0x8] sm:$0xf]
      %v1872 = vld [vmem:[%s1868 + $0xc] sm:$0xf]
      %v1873 = vld [vmem:[%s1868 + $0x10] sm:$0xf]
      %v1874 = vld [vmem:[%s1868 + $0x14] sm:$0xf]
      %v1875 = vld [vmem:[%s1868 + $0x18] sm:$0xf]
      %v1876 = vld [vmem:[%s1868 + $0x1c] sm:$0xf]
      %v1877 = vld [vmem:[%s1868 + $0x20] sm:$0xf]
      %v1878 = vld [vmem:[%s1868 + $0x24] sm:$0xf]
      %v1879 = vld [vmem:[%s1868 + $0x28] sm:$0xf]
      %v1880 = vld [vmem:[%s1868 + $0x2c] sm:$0xf]
      %v1881 = vld [vmem:[%s1868 + $0x30] sm:$0xf]
      %v1882 = vld [vmem:[%s1868 + $0x34] sm:$0xf]
      %v1883 = vld [vmem:[%s1868 + $0x38] sm:$0xf]
      %v1884 = vld [vmem:[%s1868 + $0x3c] sm:$0xf]
      %v1901 = vunpack.c.l.b16 %v1869
      %v1902 = vunpack.c.l.b16 %v1870
      %v1903 = vunpack.c.l.b16 %v1871
      %v1904 = vunpack.c.l.b16 %v1872
      %v1905 = vunpack.c.l.b16 %v1873
      %v1906 = vunpack.c.l.b16 %v1874
      %v1907 = vunpack.c.l.b16 %v1875
      %v1908 = vunpack.c.l.b16 %v1876
      %v1909 = vunpack.c.l.b16 %v1877
      %v1910 = vunpack.c.l.b16 %v1878
      %v1911 = vunpack.c.l.b16 %v1879
      %v1912 = vunpack.c.l.b16 %v1880
      %v1913 = vunpack.c.l.b16 %v1881
      %v1914 = vunpack.c.l.b16 %v1882
      %v1915 = vunpack.c.l.b16 %v1883
      %v1916 = vunpack.c.l.b16 %v1884
      %v1917 = vpack.c.b16 %v1902, %v1901
      %v1918 = vpack.c.b16 %v1904, %v1903
      %v1919 = vpack.c.b16 %v1906, %v1905
      %v1920 = vpack.c.b16 %v1908, %v1907
      %v1921 = vpack.c.b16 %v1910, %v1909
      %v1922 = vpack.c.b16 %v1912, %v1911
      %v1923 = vpack.c.b16 %v1914, %v1913
      %v1924 = vpack.c.b16 %v1916, %v1915
      %1933 = vmatprep.subr.bf16.mxu0 0
      %1934 = vmatpush1.bf16.msra.mxu0 %v1917
      %1935 = vmatprep.subr.bf16.mxu0 0
      %1936 = vmatpush1.bf16.msra.mxu0 %v1918
      %1937 = vmatprep.subr.bf16.mxu0 0
      %1938 = vmatpush1.bf16.msra.mxu0 %v1919
      %1939 = vmatprep.subr.bf16.mxu0 0
      %1940 = vmatpush1.bf16.msra.mxu0 %v1920
      %1941 = vmatprep.subr.bf16.mxu0 0
      %1942 = vmatpush1.bf16.msra.mxu0 %v1921
      %1943 = vmatprep.subr.bf16.mxu0 0
      %1944 = vmatpush1.bf16.msra.mxu0 %v1922
      %1945 = vmatprep.subr.bf16.mxu0 0
      %1946 = vmatpush1.bf16.msra.mxu0 %v1923
      %1947 = vmatprep.subr.bf16.mxu0 0
      %1948 = vmatpush1.bf16.msra.mxu0 %v1924
      %1949 = vmatprep.subr.bf16.mxu0 0
      %1950 = vmatpush1.bf16.msra.mxu0 0
      %1951 = vmatprep.subr.bf16.mxu0 0
      %1952 = vmatpush1.bf16.msra.mxu0 0
      %1953 = vmatprep.subr.bf16.mxu0 0
      %1954 = vmatpush1.bf16.msra.mxu0 0
      %1955 = vmatprep.subr.bf16.mxu0 0
      %1956 = vmatpush1.bf16.msra.mxu0 0
      %1957 = vmatprep.subr.bf16.mxu0 0
      %1958 = vmatpush1.bf16.msra.mxu0 0
      %1959 = vmatprep.subr.bf16.mxu0 0
      %1960 = vmatpush1.bf16.msra.mxu0 0
      %1961 = vmatprep.subr.bf16.mxu0 0
      %1962 = vmatpush1.bf16.msra.mxu0 0
      %1963 = vmatprep.subr.bf16.mxu0 0
      %1964 = vmatpush1.bf16.msra.mxu0 0
      %1965 = vmatprep.mubr.bf16.mxu0 0
      %1966 = vmatmul.mubr.bf16.gmra.mrb[0].mxu0 %v1860
      %v1967 = vpop.f32.mrb[0].mxu0
      %v1968 = vadd.f32 0.0, %v1967
      %v1969 = vpop.f32.mrb[0].mxu0
      %v1970 = vpop.f32.mrb[0].mxu0
      %v1971 = vadd.f32 0.0, %v1970
      %v1972 = vpop.f32.mrb[0].mxu0
      %1973 = vmatprep.mubr.bf16.mxu0 0
      %1974 = vmatmul.mubr.bf16.gmra.mrb[0].mxu0 %v1861
      %v1975 = vpop.f32.mrb[0].mxu0
      %v1976 = vadd.f32 0.0, %v1975
      %v1977 = vpop.f32.mrb[0].mxu0
      %v1978 = vpop.f32.mrb[0].mxu0
      %v1979 = vadd.f32 0.0, %v1978
      %v1980 = vpop.f32.mrb[0].mxu0
      %1981 = vmatprep.mubr.bf16.mxu0 0
      %1982 = vmatmul.mubr.bf16.gmra.mrb[0].mxu0 %v1862
      %v1983 = vpop.f32.mrb[0].mxu0
      %v1984 = vadd.f32 0.0, %v1983
      %v1985 = vpop.f32.mrb[0].mxu0
      %v1986 = vpop.f32.mrb[0].mxu0
      %v1987 = vadd.f32 0.0, %v1986
      %v1988 = vpop.f32.mrb[0].mxu0
      %1989 = vmatprep.mubr.bf16.mxu0 0
      %1990 = vmatmul.mubr.bf16.gmra.mrb[0].mxu0 %v1863
      %v1991 = vpop.f32.mrb[0].mxu0
      %v1992 = vadd.f32 0.0, %v1991
      %v1993 = vpop.f32.mrb[0].mxu0
      %v1994 = vpop.f32.mrb[0].mxu0
      %v1995 = vadd.f32 0.0, %v1994
      %v1996 = vpop.f32.mrb[0].mxu0
      %1997 = vmatprep.mubr.bf16.mxu0 0
      %1998 = vmatmul.mubr.bf16.gmra.mrb[0].mxu0 %v1864
      %v1999 = vpop.f32.mrb[0].mxu0
      %v2000 = vadd.f32 0.0, %v1999
      %v2001 = vpop.f32.mrb[0].mxu0
      %v2002 = vpop.f32.mrb[0].mxu0
      %v2003 = vadd.f32 0.0, %v2002
      %v2004 = vpop.f32.mrb[0].mxu0
      %2005 = vmatprep.mubr.bf16.mxu0 0
      %2006 = vmatmul.mubr.bf16.gmra.mrb[0].mxu0 %v1865
      %v2007 = vpop.f32.mrb[0].mxu0
      %v2008 = vadd.f32 0.0, %v2007
      %v2009 = vpop.f32.mrb[0].mxu0
      %v2010 = vpop.f32.mrb[0].mxu0
      %v2011 = vadd.f32 0.0, %v2010
      %v2012 = vpop.f32.mrb[0].mxu0
      %2013 = vmatprep.mubr.bf16.mxu0 0
      %2014 = vmatmul.mubr.bf16.gmra.mrb[0].mxu0 %v1866
      %v2015 = vpop.f32.mrb[0].mxu0
      %v2016 = vadd.f32 0.0, %v2015
      %v2017 = vpop.f32.mrb[0].mxu0
      %v2018 = vpop.f32.mrb[0].mxu0
      %v2019 = vadd.f32 0.0, %v2018
      %v2020 = vpop.f32.mrb[0].mxu0
      %2021 = vmatprep.mubr.bf16.mxu0 0
      %2022 = vmatmul.mubr.bf16.gmra.mrb[0].mxu0 %v1867
      %v2023 = vpop.f32.mrb[0].mxu0
      %v2024 = vadd.f32 0.0, %v2023
      %v2025 = vpop.f32.mrb[0].mxu0
      %v2026 = vpop.f32.mrb[0].mxu0
      %v2027 = vadd.f32 0.0, %v2026
      %v2028 = vpop.f32.mrb[0].mxu0
      %2029 = vdwg.mxu0
      %v2046 = vunpack.c.l.b16 %v1844
      %v2047 = vunpack.c.l.b16 %v1845
      %v2048 = vunpack.c.l.b16 %v1846
      %v2049 = vunpack.c.l.b16 %v1847
      %v2050 = vunpack.c.l.b16 %v1848
      %v2051 = vunpack.c.l.b16 %v1849
      %v2052 = vunpack.c.l.b16 %v1850
      %v2053 = vunpack.c.l.b16 %v1851
      %v2054 = vunpack.c.l.b16 %v1852
      %v2055 = vunpack.c.l.b16 %v1853
      %v2056 = vunpack.c.l.b16 %v1854
      %v2057 = vunpack.c.l.b16 %v1855
      %v2058 = vunpack.c.l.b16 %v1856
      %v2059 = vunpack.c.l.b16 %v1857
      %v2060 = vunpack.c.l.b16 %v1858
      %v2061 = vunpack.c.l.b16 %v1859
      %v2062 = vpack.c.b16 %v2047, %v2046
      %v2063 = vpack.c.b16 %v2049, %v2048
      %v2064 = vpack.c.b16 %v2051, %v2050
      %v2065 = vpack.c.b16 %v2053, %v2052
      %v2066 = vpack.c.b16 %v2055, %v2054
      %v2067 = vpack.c.b16 %v2057, %v2056
      %v2068 = vpack.c.b16 %v2059, %v2058
      %v2069 = vpack.c.b16 %v2061, %v2060
      %2078 = vmatprep.subr.bf16.mxu0 0
      %2079 = vmatpush1.bf16.msra.mxu0 %v2062
      %2080 = vmatprep.subr.bf16.mxu0 0
      %2081 = vmatpush1.bf16.msra.mxu0 %v2063
      %2082 = vmatprep.subr.bf16.mxu0 0
      %2083 = vmatpush1.bf16.msra.mxu0 %v2064
      %2084 = vmatprep.subr.bf16.mxu0 0
      %2085 = vmatpush1.bf16.msra.mxu0 %v2065
      %2086 = vmatprep.subr.bf16.mxu0 0
      %2087 = vmatpush1.bf16.msra.mxu0 %v2066
      %2088 = vmatprep.subr.bf16.mxu0 0
      %2089 = vmatpush1.bf16.msra.mxu0 %v2067
      %2090 = vmatprep.subr.bf16.mxu0 0
      %2091 = vmatpush1.bf16.msra.mxu0 %v2068
      %2092 = vmatprep.subr.bf16.mxu0 0
      %2093 = vmatpush1.bf16.msra.mxu0 %v2069
      %2094 = vmatprep.subr.bf16.mxu0 0
      %2095 = vmatpush1.bf16.msra.mxu0 0
      %2096 = vmatprep.subr.bf16.mxu0 0
      %2097 = vmatpush1.bf16.msra.mxu0 0
      %2098 = vmatprep.subr.bf16.mxu0 0
      %2099 = vmatpush1.bf16.msra.mxu0 0
      %2100 = vmatprep.subr.bf16.mxu0 0
      %2101 = vmatpush1.bf16.msra.mxu0 0
      %2102 = vmatprep.subr.bf16.mxu0 0
      %2103 = vmatpush1.bf16.msra.mxu0 0
      %2104 = vmatprep.subr.bf16.mxu0 0
      %2105 = vmatpush1.bf16.msra.mxu0 0
      %2106 = vmatprep.subr.bf16.mxu0 0
      %2107 = vmatpush1.bf16.msra.mxu0 0
      %2108 = vmatprep.subr.bf16.mxu0 0
      %2109 = vmatpush1.bf16.msra.mxu0 0
      %2110 = vmatprep.mubr.bf16.mxu0 0
      %2111 = vmatmul.mubr.bf16.gmra.mrb[0].mxu0 %v1836
      %v2112 = vpop.f32.mrb[0].mxu0
      %v2113 = vadd.f32 %v1968, %v2112
      %v2114 = vpop.f32.mrb[0].mxu0
      %v2115 = vpop.f32.mrb[0].mxu0
      %v2116 = vadd.f32 %v1971, %v2115
      %v2117 = vpop.f32.mrb[0].mxu0
      %2118 = vmatprep.mubr.bf16.mxu0 0
      %2119 = vmatmul.mubr.bf16.gmra.mrb[0].mxu0 %v1837
      %v2120 = vpop.f32.mrb[0].mxu0
      %v2121 = vadd.f32 %v1976, %v2120
      %v2122 = vpop.f32.mrb[0].mxu0
      %v2123 = vpop.f32.mrb[0].mxu0
      %v2124 = vadd.f32 %v1979, %v2123
      %v2125 = vpop.f32.mrb[0].mxu0
      %2126 = vmatprep.mubr.bf16.mxu0 0
      %2127 = vmatmul.mubr.bf16.gmra.mrb[0].mxu0 %v1838
      %v2128 = vpop.f32.mrb[0].mxu0
      %v2129 = vadd.f32 %v1984, %v2128
      %v2130 = vpop.f32.mrb[0].mxu0
      %v2131 = vpop.f32.mrb[0].mxu0
      %v2132 = vadd.f32 %v1987, %v2131
      %v2133 = vpop.f32.mrb[0].mxu0
      %2134 = vmatprep.mubr.bf16.mxu0 0
      %2135 = vmatmul.mubr.bf16.gmra.mrb[0].mxu0 %v1839
      %v2136 = vpop.f32.mrb[0].mxu0
      %v2137 = vadd.f32 %v1992, %v2136
      %v2138 = vpop.f32.mrb[0].mxu0
      %v2139 = vpop.f32.mrb[0].mxu0
      %v2140 = vadd.f32 %v1995, %v2139
      %v2141 = vpop.f32.mrb[0].mxu0
      %2142 = vmatprep.mubr.bf16.mxu0 0
      %2143 = vmatmul.mubr.bf16.gmra.mrb[0].mxu0 %v1840
      %v2144 = vpop.f32.mrb[0].mxu0
      %v2145 = vadd.f32 %v2000, %v2144
      %v2146 = vpop.f32.mrb[0].mxu0
      %v2147 = vpop.f32.mrb[0].mxu0
      %v2148 = vadd.f32 %v2003, %v2147
      %v2149 = vpop.f32.mrb[0].mxu0
      %2150 = vmatprep.mubr.bf16.mxu0 0
      %2151 = vmatmul.mubr.bf16.gmra.mrb[0].mxu0 %v1841
      %v2152 = vpop.f32.mrb[0].mxu0
      %v2153 = vadd.f32 %v2008, %v2152
      %v2154 = vpop.f32.mrb[0].mxu0
      %v2155 = vpop.f32.mrb[0].mxu0
      %v2156 = vadd.f32 %v2011, %v2155
      %v2157 = vpop.f32.mrb[0].mxu0
      %2158 = vmatprep.mubr.bf16.mxu0 0
      %2159 = vmatmul.mubr.bf16.gmra.mrb[0].mxu0 %v1842
      %v2160 = vpop.f32.mrb[0].mxu0
      %v2161 = vadd.f32 %v2016, %v2160
      %v2162 = vpop.f32.mrb[0].mxu0
      %v2163 = vpop.f32.mrb[0].mxu0
      %v2164 = vadd.f32 %v2019, %v2163
      %v2165 = vpop.f32.mrb[0].mxu0
      %2166 = vmatprep.mubr.bf16.mxu0 0
      %2167 = vmatmul.mubr.bf16.gmra.mrb[0].mxu0 %v1843
      %v2168 = vpop.f32.mrb[0].mxu0
      %v2169 = vadd.f32 %v2024, %v2168
      %v2170 = vpop.f32.mrb[0].mxu0
      %v2171 = vpop.f32.mrb[0].mxu0
      %v2172 = vadd.f32 %v2027, %v2171
      %v2173 = vpop.f32.mrb[0].mxu0
      %2174 = vdwg.mxu0
      %v2175 = vld [vmem:[%s1825] sm:$0xff]
      %v2176 = vld [vmem:[%s1825 + $0x8] sm:$0xff]
      %v2177 = vld [vmem:[%s1825 + $0x10] sm:$0xff]
      %v2178 = vld [vmem:[%s1825 + $0x18] sm:$0xff]
      %v2179 = vld [vmem:[%s1825 + $0x20] sm:$0xff]
      %v2180 = vld [vmem:[%s1825 + $0x28] sm:$0xff]
      %v2181 = vld [vmem:[%s1825 + $0x30] sm:$0xff]
      %v2182 = vld [vmem:[%s1825 + $0x38] sm:$0xff]
      %s2183 = scalar_lea.vmem %s6, 128
      %v2184 = vld [vmem:[%s2183] sm:$0xf]
      %v2185 = vld [vmem:[%s2183 + $0x4] sm:$0xf]
      %v2186 = vld [vmem:[%s2183 + $0x8] sm:$0xf]
      %v2187 = vld [vmem:[%s2183 + $0xc] sm:$0xf]
      %v2188 = vld [vmem:[%s2183 + $0x10] sm:$0xf]
      %v2189 = vld [vmem:[%s2183 + $0x14] sm:$0xf]
      %v2190 = vld [vmem:[%s2183 + $0x18] sm:$0xf]
      %v2191 = vld [vmem:[%s2183 + $0x1c] sm:$0xf]
      %v2192 = vld [vmem:[%s2183 + $0x20] sm:$0xf]
      %v2193 = vld [vmem:[%s2183 + $0x24] sm:$0xf]
      %v2194 = vld [vmem:[%s2183 + $0x28] sm:$0xf]
      %v2195 = vld [vmem:[%s2183 + $0x2c] sm:$0xf]
      %v2196 = vld [vmem:[%s2183 + $0x30] sm:$0xf]
      %v2197 = vld [vmem:[%s2183 + $0x34] sm:$0xf]
      %v2198 = vld [vmem:[%s2183 + $0x38] sm:$0xf]
      %v2199 = vld [vmem:[%s2183 + $0x3c] sm:$0xf]
      %v2216 = vunpack.c.l.b16 %v2184
      %v2217 = vunpack.c.l.b16 %v2185
      %v2218 = vunpack.c.l.b16 %v2186
      %v2219 = vunpack.c.l.b16 %v2187
      %v2220 = vunpack.c.l.b16 %v2188
      %v2221 = vunpack.c.l.b16 %v2189
      %v2222 = vunpack.c.l.b16 %v2190
      %v2223 = vunpack.c.l.b16 %v2191
      %v2224 = vunpack.c.l.b16 %v2192
      %v2225 = vunpack.c.l.b16 %v2193
      %v2226 = vunpack.c.l.b16 %v2194
      %v2227 = vunpack.c.l.b16 %v2195
      %v2228 = vunpack.c.l.b16 %v2196
      %v2229 = vunpack.c.l.b16 %v2197
      %v2230 = vunpack.c.l.b16 %v2198
      %v2231 = vunpack.c.l.b16 %v2199
      %v2232 = vpack.c.b16 %v2217, %v2216
      %v2233 = vpack.c.b16 %v2219, %v2218
      %v2234 = vpack.c.b16 %v2221, %v2220
      %v2235 = vpack.c.b16 %v2223, %v2222
      %v2236 = vpack.c.b16 %v2225, %v2224
      %v2237 = vpack.c.b16 %v2227, %v2226
      %v2238 = vpack.c.b16 %v2229, %v2228
      %v2239 = vpack.c.b16 %v2231, %v2230
      %2248 = vmatprep.subr.bf16.mxu0 0
      %2249 = vmatpush1.bf16.msra.mxu0 %v2232
      %2250 = vmatprep.subr.bf16.mxu0 0
      %2251 = vmatpush1.bf16.msra.mxu0 %v2233
      %2252 = vmatprep.subr.bf16.mxu0 0
      %2253 = vmatpush1.bf16.msra.mxu0 %v2234
      %2254 = vmatprep.subr.bf16.mxu0 0
      %2255 = vmatpush1.bf16.msra.mxu0 %v2235
      %2256 = vmatprep.subr.bf16.mxu0 0
      %2257 = vmatpush1.bf16.msra.mxu0 %v2236
      %2258 = vmatprep.subr.bf16.mxu0 0
      %2259 = vmatpush1.bf16.msra.mxu0 %v2237
      %2260 = vmatprep.subr.bf16.mxu0 0
      %2261 = vmatpush1.bf16.msra.mxu0 %v2238
      %2262 = vmatprep.subr.bf16.mxu0 0
      %2263 = vmatpush1.bf16.msra.mxu0 %v2239
      %2264 = vmatprep.subr.bf16.mxu0 0
      %2265 = vmatpush1.bf16.msra.mxu0 0
      %2266 = vmatprep.subr.bf16.mxu0 0
      %2267 = vmatpush1.bf16.msra.mxu0 0
      %2268 = vmatprep.subr.bf16.mxu0 0
      %2269 = vmatpush1.bf16.msra.mxu0 0
      %2270 = vmatprep.subr.bf16.mxu0 0
      %2271 = vmatpush1.bf16.msra.mxu0 0
      %2272 = vmatprep.subr.bf16.mxu0 0
      %2273 = vmatpush1.bf16.msra.mxu0 0
      %2274 = vmatprep.subr.bf16.mxu0 0
      %2275 = vmatpush1.bf16.msra.mxu0 0
      %2276 = vmatprep.subr.bf16.mxu0 0
      %2277 = vmatpush1.bf16.msra.mxu0 0
      %2278 = vmatprep.subr.bf16.mxu0 0
      %2279 = vmatpush1.bf16.msra.mxu0 0
      %2280 = vmatprep.mubr.bf16.mxu0 0
      %2281 = vmatmul.mubr.bf16.gmra.mrb[0].mxu0 %v2175
      %v2282 = vpop.f32.mrb[0].mxu0
      %v2283 = vadd.f32 0.0, %v2282
      %v2284 = vpop.f32.mrb[0].mxu0
      %v2285 = vpop.f32.mrb[0].mxu0
      %v2286 = vadd.f32 0.0, %v2285
      %v2287 = vpop.f32.mrb[0].mxu0
      %2288 = vmatprep.mubr.bf16.mxu0 0
      %2289 = vmatmul.mubr.bf16.gmra.mrb[0].mxu0 %v2176
      %v2290 = vpop.f32.mrb[0].mxu0
      %v2291 = vadd.f32 0.0, %v2290
      %v2292 = vpop.f32.mrb[0].mxu0
      %v2293 = vpop.f32.mrb[0].mxu0
      %v2294 = vadd.f32 0.0, %v2293
      %v2295 = vpop.f32.mrb[0].mxu0
      %2296 = vmatprep.mubr.bf16.mxu0 0
      %2297 = vmatmul.mubr.bf16.gmra.mrb[0].mxu0 %v2177
      %v2298 = vpop.f32.mrb[0].mxu0
      %v2299 = vadd.f32 0.0, %v2298
      %v2300 = vpop.f32.mrb[0].mxu0
      %v2301 = vpop.f32.mrb[0].mxu0
      %v2302 = vadd.f32 0.0, %v2301
      %v2303 = vpop.f32.mrb[0].mxu0
      %2304 = vmatprep.mubr.bf16.mxu0 0
      %2305 = vmatmul.mubr.bf16.gmra.mrb[0].mxu0 %v2178
      %v2306 = vpop.f32.mrb[0].mxu0
      %v2307 = vadd.f32 0.0, %v2306
      %v2308 = vpop.f32.mrb[0].mxu0
      %v2309 = vpop.f32.mrb[0].mxu0
      %v2310 = vadd.f32 0.0, %v2309
      %v2311 = vpop.f32.mrb[0].mxu0
      %2312 = vmatprep.mubr.bf16.mxu0 0
      %2313 = vmatmul.mubr.bf16.gmra.mrb[0].mxu0 %v2179
      %v2314 = vpop.f32.mrb[0].mxu0
      %v2315 = vadd.f32 0.0, %v2314
      %v2316 = vpop.f32.mrb[0].mxu0
      %v2317 = vpop.f32.mrb[0].mxu0
      %v2318 = vadd.f32 0.0, %v2317
      %v2319 = vpop.f32.mrb[0].mxu0
      %2320 = vmatprep.mubr.bf16.mxu0 0
      %2321 = vmatmul.mubr.bf16.gmra.mrb[0].mxu0 %v2180
      %v2322 = vpop.f32.mrb[0].mxu0
      %v2323 = vadd.f32 0.0, %v2322
      %v2324 = vpop.f32.mrb[0].mxu0
      %v2325 = vpop.f32.mrb[0].mxu0
      %v2326 = vadd.f32 0.0, %v2325
      %v2327 = vpop.f32.mrb[0].mxu0
      %2328 = vmatprep.mubr.bf16.mxu0 0
      %2329 = vmatmul.mubr.bf16.gmra.mrb[0].mxu0 %v2181
      %v2330 = vpop.f32.mrb[0].mxu0
      %v2331 = vadd.f32 0.0, %v2330
      %v2332 = vpop.f32.mrb[0].mxu0
      %v2333 = vpop.f32.mrb[0].mxu0
      %v2334 = vadd.f32 0.0, %v2333
      %v2335 = vpop.f32.mrb[0].mxu0
      %2336 = vmatprep.mubr.bf16.mxu0 0
      %2337 = vmatmul.mubr.bf16.gmra.mrb[0].mxu0 %v2182
      %v2338 = vpop.f32.mrb[0].mxu0
      %v2339 = vadd.f32 0.0, %v2338
      %v2340 = vpop.f32.mrb[0].mxu0
      %v2341 = vpop.f32.mrb[0].mxu0
      %v2342 = vadd.f32 0.0, %v2341
      %v2343 = vpop.f32.mrb[0].mxu0
      %2344 = vdwg.mxu0
      %v2345 = vadd.f32 %v2113, %v2283
      %v2346 = vadd.f32 %v2116, %v2286
      %v2347 = vadd.f32 %v2121, %v2291
      %v2348 = vadd.f32 %v2124, %v2294
      %v2349 = vadd.f32 %v2129, %v2299
      %v2350 = vadd.f32 %v2132, %v2302
      %v2351 = vadd.f32 %v2137, %v2307
      %v2352 = vadd.f32 %v2140, %v2310
      %v2353 = vadd.f32 %v2145, %v2315
      %v2354 = vadd.f32 %v2148, %v2318
      %v2355 = vadd.f32 %v2153, %v2323
      %v2356 = vadd.f32 %v2156, %v2326
      %v2357 = vadd.f32 %v2161, %v2331
      %v2358 = vadd.f32 %v2164, %v2334
      %v2359 = vadd.f32 %v2169, %v2339
      %v2360 = vadd.f32 %v2172, %v2342
      %s2361 = scalar_lea.vmem [#allocation3], 8
      %v2362 = vld [vmem:[%s2361] sm:$0xff]
      %v2363 = vld [vmem:[%s2361 + $0x8] sm:$0xff]
      %v2364 = vld [vmem:[%s2361 + $0x10] sm:$0xff]
      %v2365 = vld [vmem:[%s2361 + $0x18] sm:$0xff]
      %v2366 = vld [vmem:[%s2361 + $0x20] sm:$0xff]
      %v2367 = vld [vmem:[%s2361 + $0x28] sm:$0xff]
      %v2368 = vld [vmem:[%s2361 + $0x30] sm:$0xff]
      %v2369 = vld [vmem:[%s2361 + $0x38] sm:$0xff]
      %s2370 = scalar_lea.vmem %s6, 192
      %v2371 = vld [vmem:[%s2370] sm:$0xf]
      %v2372 = vld [vmem:[%s2370 + $0x4] sm:$0xf]
      %v2373 = vld [vmem:[%s2370 + $0x8] sm:$0xf]
      %v2374 = vld [vmem:[%s2370 + $0xc] sm:$0xf]
      %v2375 = vld [vmem:[%s2370 + $0x10] sm:$0xf]
      %v2376 = vld [vmem:[%s2370 + $0x14] sm:$0xf]
      %v2377 = vld [vmem:[%s2370 + $0x18] sm:$0xf]
      %v2378 = vld [vmem:[%s2370 + $0x1c] sm:$0xf]
      %v2379 = vld [vmem:[%s2370 + $0x20] sm:$0xf]
      %v2380 = vld [vmem:[%s2370 + $0x24] sm:$0xf]
      %v2381 = vld [vmem:[%s2370 + $0x28] sm:$0xf]
      %v2382 = vld [vmem:[%s2370 + $0x2c] sm:$0xf]
      %v2383 = vld [vmem:[%s2370 + $0x30] sm:$0xf]
      %v2384 = vld [vmem:[%s2370 + $0x34] sm:$0xf]
      %v2385 = vld [vmem:[%s2370 + $0x38] sm:$0xf]
      %v2386 = vld [vmem:[%s2370 + $0x3c] sm:$0xf]
      %v2403 = vunpack.c.l.b16 %v2371
      %v2404 = vunpack.c.l.b16 %v2372
      %v2405 = vunpack.c.l.b16 %v2373
      %v2406 = vunpack.c.l.b16 %v2374
      %v2407 = vunpack.c.l.b16 %v2375
      %v2408 = vunpack.c.l.b16 %v2376
      %v2409 = vunpack.c.l.b16 %v2377
      %v2410 = vunpack.c.l.b16 %v2378
      %v2411 = vunpack.c.l.b16 %v2379
      %v2412 = vunpack.c.l.b16 %v2380
      %v2413 = vunpack.c.l.b16 %v2381
      %v2414 = vunpack.c.l.b16 %v2382
      %v2415 = vunpack.c.l.b16 %v2383
      %v2416 = vunpack.c.l.b16 %v2384
      %v2417 = vunpack.c.l.b16 %v2385
      %v2418 = vunpack.c.l.b16 %v2386
      %v2419 = vpack.c.b16 %v2404, %v2403
      %v2420 = vpack.c.b16 %v2406, %v2405
      %v2421 = vpack.c.b16 %v2408, %v2407
      %v2422 = vpack.c.b16 %v2410, %v2409
      %v2423 = vpack.c.b16 %v2412, %v2411
      %v2424 = vpack.c.b16 %v2414, %v2413
      %v2425 = vpack.c.b16 %v2416, %v2415
      %v2426 = vpack.c.b16 %v2418, %v2417
      %2435 = vmatprep.subr.bf16.mxu0 0
      %2436 = vmatpush1.bf16.msra.mxu0 %v2419
      %2437 = vmatprep.subr.bf16.mxu0 0
      %2438 = vmatpush1.bf16.msra.mxu0 %v2420
      %2439 = vmatprep.subr.bf16.mxu0 0
      %2440 = vmatpush1.bf16.msra.mxu0 %v2421
      %2441 = vmatprep.subr.bf16.mxu0 0
      %2442 = vmatpush1.bf16.msra.mxu0 %v2422
      %2443 = vmatprep.subr.bf16.mxu0 0
      %2444 = vmatpush1.bf16.msra.mxu0 %v2423
      %2445 = vmatprep.subr.bf16.mxu0 0
      %2446 = vmatpush1.bf16.msra.mxu0 %v2424
      %2447 = vmatprep.subr.bf16.mxu0 0
      %2448 = vmatpush1.bf16.msra.mxu0 %v2425
      %2449 = vmatprep.subr.bf16.mxu0 0
      %2450 = vmatpush1.bf16.msra.mxu0 %v2426
      %2451 = vmatprep.subr.bf16.mxu0 0
      %2452 = vmatpush1.bf16.msra.mxu0 0
      %2453 = vmatprep.subr.bf16.mxu0 0
      %2454 = vmatpush1.bf16.msra.mxu0 0
      %2455 = vmatprep.subr.bf16.mxu0 0
      %2456 = vmatpush1.bf16.msra.mxu0 0
      %2457 = vmatprep.subr.bf16.mxu0 0
      %2458 = vmatpush1.bf16.msra.mxu0 0
      %2459 = vmatprep.subr.bf16.mxu0 0
      %2460 = vmatpush1.bf16.msra.mxu0 0
      %2461 = vmatprep.subr.bf16.mxu0 0
      %2462 = vmatpush1.bf16.msra.mxu0 0
      %2463 = vmatprep.subr.bf16.mxu0 0
      %2464 = vmatpush1.bf16.msra.mxu0 0
      %2465 = vmatprep.subr.bf16.mxu0 0
      %2466 = vmatpush1.bf16.msra.mxu0 0
      %2467 = vmatprep.mubr.bf16.mxu0 0
      %2468 = vmatmul.mubr.bf16.gmra.mrb[0].mxu0 %v2362
      %v2469 = vpop.f32.mrb[0].mxu0
      %v2470 = vadd.f32 0.0, %v2469
      %v2471 = vpop.f32.mrb[0].mxu0
      %v2472 = vpop.f32.mrb[0].mxu0
      %v2473 = vadd.f32 0.0, %v2472
      %v2474 = vpop.f32.mrb[0].mxu0
      %2475 = vmatprep.mubr.bf16.mxu0 0
      %2476 = vmatmul.mubr.bf16.gmra.mrb[0].mxu0 %v2363
      %v2477 = vpop.f32.mrb[0].mxu0
      %v2478 = vadd.f32 0.0, %v2477
      %v2479 = vpop.f32.mrb[0].mxu0
      %v2480 = vpop.f32.mrb[0].mxu0
      %v2481 = vadd.f32 0.0, %v2480
      %v2482 = vpop.f32.mrb[0].mxu0
      %2483 = vmatprep.mubr.bf16.mxu0 0
      %2484 = vmatmul.mubr.bf16.gmra.mrb[0].mxu0 %v2364
      %v2485 = vpop.f32.mrb[0].mxu0
      %v2486 = vadd.f32 0.0, %v2485
      %v2487 = vpop.f32.mrb[0].mxu0
      %v2488 = vpop.f32.mrb[0].mxu0
      %v2489 = vadd.f32 0.0, %v2488
      %v2490 = vpop.f32.mrb[0].mxu0
      %2491 = vmatprep.mubr.bf16.mxu0 0
      %2492 = vmatmul.mubr.bf16.gmra.mrb[0].mxu0 %v2365
      %v2493 = vpop.f32.mrb[0].mxu0
      %v2494 = vadd.f32 0.0, %v2493
      %v2495 = vpop.f32.mrb[0].mxu0
      %v2496 = vpop.f32.mrb[0].mxu0
      %v2497 = vadd.f32 0.0, %v2496
      %v2498 = vpop.f32.mrb[0].mxu0
      %2499 = vmatprep.mubr.bf16.mxu0 0
      %2500 = vmatmul.mubr.bf16.gmra.mrb[0].mxu0 %v2366
      %v2501 = vpop.f32.mrb[0].mxu0
      %v2502 = vadd.f32 0.0, %v2501
      %v2503 = vpop.f32.mrb[0].mxu0
      %v2504 = vpop.f32.mrb[0].mxu0
      %v2505 = vadd.f32 0.0, %v2504
      %v2506 = vpop.f32.mrb[0].mxu0
      %2507 = vmatprep.mubr.bf16.mxu0 0
      %2508 = vmatmul.mubr.bf16.gmra.mrb[0].mxu0 %v2367
      %v2509 = vpop.f32.mrb[0].mxu0
      %v2510 = vadd.f32 0.0, %v2509
      %v2511 = vpop.f32.mrb[0].mxu0
      %v2512 = vpop.f32.mrb[0].mxu0
      %v2513 = vadd.f32 0.0, %v2512
      %v2514 = vpop.f32.mrb[0].mxu0
      %2515 = vmatprep.mubr.bf16.mxu0 0
      %2516 = vmatmul.mubr.bf16.gmra.mrb[0].mxu0 %v2368
      %v2517 = vpop.f32.mrb[0].mxu0
      %v2518 = vadd.f32 0.0, %v2517
      %v2519 = vpop.f32.mrb[0].mxu0
      %v2520 = vpop.f32.mrb[0].mxu0
      %v2521 = vadd.f32 0.0, %v2520
      %v2522 = vpop.f32.mrb[0].mxu0
      %2523 = vmatprep.mubr.bf16.mxu0 0
      %2524 = vmatmul.mubr.bf16.gmra.mrb[0].mxu0 %v2369
      %v2525 = vpop.f32.mrb[0].mxu0
      %v2526 = vadd.f32 0.0, %v2525
      %v2527 = vpop.f32.mrb[0].mxu0
      %v2528 = vpop.f32.mrb[0].mxu0
      %v2529 = vadd.f32 0.0, %v2528
      %v2530 = vpop.f32.mrb[0].mxu0
      %2531 = vdwg.mxu0
      %v2532 = vadd.f32 %v2345, %v2470
      %v2533 = vadd.f32 %v2346, %v2473
      %v2534 = vadd.f32 %v2347, %v2478
      %v2535 = vadd.f32 %v2348, %v2481
      %v2536 = vadd.f32 %v2349, %v2486
      %v2537 = vadd.f32 %v2350, %v2489
      %v2538 = vadd.f32 %v2351, %v2494
      %v2539 = vadd.f32 %v2352, %v2497
      %v2540 = vadd.f32 %v2353, %v2502
      %v2541 = vadd.f32 %v2354, %v2505
      %v2542 = vadd.f32 %v2355, %v2510
      %v2543 = vadd.f32 %v2356, %v2513
      %v2544 = vadd.f32 %v2357, %v2518
      %v2545 = vadd.f32 %v2358, %v2521
      %v2546 = vadd.f32 %v2359, %v2526
      %v2547 = vadd.f32 %v2360, %v2529
      %s2548 = scalar_lea.vmem [#allocation3], 88
      %v2549 = vld [vmem:[%s2548] sm:$0xff]
      %v2550 = vld [vmem:[%s2548 + $0x8] sm:$0xff]
      %v2551 = vld [vmem:[%s2548 + $0x10] sm:$0xff]
      %v2552 = vld [vmem:[%s2548 + $0x18] sm:$0xff]
      %v2553 = vld [vmem:[%s2548 + $0x20] sm:$0xff]
      %v2554 = vld [vmem:[%s2548 + $0x28] sm:$0xff]
      %v2555 = vld [vmem:[%s2548 + $0x30] sm:$0xff]
      %v2556 = vld [vmem:[%s2548 + $0x38] sm:$0xff]
      %s2557 = scalar_lea.vmem %s6, 256
      %v2558 = vld [vmem:[%s2557] sm:$0xf]
      %v2559 = vld [vmem:[%s2557 + $0x4] sm:$0xf]
      %v2560 = vld [vmem:[%s2557 + $0x8] sm:$0xf]
      %v2561 = vld [vmem:[%s2557 + $0xc] sm:$0xf]
      %v2562 = vld [vmem:[%s2557 + $0x10] sm:$0xf]
      %v2563 = vld [vmem:[%s2557 + $0x14] sm:$0xf]
      %v2564 = vld [vmem:[%s2557 + $0x18] sm:$0xf]
      %v2565 = vld [vmem:[%s2557 + $0x1c] sm:$0xf]
      %v2566 = vld [vmem:[%s2557 + $0x20] sm:$0xf]
      %v2567 = vld [vmem:[%s2557 + $0x24] sm:$0xf]
      %v2568 = vld [vmem:[%s2557 + $0x28] sm:$0xf]
      %v2569 = vld [vmem:[%s2557 + $0x2c] sm:$0xf]
      %v2570 = vld [vmem:[%s2557 + $0x30] sm:$0xf]
      %v2571 = vld [vmem:[%s2557 + $0x34] sm:$0xf]
      %v2572 = vld [vmem:[%s2557 + $0x38] sm:$0xf]
      %v2573 = vld [vmem:[%s2557 + $0x3c] sm:$0xf]
      %v2590 = vunpack.c.l.b16 %v2558
      %v2591 = vunpack.c.l.b16 %v2559
      %v2592 = vunpack.c.l.b16 %v2560
      %v2593 = vunpack.c.l.b16 %v2561
      %v2594 = vunpack.c.l.b16 %v2562
      %v2595 = vunpack.c.l.b16 %v2563
      %v2596 = vunpack.c.l.b16 %v2564
      %v2597 = vunpack.c.l.b16 %v2565
      %v2598 = vunpack.c.l.b16 %v2566
      %v2599 = vunpack.c.l.b16 %v2567
      %v2600 = vunpack.c.l.b16 %v2568
      %v2601 = vunpack.c.l.b16 %v2569
      %v2602 = vunpack.c.l.b16 %v2570
      %v2603 = vunpack.c.l.b16 %v2571
      %v2604 = vunpack.c.l.b16 %v2572
      %v2605 = vunpack.c.l.b16 %v2573
      %v2606 = vpack.c.b16 %v2591, %v2590
      %v2607 = vpack.c.b16 %v2593, %v2592
      %v2608 = vpack.c.b16 %v2595, %v2594
      %v2609 = vpack.c.b16 %v2597, %v2596
      %v2610 = vpack.c.b16 %v2599, %v2598
      %v2611 = vpack.c.b16 %v2601, %v2600
      %v2612 = vpack.c.b16 %v2603, %v2602
      %v2613 = vpack.c.b16 %v2605, %v2604
      %2622 = vmatprep.subr.bf16.mxu0 0
      %2623 = vmatpush1.bf16.msra.mxu0 %v2606
      %2624 = vmatprep.subr.bf16.mxu0 0
      %2625 = vmatpush1.bf16.msra.mxu0 %v2607
      %2626 = vmatprep.subr.bf16.mxu0 0
      %2627 = vmatpush1.bf16.msra.mxu0 %v2608
      %2628 = vmatprep.subr.bf16.mxu0 0
      %2629 = vmatpush1.bf16.msra.mxu0 %v2609
      %2630 = vmatprep.subr.bf16.mxu0 0
      %2631 = vmatpush1.bf16.msra.mxu0 %v2610
      %2632 = vmatprep.subr.bf16.mxu0 0
      %2633 = vmatpush1.bf16.msra.mxu0 %v2611
      %2634 = vmatprep.subr.bf16.mxu0 0
      %2635 = vmatpush1.bf16.msra.mxu0 %v2612
      %2636 = vmatprep.subr.bf16.mxu0 0
      %2637 = vmatpush1.bf16.msra.mxu0 %v2613
      %2638 = vmatprep.subr.bf16.mxu0 0
      %2639 = vmatpush1.bf16.msra.mxu0 0
      %2640 = vmatprep.subr.bf16.mxu0 0
      %2641 = vmatpush1.bf16.msra.mxu0 0
      %2642 = vmatprep.subr.bf16.mxu0 0
      %2643 = vmatpush1.bf16.msra.mxu0 0
      %2644 = vmatprep.subr.bf16.mxu0 0
      %2645 = vmatpush1.bf16.msra.mxu0 0
      %2646 = vmatprep.subr.bf16.mxu0 0
      %2647 = vmatpush1.bf16.msra.mxu0 0
      %2648 = vmatprep.subr.bf16.mxu0 0
      %2649 = vmatpush1.bf16.msra.mxu0 0
      %2650 = vmatprep.subr.bf16.mxu0 0
      %2651 = vmatpush1.bf16.msra.mxu0 0
      %2652 = vmatprep.subr.bf16.mxu0 0
      %2653 = vmatpush1.bf16.msra.mxu0 0
      %2654 = vmatprep.mubr.bf16.mxu0 0
      %2655 = vmatmul.mubr.bf16.gmra.mrb[0].mxu0 %v2549
      %v2656 = vpop.f32.mrb[0].mxu0
      %v2657 = vadd.f32 0.0, %v2656
      %v2658 = vpop.f32.mrb[0].mxu0
      %v2659 = vpop.f32.mrb[0].mxu0
      %v2660 = vadd.f32 0.0, %v2659
      %v2661 = vpop.f32.mrb[0].mxu0
      %2662 = vmatprep.mubr.bf16.mxu0 0
      %2663 = vmatmul.mubr.bf16.gmra.mrb[0].mxu0 %v2550
      %v2664 = vpop.f32.mrb[0].mxu0
      %v2665 = vadd.f32 0.0, %v2664
      %v2666 = vpop.f32.mrb[0].mxu0
      %v2667 = vpop.f32.mrb[0].mxu0
      %v2668 = vadd.f32 0.0, %v2667
      %v2669 = vpop.f32.mrb[0].mxu0
      %2670 = vmatprep.mubr.bf16.mxu0 0
      %2671 = vmatmul.mubr.bf16.gmra.mrb[0].mxu0 %v2551
      %v2672 = vpop.f32.mrb[0].mxu0
      %v2673 = vadd.f32 0.0, %v2672
      %v2674 = vpop.f32.mrb[0].mxu0
      %v2675 = vpop.f32.mrb[0].mxu0
      %v2676 = vadd.f32 0.0, %v2675
      %v2677 = vpop.f32.mrb[0].mxu0
      %2678 = vmatprep.mubr.bf16.mxu0 0
      %2679 = vmatmul.mubr.bf16.gmra.mrb[0].mxu0 %v2552
      %v2680 = vpop.f32.mrb[0].mxu0
      %v2681 = vadd.f32 0.0, %v2680
      %v2682 = vpop.f32.mrb[0].mxu0
      %v2683 = vpop.f32.mrb[0].mxu0
      %v2684 = vadd.f32 0.0, %v2683
      %v2685 = vpop.f32.mrb[0].mxu0
      %2686 = vmatprep.mubr.bf16.mxu0 0
      %2687 = vmatmul.mubr.bf16.gmra.mrb[0].mxu0 %v2553
      %v2688 = vpop.f32.mrb[0].mxu0
      %v2689 = vadd.f32 0.0, %v2688
      %v2690 = vpop.f32.mrb[0].mxu0
      %v2691 = vpop.f32.mrb[0].mxu0
      %v2692 = vadd.f32 0.0, %v2691
      %v2693 = vpop.f32.mrb[0].mxu0
      %2694 = vmatprep.mubr.bf16.mxu0 0
      %2695 = vmatmul.mubr.bf16.gmra.mrb[0].mxu0 %v2554
      %v2696 = vpop.f32.mrb[0].mxu0
      %v2697 = vadd.f32 0.0, %v2696
      %v2698 = vpop.f32.mrb[0].mxu0
      %v2699 = vpop.f32.mrb[0].mxu0
      %v2700 = vadd.f32 0.0, %v2699
      %v2701 = vpop.f32.mrb[0].mxu0
      %2702 = vmatprep.mubr.bf16.mxu0 0
      %2703 = vmatmul.mubr.bf16.gmra.mrb[0].mxu0 %v2555
      %v2704 = vpop.f32.mrb[0].mxu0
      %v2705 = vadd.f32 0.0, %v2704
      %v2706 = vpop.f32.mrb[0].mxu0
      %v2707 = vpop.f32.mrb[0].mxu0
      %v2708 = vadd.f32 0.0, %v2707
      %v2709 = vpop.f32.mrb[0].mxu0
      %2710 = vmatprep.mubr.bf16.mxu0 0
      %2711 = vmatmul.mubr.bf16.gmra.mrb[0].mxu0 %v2556
      %v2712 = vpop.f32.mrb[0].mxu0
      %v2713 = vadd.f32 0.0, %v2712
      %v2714 = vpop.f32.mrb[0].mxu0
      %v2715 = vpop.f32.mrb[0].mxu0
      %v2716 = vadd.f32 0.0, %v2715
      %v2717 = vpop.f32.mrb[0].mxu0
      %2718 = vdwg.mxu0
      %v2719 = vadd.f32 %v2532, %v2657
      %v2720 = vadd.f32 %v2533, %v2660
      %v2721 = vadd.f32 %v2534, %v2665
      %v2722 = vadd.f32 %v2535, %v2668
      %v2723 = vadd.f32 %v2536, %v2673
      %v2724 = vadd.f32 %v2537, %v2676
      %v2725 = vadd.f32 %v2538, %v2681
      %v2726 = vadd.f32 %v2539, %v2684
      %v2727 = vadd.f32 %v2540, %v2689
      %v2728 = vadd.f32 %v2541, %v2692
      %v2729 = vadd.f32 %v2542, %v2697
      %v2730 = vadd.f32 %v2543, %v2700
      %v2731 = vadd.f32 %v2544, %v2705
      %v2732 = vadd.f32 %v2545, %v2708
      %v2733 = vadd.f32 %v2546, %v2713
      %v2734 = vadd.f32 %v2547, %v2716
      %s2735 = scalar_lea.vmem [#allocation3], 168
      %v2736 = vld [vmem:[%s2735] sm:$0xff]
      %v2737 = vld [vmem:[%s2735 + $0x8] sm:$0xff]
      %v2738 = vld [vmem:[%s2735 + $0x10] sm:$0xff]
      %v2739 = vld [vmem:[%s2735 + $0x18] sm:$0xff]
      %v2740 = vld [vmem:[%s2735 + $0x20] sm:$0xff]
      %v2741 = vld [vmem:[%s2735 + $0x28] sm:$0xff]
      %v2742 = vld [vmem:[%s2735 + $0x30] sm:$0xff]
      %v2743 = vld [vmem:[%s2735 + $0x38] sm:$0xff]
      %s2744 = scalar_lea.vmem %s6, 320
      %v2745 = vld [vmem:[%s2744] sm:$0xf]
      %v2746 = vld [vmem:[%s2744 + $0x4] sm:$0xf]
      %v2747 = vld [vmem:[%s2744 + $0x8] sm:$0xf]
      %v2748 = vld [vmem:[%s2744 + $0xc] sm:$0xf]
      %v2749 = vld [vmem:[%s2744 + $0x10] sm:$0xf]
      %v2750 = vld [vmem:[%s2744 + $0x14] sm:$0xf]
      %v2751 = vld [vmem:[%s2744 + $0x18] sm:$0xf]
      %v2752 = vld [vmem:[%s2744 + $0x1c] sm:$0xf]
      %v2753 = vld [vmem:[%s2744 + $0x20] sm:$0xf]
      %v2754 = vld [vmem:[%s2744 + $0x24] sm:$0xf]
      %v2755 = vld [vmem:[%s2744 + $0x28] sm:$0xf]
      %v2756 = vld [vmem:[%s2744 + $0x2c] sm:$0xf]
      %v2757 = vld [vmem:[%s2744 + $0x30] sm:$0xf]
      %v2758 = vld [vmem:[%s2744 + $0x34] sm:$0xf]
      %v2759 = vld [vmem:[%s2744 + $0x38] sm:$0xf]
      %v2760 = vld [vmem:[%s2744 + $0x3c] sm:$0xf]
      %v2777 = vunpack.c.l.b16 %v2745
      %v2778 = vunpack.c.l.b16 %v2746
      %v2779 = vunpack.c.l.b16 %v2747
      %v2780 = vunpack.c.l.b16 %v2748
      %v2781 = vunpack.c.l.b16 %v2749
      %v2782 = vunpack.c.l.b16 %v2750
      %v2783 = vunpack.c.l.b16 %v2751
      %v2784 = vunpack.c.l.b16 %v2752
      %v2785 = vunpack.c.l.b16 %v2753
      %v2786 = vunpack.c.l.b16 %v2754
      %v2787 = vunpack.c.l.b16 %v2755
      %v2788 = vunpack.c.l.b16 %v2756
      %v2789 = vunpack.c.l.b16 %v2757
      %v2790 = vunpack.c.l.b16 %v2758
      %v2791 = vunpack.c.l.b16 %v2759
      %v2792 = vunpack.c.l.b16 %v2760
      %v2793 = vpack.c.b16 %v2778, %v2777
      %v2794 = vpack.c.b16 %v2780, %v2779
      %v2795 = vpack.c.b16 %v2782, %v2781
      %v2796 = vpack.c.b16 %v2784, %v2783
      %v2797 = vpack.c.b16 %v2786, %v2785
      %v2798 = vpack.c.b16 %v2788, %v2787
      %v2799 = vpack.c.b16 %v2790, %v2789
      %v2800 = vpack.c.b16 %v2792, %v2791
      %2809 = vmatprep.subr.bf16.mxu0 0
      %2810 = vmatpush1.bf16.msra.mxu0 %v2793
      %2811 = vmatprep.subr.bf16.mxu0 0
      %2812 = vmatpush1.bf16.msra.mxu0 %v2794
      %2813 = vmatprep.subr.bf16.mxu0 0
      %2814 = vmatpush1.bf16.msra.mxu0 %v2795
      %2815 = vmatprep.subr.bf16.mxu0 0
      %2816 = vmatpush1.bf16.msra.mxu0 %v2796
      %2817 = vmatprep.subr.bf16.mxu0 0
      %2818 = vmatpush1.bf16.msra.mxu0 %v2797
      %2819 = vmatprep.subr.bf16.mxu0 0
      %2820 = vmatpush1.bf16.msra.mxu0 %v2798
      %2821 = vmatprep.subr.bf16.mxu0 0
      %2822 = vmatpush1.bf16.msra.mxu0 %v2799
      %2823 = vmatprep.subr.bf16.mxu0 0
      %2824 = vmatpush1.bf16.msra.mxu0 %v2800
      %2825 = vmatprep.subr.bf16.mxu0 0
      %2826 = vmatpush1.bf16.msra.mxu0 0
      %2827 = vmatprep.subr.bf16.mxu0 0
      %2828 = vmatpush1.bf16.msra.mxu0 0
      %2829 = vmatprep.subr.bf16.mxu0 0
      %2830 = vmatpush1.bf16.msra.mxu0 0
      %2831 = vmatprep.subr.bf16.mxu0 0
      %2832 = vmatpush1.bf16.msra.mxu0 0
      %2833 = vmatprep.subr.bf16.mxu0 0
      %2834 = vmatpush1.bf16.msra.mxu0 0
      %2835 = vmatprep.subr.bf16.mxu0 0
      %2836 = vmatpush1.bf16.msra.mxu0 0
      %2837 = vmatprep.subr.bf16.mxu0 0
      %2838 = vmatpush1.bf16.msra.mxu0 0
      %2839 = vmatprep.subr.bf16.mxu0 0
      %2840 = vmatpush1.bf16.msra.mxu0 0
      %2841 = vmatprep.mubr.bf16.mxu0 0
      %2842 = vmatmul.mubr.bf16.gmra.mrb[0].mxu0 %v2736
      %v2843 = vpop.f32.mrb[0].mxu0
      %v2844 = vadd.f32 0.0, %v2843
      %v2845 = vpop.f32.mrb[0].mxu0
      %v2846 = vpop.f32.mrb[0].mxu0
      %v2847 = vadd.f32 0.0, %v2846
      %v2848 = vpop.f32.mrb[0].mxu0
      %2849 = vmatprep.mubr.bf16.mxu0 0
      %2850 = vmatmul.mubr.bf16.gmra.mrb[0].mxu0 %v2737
      %v2851 = vpop.f32.mrb[0].mxu0
      %v2852 = vadd.f32 0.0, %v2851
      %v2853 = vpop.f32.mrb[0].mxu0
      %v2854 = vpop.f32.mrb[0].mxu0
      %v2855 = vadd.f32 0.0, %v2854
      %v2856 = vpop.f32.mrb[0].mxu0
      %2857 = vmatprep.mubr.bf16.mxu0 0
      %2858 = vmatmul.mubr.bf16.gmra.mrb[0].mxu0 %v2738
      %v2859 = vpop.f32.mrb[0].mxu0
      %v2860 = vadd.f32 0.0, %v2859
      %v2861 = vpop.f32.mrb[0].mxu0
      %v2862 = vpop.f32.mrb[0].mxu0
      %v2863 = vadd.f32 0.0, %v2862
      %v2864 = vpop.f32.mrb[0].mxu0
      %2865 = vmatprep.mubr.bf16.mxu0 0
      %2866 = vmatmul.mubr.bf16.gmra.mrb[0].mxu0 %v2739
      %v2867 = vpop.f32.mrb[0].mxu0
      %v2868 = vadd.f32 0.0, %v2867
      %v2869 = vpop.f32.mrb[0].mxu0
      %v2870 = vpop.f32.mrb[0].mxu0
      %v2871 = vadd.f32 0.0, %v2870
      %v2872 = vpop.f32.mrb[0].mxu0
      %2873 = vmatprep.mubr.bf16.mxu0 0
      %2874 = vmatmul.mubr.bf16.gmra.mrb[0].mxu0 %v2740
      %v2875 = vpop.f32.mrb[0].mxu0
      %v2876 = vadd.f32 0.0, %v2875
      %v2877 = vpop.f32.mrb[0].mxu0
      %v2878 = vpop.f32.mrb[0].mxu0
      %v2879 = vadd.f32 0.0, %v2878
      %v2880 = vpop.f32.mrb[0].mxu0
      %2881 = vmatprep.mubr.bf16.mxu0 0
      %2882 = vmatmul.mubr.bf16.gmra.mrb[0].mxu0 %v2741
      %v2883 = vpop.f32.mrb[0].mxu0
      %v2884 = vadd.f32 0.0, %v2883
      %v2885 = vpop.f32.mrb[0].mxu0
      %v2886 = vpop.f32.mrb[0].mxu0
      %v2887 = vadd.f32 0.0, %v2886
      %v2888 = vpop.f32.mrb[0].mxu0
      %2889 = vmatprep.mubr.bf16.mxu0 0
      %2890 = vmatmul.mubr.bf16.gmra.mrb[0].mxu0 %v2742
      %v2891 = vpop.f32.mrb[0].mxu0
      %v2892 = vadd.f32 0.0, %v2891
      %v2893 = vpop.f32.mrb[0].mxu0
      %v2894 = vpop.f32.mrb[0].mxu0
      %v2895 = vadd.f32 0.0, %v2894
      %v2896 = vpop.f32.mrb[0].mxu0
      %2897 = vmatprep.mubr.bf16.mxu0 0
      %2898 = vmatmul.mubr.bf16.gmra.mrb[0].mxu0 %v2743
      %v2899 = vpop.f32.mrb[0].mxu0
      %v2900 = vadd.f32 0.0, %v2899
      %v2901 = vpop.f32.mrb[0].mxu0
      %v2902 = vpop.f32.mrb[0].mxu0
      %v2903 = vadd.f32 0.0, %v2902
      %v2904 = vpop.f32.mrb[0].mxu0
      %2905 = vdwg.mxu0
      %v2906 = vadd.f32 %v2719, %v2844
      %v2907 = vadd.f32 %v2720, %v2847
      %v2908 = vadd.f32 %v2721, %v2852
      %v2909 = vadd.f32 %v2722, %v2855
      %v2910 = vadd.f32 %v2723, %v2860
      %v2911 = vadd.f32 %v2724, %v2863
      %v2912 = vadd.f32 %v2725, %v2868
      %v2913 = vadd.f32 %v2726, %v2871
      %v2914 = vadd.f32 %v2727, %v2876
      %v2915 = vadd.f32 %v2728, %v2879
      %v2916 = vadd.f32 %v2729, %v2884
      %v2917 = vadd.f32 %v2730, %v2887
      %v2918 = vadd.f32 %v2731, %v2892
      %v2919 = vadd.f32 %v2732, %v2895
      %v2920 = vadd.f32 %v2733, %v2900
      %v2921 = vadd.f32 %v2734, %v2903
      %s2922 = scalar_lea.vmem [#allocation3], 16
      %v2923 = vld [vmem:[%s2922] sm:$0xff]
      %v2924 = vld [vmem:[%s2922 + $0x8] sm:$0xff]
      %v2925 = vld [vmem:[%s2922 + $0x10] sm:$0xff]
      %v2926 = vld [vmem:[%s2922 + $0x18] sm:$0xff]
      %v2927 = vld [vmem:[%s2922 + $0x20] sm:$0xff]
      %v2928 = vld [vmem:[%s2922 + $0x28] sm:$0xff]
      %v2929 = vld [vmem:[%s2922 + $0x30] sm:$0xff]
      %v2930 = vld [vmem:[%s2922 + $0x38] sm:$0xff]
      %s2931 = scalar_lea.vmem %s6, 384
      %v2932 = vld [vmem:[%s2931] sm:$0xf]
      %v2933 = vld [vmem:[%s2931 + $0x4] sm:$0xf]
      %v2934 = vld [vmem:[%s2931 + $0x8] sm:$0xf]
      %v2935 = vld [vmem:[%s2931 + $0xc] sm:$0xf]
      %v2936 = vld [vmem:[%s2931 + $0x10] sm:$0xf]
      %v2937 = vld [vmem:[%s2931 + $0x14] sm:$0xf]
      %v2938 = vld [vmem:[%s2931 + $0x18] sm:$0xf]
      %v2939 = vld [vmem:[%s2931 + $0x1c] sm:$0xf]
      %v2940 = vld [vmem:[%s2931 + $0x20] sm:$0xf]
      %v2941 = vld [vmem:[%s2931 + $0x24] sm:$0xf]
      %v2942 = vld [vmem:[%s2931 + $0x28] sm:$0xf]
      %v2943 = vld [vmem:[%s2931 + $0x2c] sm:$0xf]
      %v2944 = vld [vmem:[%s2931 + $0x30] sm:$0xf]
      %v2945 = vld [vmem:[%s2931 + $0x34] sm:$0xf]
      %v2946 = vld [vmem:[%s2931 + $0x38] sm:$0xf]
      %v2947 = vld [vmem:[%s2931 + $0x3c] sm:$0xf]
      %v2964 = vunpack.c.l.b16 %v2932
      %v2965 = vunpack.c.l.b16 %v2933
      %v2966 = vunpack.c.l.b16 %v2934
      %v2967 = vunpack.c.l.b16 %v2935
      %v2968 = vunpack.c.l.b16 %v2936
      %v2969 = vunpack.c.l.b16 %v2937
      %v2970 = vunpack.c.l.b16 %v2938
      %v2971 = vunpack.c.l.b16 %v2939
      %v2972 = vunpack.c.l.b16 %v2940
      %v2973 = vunpack.c.l.b16 %v2941
      %v2974 = vunpack.c.l.b16 %v2942
      %v2975 = vunpack.c.l.b16 %v2943
      %v2976 = vunpack.c.l.b16 %v2944
      %v2977 = vunpack.c.l.b16 %v2945
      %v2978 = vunpack.c.l.b16 %v2946
      %v2979 = vunpack.c.l.b16 %v2947
      %v2980 = vpack.c.b16 %v2965, %v2964
      %v2981 = vpack.c.b16 %v2967, %v2966
      %v2982 = vpack.c.b16 %v2969, %v2968
      %v2983 = vpack.c.b16 %v2971, %v2970
      %v2984 = vpack.c.b16 %v2973, %v2972
      %v2985 = vpack.c.b16 %v2975, %v2974
      %v2986 = vpack.c.b16 %v2977, %v2976
      %v2987 = vpack.c.b16 %v2979, %v2978
      %2996 = vmatprep.subr.bf16.mxu0 0
      %2997 = vmatpush1.bf16.msra.mxu0 %v2980
      %2998 = vmatprep.subr.bf16.mxu0 0
      %2999 = vmatpush1.bf16.msra.mxu0 %v2981
      %3000 = vmatprep.subr.bf16.mxu0 0
      %3001 = vmatpush1.bf16.msra.mxu0 %v2982
      %3002 = vmatprep.subr.bf16.mxu0 0
      %3003 = vmatpush1.bf16.msra.mxu0 %v2983
      %3004 = vmatprep.subr.bf16.mxu0 0
      %3005 = vmatpush1.bf16.msra.mxu0 %v2984
      %3006 = vmatprep.subr.bf16.mxu0 0
      %3007 = vmatpush1.bf16.msra.mxu0 %v2985
      %3008 = vmatprep.subr.bf16.mxu0 0
      %3009 = vmatpush1.bf16.msra.mxu0 %v2986
      %3010 = vmatprep.subr.bf16.mxu0 0
      %3011 = vmatpush1.bf16.msra.mxu0 %v2987
      %3012 = vmatprep.subr.bf16.mxu0 0
      %3013 = vmatpush1.bf16.msra.mxu0 0
      %3014 = vmatprep.subr.bf16.mxu0 0
      %3015 = vmatpush1.bf16.msra.mxu0 0
      %3016 = vmatprep.subr.bf16.mxu0 0
      %3017 = vmatpush1.bf16.msra.mxu0 0
      %3018 = vmatprep.subr.bf16.mxu0 0
      %3019 = vmatpush1.bf16.msra.mxu0 0
      %3020 = vmatprep.subr.bf16.mxu0 0
      %3021 = vmatpush1.bf16.msra.mxu0 0
      %3022 = vmatprep.subr.bf16.mxu0 0
      %3023 = vmatpush1.bf16.msra.mxu0 0
      %3024 = vmatprep.subr.bf16.mxu0 0
      %3025 = vmatpush1.bf16.msra.mxu0 0
      %3026 = vmatprep.subr.bf16.mxu0 0
      %3027 = vmatpush1.bf16.msra.mxu0 0
      %3028 = vmatprep.mubr.bf16.mxu0 0
      %3029 = vmatmul.mubr.bf16.gmra.mrb[0].mxu0 %v2923
      %v3030 = vpop.f32.mrb[0].mxu0
      %v3031 = vadd.f32 0.0, %v3030
      %v3032 = vpop.f32.mrb[0].mxu0
      %v3033 = vpop.f32.mrb[0].mxu0
      %v3034 = vadd.f32 0.0, %v3033
      %v3035 = vpop.f32.mrb[0].mxu0
      %3036 = vmatprep.mubr.bf16.mxu0 0
      %3037 = vmatmul.mubr.bf16.gmra.mrb[0].mxu0 %v2924
      %v3038 = vpop.f32.mrb[0].mxu0
      %v3039 = vadd.f32 0.0, %v3038
      %v3040 = vpop.f32.mrb[0].mxu0
      %v3041 = vpop.f32.mrb[0].mxu0
      %v3042 = vadd.f32 0.0, %v3041
      %v3043 = vpop.f32.mrb[0].mxu0
      %3044 = vmatprep.mubr.bf16.mxu0 0
      %3045 = vmatmul.mubr.bf16.gmra.mrb[0].mxu0 %v2925
      %v3046 = vpop.f32.mrb[0].mxu0
      %v3047 = vadd.f32 0.0, %v3046
      %v3048 = vpop.f32.mrb[0].mxu0
      %v3049 = vpop.f32.mrb[0].mxu0
      %v3050 = vadd.f32 0.0, %v3049
      %v3051 = vpop.f32.mrb[0].mxu0
      %3052 = vmatprep.mubr.bf16.mxu0 0
      %3053 = vmatmul.mubr.bf16.gmra.mrb[0].mxu0 %v2926
      %v3054 = vpop.f32.mrb[0].mxu0
      %v3055 = vadd.f32 0.0, %v3054
      %v3056 = vpop.f32.mrb[0].mxu0
      %v3057 = vpop.f32.mrb[0].mxu0
      %v3058 = vadd.f32 0.0, %v3057
      %v3059 = vpop.f32.mrb[0].mxu0
      %3060 = vmatprep.mubr.bf16.mxu0 0
      %3061 = vmatmul.mubr.bf16.gmra.mrb[0].mxu0 %v2927
      %v3062 = vpop.f32.mrb[0].mxu0
      %v3063 = vadd.f32 0.0, %v3062
      %v3064 = vpop.f32.mrb[0].mxu0
      %v3065 = vpop.f32.mrb[0].mxu0
      %v3066 = vadd.f32 0.0, %v3065
      %v3067 = vpop.f32.mrb[0].mxu0
      %3068 = vmatprep.mubr.bf16.mxu0 0
      %3069 = vmatmul.mubr.bf16.gmra.mrb[0].mxu0 %v2928
      %v3070 = vpop.f32.mrb[0].mxu0
      %v3071 = vadd.f32 0.0, %v3070
      %v3072 = vpop.f32.mrb[0].mxu0
      %v3073 = vpop.f32.mrb[0].mxu0
      %v3074 = vadd.f32 0.0, %v3073
      %v3075 = vpop.f32.mrb[0].mxu0
      %3076 = vmatprep.mubr.bf16.mxu0 0
      %3077 = vmatmul.mubr.bf16.gmra.mrb[0].mxu0 %v2929
      %v3078 = vpop.f32.mrb[0].mxu0
      %v3079 = vadd.f32 0.0, %v3078
      %v3080 = vpop.f32.mrb[0].mxu0
      %v3081 = vpop.f32.mrb[0].mxu0
      %v3082 = vadd.f32 0.0, %v3081
      %v3083 = vpop.f32.mrb[0].mxu0
      %3084 = vmatprep.mubr.bf16.mxu0 0
      %3085 = vmatmul.mubr.bf16.gmra.mrb[0].mxu0 %v2930
      %v3086 = vpop.f32.mrb[0].mxu0
      %v3087 = vadd.f32 0.0, %v3086
      %v3088 = vpop.f32.mrb[0].mxu0
      %v3089 = vpop.f32.mrb[0].mxu0
      %v3090 = vadd.f32 0.0, %v3089
      %v3091 = vpop.f32.mrb[0].mxu0
      %3092 = vdwg.mxu0
      %v3093 = vadd.f32 %v2906, %v3031
      %v3094 = vadd.f32 %v2907, %v3034
      %v3095 = vadd.f32 %v2908, %v3039
      %v3096 = vadd.f32 %v2909, %v3042
      %v3097 = vadd.f32 %v2910, %v3047
      %v3098 = vadd.f32 %v2911, %v3050
      %v3099 = vadd.f32 %v2912, %v3055
      %v3100 = vadd.f32 %v2913, %v3058
      %v3101 = vadd.f32 %v2914, %v3063
      %v3102 = vadd.f32 %v2915, %v3066
      %v3103 = vadd.f32 %v2916, %v3071
      %v3104 = vadd.f32 %v2917, %v3074
      %v3105 = vadd.f32 %v2918, %v3079
      %v3106 = vadd.f32 %v2919, %v3082
      %v3107 = vadd.f32 %v2920, %v3087
      %v3108 = vadd.f32 %v2921, %v3090
      %s3109 = scalar_lea.vmem [#allocation3], 96
      %v3110 = vld [vmem:[%s3109] sm:$0xff]
      %v3111 = vld [vmem:[%s3109 + $0x8] sm:$0xff]
      %v3112 = vld [vmem:[%s3109 + $0x10] sm:$0xff]
      %v3113 = vld [vmem:[%s3109 + $0x18] sm:$0xff]
      %v3114 = vld [vmem:[%s3109 + $0x20] sm:$0xff]
      %v3115 = vld [vmem:[%s3109 + $0x28] sm:$0xff]
      %v3116 = vld [vmem:[%s3109 + $0x30] sm:$0xff]
      %v3117 = vld [vmem:[%s3109 + $0x38] sm:$0xff]
      %s3118 = scalar_lea.vmem %s6, 448
      %v3119 = vld [vmem:[%s3118] sm:$0xf]
      %v3120 = vld [vmem:[%s3118 + $0x4] sm:$0xf]
      %v3121 = vld [vmem:[%s3118 + $0x8] sm:$0xf]
      %v3122 = vld [vmem:[%s3118 + $0xc] sm:$0xf]
      %v3123 = vld [vmem:[%s3118 + $0x10] sm:$0xf]
      %v3124 = vld [vmem:[%s3118 + $0x14] sm:$0xf]
      %v3125 = vld [vmem:[%s3118 + $0x18] sm:$0xf]
      %v3126 = vld [vmem:[%s3118 + $0x1c] sm:$0xf]
      %v3127 = vld [vmem:[%s3118 + $0x20] sm:$0xf]
      %v3128 = vld [vmem:[%s3118 + $0x24] sm:$0xf]
      %v3129 = vld [vmem:[%s3118 + $0x28] sm:$0xf]
      %v3130 = vld [vmem:[%s3118 + $0x2c] sm:$0xf]
      %v3131 = vld [vmem:[%s3118 + $0x30] sm:$0xf]
      %v3132 = vld [vmem:[%s3118 + $0x34] sm:$0xf]
      %v3133 = vld [vmem:[%s3118 + $0x38] sm:$0xf]
      %v3134 = vld [vmem:[%s3118 + $0x3c] sm:$0xf]
      %v3151 = vunpack.c.l.b16 %v3119
      %v3152 = vunpack.c.l.b16 %v3120
      %v3153 = vunpack.c.l.b16 %v3121
      %v3154 = vunpack.c.l.b16 %v3122
      %v3155 = vunpack.c.l.b16 %v3123
      %v3156 = vunpack.c.l.b16 %v3124
      %v3157 = vunpack.c.l.b16 %v3125
      %v3158 = vunpack.c.l.b16 %v3126
      %v3159 = vunpack.c.l.b16 %v3127
      %v3160 = vunpack.c.l.b16 %v3128
      %v3161 = vunpack.c.l.b16 %v3129
      %v3162 = vunpack.c.l.b16 %v3130
      %v3163 = vunpack.c.l.b16 %v3131
      %v3164 = vunpack.c.l.b16 %v3132
      %v3165 = vunpack.c.l.b16 %v3133
      %v3166 = vunpack.c.l.b16 %v3134
      %v3167 = vpack.c.b16 %v3152, %v3151
      %v3168 = vpack.c.b16 %v3154, %v3153
      %v3169 = vpack.c.b16 %v3156, %v3155
      %v3170 = vpack.c.b16 %v3158, %v3157
      %v3171 = vpack.c.b16 %v3160, %v3159
      %v3172 = vpack.c.b16 %v3162, %v3161
      %v3173 = vpack.c.b16 %v3164, %v3163
      %v3174 = vpack.c.b16 %v3166, %v3165
      %3183 = vmatprep.subr.bf16.mxu0 0
      %3184 = vmatpush1.bf16.msra.mxu0 %v3167
      %3185 = vmatprep.subr.bf16.mxu0 0
      %3186 = vmatpush1.bf16.msra.mxu0 %v3168
      %3187 = vmatprep.subr.bf16.mxu0 0
      %3188 = vmatpush1.bf16.msra.mxu0 %v3169
      %3189 = vmatprep.subr.bf16.mxu0 0
      %3190 = vmatpush1.bf16.msra.mxu0 %v3170
      %3191 = vmatprep.subr.bf16.mxu0 0
      %3192 = vmatpush1.bf16.msra.mxu0 %v3171
      %3193 = vmatprep.subr.bf16.mxu0 0
      %3194 = vmatpush1.bf16.msra.mxu0 %v3172
      %3195 = vmatprep.subr.bf16.mxu0 0
      %3196 = vmatpush1.bf16.msra.mxu0 %v3173
      %3197 = vmatprep.subr.bf16.mxu0 0
      %3198 = vmatpush1.bf16.msra.mxu0 %v3174
      %3199 = vmatprep.subr.bf16.mxu0 0
      %3200 = vmatpush1.bf16.msra.mxu0 0
      %3201 = vmatprep.subr.bf16.mxu0 0
      %3202 = vmatpush1.bf16.msra.mxu0 0
      %3203 = vmatprep.subr.bf16.mxu0 0
      %3204 = vmatpush1.bf16.msra.mxu0 0
      %3205 = vmatprep.subr.bf16.mxu0 0
      %3206 = vmatpush1.bf16.msra.mxu0 0
      %3207 = vmatprep.subr.bf16.mxu0 0
      %3208 = vmatpush1.bf16.msra.mxu0 0
      %3209 = vmatprep.subr.bf16.mxu0 0
      %3210 = vmatpush1.bf16.msra.mxu0 0
      %3211 = vmatprep.subr.bf16.mxu0 0
      %3212 = vmatpush1.bf16.msra.mxu0 0
      %3213 = vmatprep.subr.bf16.mxu0 0
      %3214 = vmatpush1.bf16.msra.mxu0 0
      %3215 = vmatprep.mubr.bf16.mxu0 0
      %3216 = vmatmul.mubr.bf16.gmra.mrb[0].mxu0 %v3110
      %v3217 = vpop.f32.mrb[0].mxu0
      %v3218 = vadd.f32 0.0, %v3217
      %v3219 = vpop.f32.mrb[0].mxu0
      %v3220 = vpop.f32.mrb[0].mxu0
      %v3221 = vadd.f32 0.0, %v3220
      %v3222 = vpop.f32.mrb[0].mxu0
      %3223 = vmatprep.mubr.bf16.mxu0 0
      %3224 = vmatmul.mubr.bf16.gmra.mrb[0].mxu0 %v3111
      %v3225 = vpop.f32.mrb[0].mxu0
      %v3226 = vadd.f32 0.0, %v3225
      %v3227 = vpop.f32.mrb[0].mxu0
      %v3228 = vpop.f32.mrb[0].mxu0
      %v3229 = vadd.f32 0.0, %v3228
      %v3230 = vpop.f32.mrb[0].mxu0
      %3231 = vmatprep.mubr.bf16.mxu0 0
      %3232 = vmatmul.mubr.bf16.gmra.mrb[0].mxu0 %v3112
      %v3233 = vpop.f32.mrb[0].mxu0
      %v3234 = vadd.f32 0.0, %v3233
      %v3235 = vpop.f32.mrb[0].mxu0
      %v3236 = vpop.f32.mrb[0].mxu0
      %v3237 = vadd.f32 0.0, %v3236
      %v3238 = vpop.f32.mrb[0].mxu0
      %3239 = vmatprep.mubr.bf16.mxu0 0
      %3240 = vmatmul.mubr.bf16.gmra.mrb[0].mxu0 %v3113
      %v3241 = vpop.f32.mrb[0].mxu0
      %v3242 = vadd.f32 0.0, %v3241
      %v3243 = vpop.f32.mrb[0].mxu0
      %v3244 = vpop.f32.mrb[0].mxu0
      %v3245 = vadd.f32 0.0, %v3244
      %v3246 = vpop.f32.mrb[0].mxu0
      %3247 = vmatprep.mubr.bf16.mxu0 0
      %3248 = vmatmul.mubr.bf16.gmra.mrb[0].mxu0 %v3114
      %v3249 = vpop.f32.mrb[0].mxu0
      %v3250 = vadd.f32 0.0, %v3249
      %v3251 = vpop.f32.mrb[0].mxu0
      %v3252 = vpop.f32.mrb[0].mxu0
      %v3253 = vadd.f32 0.0, %v3252
      %v3254 = vpop.f32.mrb[0].mxu0
      %3255 = vmatprep.mubr.bf16.mxu0 0
      %3256 = vmatmul.mubr.bf16.gmra.mrb[0].mxu0 %v3115
      %v3257 = vpop.f32.mrb[0].mxu0
      %v3258 = vadd.f32 0.0, %v3257
      %v3259 = vpop.f32.mrb[0].mxu0
      %v3260 = vpop.f32.mrb[0].mxu0
      %v3261 = vadd.f32 0.0, %v3260
      %v3262 = vpop.f32.mrb[0].mxu0
      %3263 = vmatprep.mubr.bf16.mxu0 0
      %3264 = vmatmul.mubr.bf16.gmra.mrb[0].mxu0 %v3116
      %v3265 = vpop.f32.mrb[0].mxu0
      %v3266 = vadd.f32 0.0, %v3265
      %v3267 = vpop.f32.mrb[0].mxu0
      %v3268 = vpop.f32.mrb[0].mxu0
      %v3269 = vadd.f32 0.0, %v3268
      %v3270 = vpop.f32.mrb[0].mxu0
      %3271 = vmatprep.mubr.bf16.mxu0 0
      %3272 = vmatmul.mubr.bf16.gmra.mrb[0].mxu0 %v3117
      %v3273 = vpop.f32.mrb[0].mxu0
      %v3274 = vadd.f32 0.0, %v3273
      %v3275 = vpop.f32.mrb[0].mxu0
      %v3276 = vpop.f32.mrb[0].mxu0
      %v3277 = vadd.f32 0.0, %v3276
      %v3278 = vpop.f32.mrb[0].mxu0
      %3279 = vdwg.mxu0
      %v3280 = vadd.f32 %v3093, %v3218
      %v3281 = vadd.f32 %v3094, %v3221
      %v3282 = vadd.f32 %v3095, %v3226
      %v3283 = vadd.f32 %v3096, %v3229
      %v3284 = vadd.f32 %v3097, %v3234
      %v3285 = vadd.f32 %v3098, %v3237
      %v3286 = vadd.f32 %v3099, %v3242
      %v3287 = vadd.f32 %v3100, %v3245
      %v3288 = vadd.f32 %v3101, %v3250
      %v3289 = vadd.f32 %v3102, %v3253
      %v3290 = vadd.f32 %v3103, %v3258
      %v3291 = vadd.f32 %v3104, %v3261
      %v3292 = vadd.f32 %v3105, %v3266
      %v3293 = vadd.f32 %v3106, %v3269
      %v3294 = vadd.f32 %v3107, %v3274
      %v3295 = vadd.f32 %v3108, %v3277
      %s3296 = scalar_lea.vmem [#allocation3], 176
      %v3297 = vld [vmem:[%s3296] sm:$0xff]
      %v3298 = vld [vmem:[%s3296 + $0x8] sm:$0xff]
      %v3299 = vld [vmem:[%s3296 + $0x10] sm:$0xff]
      %v3300 = vld [vmem:[%s3296 + $0x18] sm:$0xff]
      %v3301 = vld [vmem:[%s3296 + $0x20] sm:$0xff]
      %v3302 = vld [vmem:[%s3296 + $0x28] sm:$0xff]
      %v3303 = vld [vmem:[%s3296 + $0x30] sm:$0xff]
      %v3304 = vld [vmem:[%s3296 + $0x38] sm:$0xff]
      %s3305 = scalar_lea.vmem %s6, 512
      %v3306 = vld [vmem:[%s3305] sm:$0xf]
      %v3307 = vld [vmem:[%s3305 + $0x4] sm:$0xf]
      %v3308 = vld [vmem:[%s3305 + $0x8] sm:$0xf]
      %v3309 = vld [vmem:[%s3305 + $0xc] sm:$0xf]
      %v3310 = vld [vmem:[%s3305 + $0x10] sm:$0xf]
      %v3311 = vld [vmem:[%s3305 + $0x14] sm:$0xf]
      %v3312 = vld [vmem:[%s3305 + $0x18] sm:$0xf]
      %v3313 = vld [vmem:[%s3305 + $0x1c] sm:$0xf]
      %v3314 = vld [vmem:[%s3305 + $0x20] sm:$0xf]
      %v3315 = vld [vmem:[%s3305 + $0x24] sm:$0xf]
      %v3316 = vld [vmem:[%s3305 + $0x28] sm:$0xf]
      %v3317 = vld [vmem:[%s3305 + $0x2c] sm:$0xf]
      %v3318 = vld [vmem:[%s3305 + $0x30] sm:$0xf]
      %v3319 = vld [vmem:[%s3305 + $0x34] sm:$0xf]
      %v3320 = vld [vmem:[%s3305 + $0x38] sm:$0xf]
      %v3321 = vld [vmem:[%s3305 + $0x3c] sm:$0xf]
      %v3338 = vunpack.c.l.b16 %v3306
      %v3339 = vunpack.c.l.b16 %v3307
      %v3340 = vunpack.c.l.b16 %v3308
      %v3341 = vunpack.c.l.b16 %v3309
      %v3342 = vunpack.c.l.b16 %v3310
      %v3343 = vunpack.c.l.b16 %v3311
      %v3344 = vunpack.c.l.b16 %v3312
      %v3345 = vunpack.c.l.b16 %v3313
      %v3346 = vunpack.c.l.b16 %v3314
      %v3347 = vunpack.c.l.b16 %v3315
      %v3348 = vunpack.c.l.b16 %v3316
      %v3349 = vunpack.c.l.b16 %v3317
      %v3350 = vunpack.c.l.b16 %v3318
      %v3351 = vunpack.c.l.b16 %v3319
      %v3352 = vunpack.c.l.b16 %v3320
      %v3353 = vunpack.c.l.b16 %v3321
      %v3354 = vpack.c.b16 %v3339, %v3338
      %v3355 = vpack.c.b16 %v3341, %v3340
      %v3356 = vpack.c.b16 %v3343, %v3342
      %v3357 = vpack.c.b16 %v3345, %v3344
      %v3358 = vpack.c.b16 %v3347, %v3346
      %v3359 = vpack.c.b16 %v3349, %v3348
      %v3360 = vpack.c.b16 %v3351, %v3350
      %v3361 = vpack.c.b16 %v3353, %v3352
      %3370 = vmatprep.subr.bf16.mxu0 0
      %3371 = vmatpush1.bf16.msra.mxu0 %v3354
      %3372 = vmatprep.subr.bf16.mxu0 0
      %3373 = vmatpush1.bf16.msra.mxu0 %v3355
      %3374 = vmatprep.subr.bf16.mxu0 0
      %3375 = vmatpush1.bf16.msra.mxu0 %v3356
      %3376 = vmatprep.subr.bf16.mxu0 0
      %3377 = vmatpush1.bf16.msra.mxu0 %v3357
      %3378 = vmatprep.subr.bf16.mxu0 0
      %3379 = vmatpush1.bf16.msra.mxu0 %v3358
      %3380 = vmatprep.subr.bf16.mxu0 0
      %3381 = vmatpush1.bf16.msra.mxu0 %v3359
      %3382 = vmatprep.subr.bf16.mxu0 0
      %3383 = vmatpush1.bf16.msra.mxu0 %v3360
      %3384 = vmatprep.subr.bf16.mxu0 0
      %3385 = vmatpush1.bf16.msra.mxu0 %v3361
      %3386 = vmatprep.subr.bf16.mxu0 0
      %3387 = vmatpush1.bf16.msra.mxu0 0
      %3388 = vmatprep.subr.bf16.mxu0 0
      %3389 = vmatpush1.bf16.msra.mxu0 0
      %3390 = vmatprep.subr.bf16.mxu0 0
      %3391 = vmatpush1.bf16.msra.mxu0 0
      %3392 = vmatprep.subr.bf16.mxu0 0
      %3393 = vmatpush1.bf16.msra.mxu0 0
      %3394 = vmatprep.subr.bf16.mxu0 0
      %3395 = vmatpush1.bf16.msra.mxu0 0
      %3396 = vmatprep.subr.bf16.mxu0 0
      %3397 = vmatpush1.bf16.msra.mxu0 0
      %3398 = vmatprep.subr.bf16.mxu0 0
      %3399 = vmatpush1.bf16.msra.mxu0 0
      %3400 = vmatprep.subr.bf16.mxu0 0
      %3401 = vmatpush1.bf16.msra.mxu0 0
      %3402 = vmatprep.mubr.bf16.mxu0 0
      %3403 = vmatmul.mubr.bf16.gmra.mrb[0].mxu0 %v3297
      %v3404 = vpop.f32.mrb[0].mxu0
      %v3405 = vadd.f32 0.0, %v3404
      %v3406 = vpop.f32.mrb[0].mxu0
      %v3407 = vpop.f32.mrb[0].mxu0
      %v3408 = vadd.f32 0.0, %v3407
      %v3409 = vpop.f32.mrb[0].mxu0
      %3410 = vmatprep.mubr.bf16.mxu0 0
      %3411 = vmatmul.mubr.bf16.gmra.mrb[0].mxu0 %v3298
      %v3412 = vpop.f32.mrb[0].mxu0
      %v3413 = vadd.f32 0.0, %v3412
      %v3414 = vpop.f32.mrb[0].mxu0
      %v3415 = vpop.f32.mrb[0].mxu0
      %v3416 = vadd.f32 0.0, %v3415
      %v3417 = vpop.f32.mrb[0].mxu0
      %3418 = vmatprep.mubr.bf16.mxu0 0
      %3419 = vmatmul.mubr.bf16.gmra.mrb[0].mxu0 %v3299
      %v3420 = vpop.f32.mrb[0].mxu0
      %v3421 = vadd.f32 0.0, %v3420
      %v3422 = vpop.f32.mrb[0].mxu0
      %v3423 = vpop.f32.mrb[0].mxu0
      %v3424 = vadd.f32 0.0, %v3423
      %v3425 = vpop.f32.mrb[0].mxu0
      %3426 = vmatprep.mubr.bf16.mxu0 0
      %3427 = vmatmul.mubr.bf16.gmra.mrb[0].mxu0 %v3300
      %v3428 = vpop.f32.mrb[0].mxu0
      %v3429 = vadd.f32 0.0, %v3428
      %v3430 = vpop.f32.mrb[0].mxu0
      %v3431 = vpop.f32.mrb[0].mxu0
      %v3432 = vadd.f32 0.0, %v3431
      %v3433 = vpop.f32.mrb[0].mxu0
      %3434 = vmatprep.mubr.bf16.mxu0 0
      %3435 = vmatmul.mubr.bf16.gmra.mrb[0].mxu0 %v3301
      %v3436 = vpop.f32.mrb[0].mxu0
      %v3437 = vadd.f32 0.0, %v3436
      %v3438 = vpop.f32.mrb[0].mxu0
      %v3439 = vpop.f32.mrb[0].mxu0
      %v3440 = vadd.f32 0.0, %v3439
      %v3441 = vpop.f32.mrb[0].mxu0
      %3442 = vmatprep.mubr.bf16.mxu0 0
      %3443 = vmatmul.mubr.bf16.gmra.mrb[0].mxu0 %v3302
      %v3444 = vpop.f32.mrb[0].mxu0
      %v3445 = vadd.f32 0.0, %v3444
      %v3446 = vpop.f32.mrb[0].mxu0
      %v3447 = vpop.f32.mrb[0].mxu0
      %v3448 = vadd.f32 0.0, %v3447
      %v3449 = vpop.f32.mrb[0].mxu0
      %3450 = vmatprep.mubr.bf16.mxu0 0
      %3451 = vmatmul.mubr.bf16.gmra.mrb[0].mxu0 %v3303
      %v3452 = vpop.f32.mrb[0].mxu0
      %v3453 = vadd.f32 0.0, %v3452
      %v3454 = vpop.f32.mrb[0].mxu0
      %v3455 = vpop.f32.mrb[0].mxu0
      %v3456 = vadd.f32 0.0, %v3455
      %v3457 = vpop.f32.mrb[0].mxu0
      %3458 = vmatprep.mubr.bf16.mxu0 0
      %3459 = vmatmul.mubr.bf16.gmra.mrb[0].mxu0 %v3304
      %v3460 = vpop.f32.mrb[0].mxu0
      %v3461 = vadd.f32 0.0, %v3460
      %v3462 = vpop.f32.mrb[0].mxu0
      %v3463 = vpop.f32.mrb[0].mxu0
      %v3464 = vadd.f32 0.0, %v3463
      %v3465 = vpop.f32.mrb[0].mxu0
      %3466 = vdwg.mxu0
      %v3467 = vadd.f32 %v3280, %v3405
      %v3468 = vadd.f32 %v3281, %v3408
      %v3469 = vadd.f32 %v3282, %v3413
      %v3470 = vadd.f32 %v3283, %v3416
      %v3471 = vadd.f32 %v3284, %v3421
      %v3472 = vadd.f32 %v3285, %v3424
      %v3473 = vadd.f32 %v3286, %v3429
      %v3474 = vadd.f32 %v3287, %v3432
      %v3475 = vadd.f32 %v3288, %v3437
      %v3476 = vadd.f32 %v3289, %v3440
      %v3477 = vadd.f32 %v3290, %v3445
      %v3478 = vadd.f32 %v3291, %v3448
      %v3479 = vadd.f32 %v3292, %v3453
      %v3480 = vadd.f32 %v3293, %v3456
      %v3481 = vadd.f32 %v3294, %v3461
      %v3482 = vadd.f32 %v3295, %v3464
      %v3483 = vld [vmem:[%s7] sm:$0x1]
      %v3485 = vlaneseq
      %v3486 = vshrl.u32 %v3485, 7
      %v3487 = vsub.s32 0, %v3486
      %v3488 = vrot.slane %v3483, %v3487
      %v3490 = vadd.f32 %v3467, %v3488
      %v3491 = vadd.f32 %v3468, %v3488
      %v3492 = vadd.f32 %v3469, %v3488
      %v3493 = vadd.f32 %v3470, %v3488
      %v3494 = vadd.f32 %v3471, %v3488
      %v3495 = vadd.f32 %v3472, %v3488
      %v3496 = vadd.f32 %v3473, %v3488
      %v3497 = vadd.f32 %v3474, %v3488
      %v3498 = vadd.f32 %v3475, %v3488
      %v3499 = vadd.f32 %v3476, %v3488
      %v3500 = vadd.f32 %v3477, %v3488
      %v3501 = vadd.f32 %v3478, %v3488
      %v3502 = vadd.f32 %v3479, %v3488
      %v3503 = vadd.f32 %v3480, %v3488
      %v3504 = vadd.f32 %v3481, %v3488
      %v3505 = vadd.f32 %v3482, %v3488
      %v3506 = vmax.f32 %v3490, 0.0
      %v3507 = vmax.f32 %v3491, 0.0
      %v3508 = vmax.f32 %v3492, 0.0
      %v3509 = vmax.f32 %v3493, 0.0
      %v3510 = vmax.f32 %v3494, 0.0
      %v3511 = vmax.f32 %v3495, 0.0
      %v3512 = vmax.f32 %v3496, 0.0
      %v3513 = vmax.f32 %v3497, 0.0
      %v3514 = vmax.f32 %v3498, 0.0
      %v3515 = vmax.f32 %v3499, 0.0
      %v3516 = vmax.f32 %v3500, 0.0
      %v3517 = vmax.f32 %v3501, 0.0
      %v3518 = vmax.f32 %v3502, 0.0
      %v3519 = vmax.f32 %v3503, 0.0
      %v3520 = vmax.f32 %v3504, 0.0
      %v3521 = vmax.f32 %v3505, 0.0
      %v3522 = vpack.c.bf16 %v3507, %v3506
      %v3523 = vpack.c.bf16 %v3509, %v3508
      %v3524 = vpack.c.bf16 %v3511, %v3510
      %v3525 = vpack.c.bf16 %v3513, %v3512
      %v3526 = vpack.c.bf16 %v3515, %v3514
      %v3527 = vpack.c.bf16 %v3517, %v3516
      %v3528 = vpack.c.bf16 %v3519, %v3518
      %v3529 = vpack.c.bf16 %v3521, %v3520
      %v3538 = vunpack.c.l.b16 %v3522
      %v3539 = vunpack.c.h.b16 %v3522
      %v3540 = vunpack.c.l.b16 %v3523
      %v3541 = vunpack.c.h.b16 %v3523
      %v3542 = vunpack.c.l.b16 %v3524
      %v3543 = vunpack.c.h.b16 %v3524
      %v3544 = vunpack.c.l.b16 %v3525
      %v3545 = vunpack.c.h.b16 %v3525
      %v3546 = vunpack.c.l.b16 %v3526
      %v3547 = vunpack.c.h.b16 %v3526
      %v3548 = vunpack.c.l.b16 %v3527
      %v3549 = vunpack.c.h.b16 %v3527
      %v3550 = vunpack.c.l.b16 %v3528
      %v3551 = vunpack.c.h.b16 %v3528
      %v3552 = vunpack.c.l.b16 %v3529
      %v3553 = vunpack.c.h.b16 %v3529
      %v3554 = vpack.c.b16 %v3538, %v3538
      %v3555 = vpack.c.b16 %v3539, %v3539
      %v3556 = vpack.c.b16 %v3540, %v3540
      %v3557 = vpack.c.b16 %v3541, %v3541
      %v3558 = vpack.c.b16 %v3542, %v3542
      %v3559 = vpack.c.b16 %v3543, %v3543
      %v3560 = vpack.c.b16 %v3544, %v3544
      %v3561 = vpack.c.b16 %v3545, %v3545
      %v3562 = vpack.c.b16 %v3546, %v3546
      %v3563 = vpack.c.b16 %v3547, %v3547
      %v3564 = vpack.c.b16 %v3548, %v3548
      %v3565 = vpack.c.b16 %v3549, %v3549
      %v3566 = vpack.c.b16 %v3550, %v3550
      %v3567 = vpack.c.b16 %v3551, %v3551
      %v3568 = vpack.c.b16 %v3552, %v3552
      %v3569 = vpack.c.b16 %v3553, %v3553
      %3586 = vst [vmem:[%s635] sm:$0xf] %v3554
      %3587 = vst [vmem:[%s635 + $0x4] sm:$0xf] %v3555
      %3588 = vst [vmem:[%s635 + $0x8] sm:$0xf] %v3556
      %3589 = vst [vmem:[%s635 + $0xc] sm:$0xf] %v3557
      %3590 = vst [vmem:[%s635 + $0x10] sm:$0xf] %v3558
      %3591 = vst [vmem:[%s635 + $0x14] sm:$0xf] %v3559
      %3592 = vst [vmem:[%s635 + $0x18] sm:$0xf] %v3560
      %3593 = vst [vmem:[%s635 + $0x1c] sm:$0xf] %v3561
      %3594 = vst [vmem:[%s635 + $0x20] sm:$0xf] %v3562
      %3595 = vst [vmem:[%s635 + $0x24] sm:$0xf] %v3563
      %3596 = vst [vmem:[%s635 + $0x28] sm:$0xf] %v3564
      %3597 = vst [vmem:[%s635 + $0x2c] sm:$0xf] %v3565
      %3598 = vst [vmem:[%s635 + $0x30] sm:$0xf] %v3566
      %3599 = vst [vmem:[%s635 + $0x34] sm:$0xf] %v3567
      %3600 = vst [vmem:[%s635 + $0x38] sm:$0xf] %v3568
      %3601 = vst [vmem:[%s635 + $0x3c] sm:$0xf] %v3569
      %s3602 = smul.u32 8, %s24
      %p3603 = scmp.lt.s32.totalorder %s23, 1
      %s3604 = scalar_select %p3603, %s23, 1
      %p3605 = scmp.lt.s32.totalorder %s3602, 15
      %s3606 = scalar_select %p3605, %s3602, 15
      %s3607 = smul.addr %s3606, 2
      %s3608 = smul.addr %s3604, 32
      %s3609 = sadd.s32 %s3607, %s3608
      %s3610 = smul.addr %s3609, 4
      %s3611 = scalar_lea.vmem %s8, %s3610
      // Predicated region
      $region61: #{upscale_and_concat_layer.1} parent=51 // pred_check
        %p3612 = pneg %p293
      $region62: #{upscale_and_concat_layer.1} parent=51 // pred_check_branch
        %3614 = sbr.rel (%p3612) target = $region64
      $region63: #{upscale_and_concat_layer.1} parent=51 // pred_region
        %s3615 = smul.u32 8, %s24
      $region64: #{upscale_and_concat_layer.1} parent=51 // pred_fallthru
        _
    $region52: #{upscale_and_concat_layer.1} parent=5 // pred_fallthru
      _
    %p3616 = scmp.le.s32.totalorder 2, %s14
    // Predicated region
    $region65: #{upscale_and_concat_layer.1} parent=5 // pred_check
      %p3617 = pneg %p3616
    $region66: #{upscale_and_concat_layer.1} parent=5 // pred_check_branch
      %3619 = sbr.rel (%p3617) target = $region68
    $region67: #{upscale_and_concat_layer.1} parent=5 // pred_region
      %s3620 = ssub.s32 %s14, 2
      // Predicated region
      $region69: #{upscale_and_concat_layer.1} parent=67 // pred_check
        %p3621 = pneg %p299
      $region70: #{upscale_and_concat_layer.1} parent=67 // pred_check_branch
        %3623 = sbr.rel (%p3621) target = $region72
      $region71: #{upscale_and_concat_layer.1} parent=67 // pred_region
        %s3624 = smul.u32 8, %s26
        %p3625 = scmp.lt.s32.totalorder %s25, 1
        %s3626 = scalar_select %p3625, %s25, 1
        %p3627 = scmp.lt.s32.totalorder %s3624, 15
        %s3628 = scalar_select %p3627, %s3624, 15
        %s3629 = smul.addr %s3628, 2
        %s3630 = smul.addr %s3626, 32
        %s3631 = sadd.s32 %s3629, %s3630
        %s3632 = smul.addr %s3631, 4
        %s3633 = scalar_lea.vmem %s8, %s3632
      $region72: #{upscale_and_concat_layer.1} parent=67 // pred_fallthru
        _
    $region68: #{upscale_and_concat_layer.1} parent=5 // pred_fallthru
      _
  $region6: #{upscale_and_concat_layer.1} parent=0 // loop_footer
    %s18 = sadd.s32 1, %s14
  $region7: #{upscale_and_concat_layer.1} parent=0 // loop_footer_branch
    %13 = sbr.rel target = $region3
  $region8: #{upscale_and_concat_layer.1} parent=0 // loop_exit
    _

</llo_original>
